<compile_context>
chip_gen: v7x
topology: tpu7x:2x2x1
jax: 0.10.0
libtpu: 0.0.40
codegen_flags: <defaults>
</compile_context>

<pallas_src>
import jax
import jax.numpy as jnp
import numpy as np
from jax import lax
from jax.experimental import pallas as pl
from jax.experimental.pallas import tpu as pltpu

# ---- small, module-consistent sizes ----
VOCAB = 64     # vocab_size
EMBED = 16     # embed_size
HID = 32       # num_hiddens
LAYERS = 2     # num_layers
B = 2          # batch
T = 6          # decoder steps
S = 8          # encoder (source) sequence length
VPAD = ((VOCAB + 127) // 128) * 128   # vocab padded to a 128-lane multiple

NEG = -1e30    # finite "masked" bias (avoids -inf -> NaN on fully-masked rows)


def decoder_kernel(
    tok_ref,     # (T*B, 1)   int32   token ids, time-major rows (t, b)
    enc_ref,     # (B*S, H)   f32     encoder outputs, flattened (keys & values)
    maskb_ref,   # (B*S, 1)   f32     additive mask bias (0 or NEG)
    h0_ref,      # (L, B, H)  f32     initial hidden state (aliased to hout_ref)
    wslab_ref,   # (160, 128) bf16    [ [Wq|Whh1]; Wd_pad; [Wk|Wih1]; emb_w_pad ]
    wl0_ref,     # (64, 256)  bf16    block-diag(W_ctx -> cols 0:96, Whh0 -> cols 128:224)
    bslab_ref,   # (8, 128)   f32     rows: bhh0, bih1, bhh1, bd_pad, wv, 0...
    out_ref,     # (B*T, VPAD) f32    log-probs, batch-major rows, lane-dense
    hout_ref,    # (L, B, H)  f32     final hidden state (aliased input)
    hbuf_ref,    # (B*T, H)   f32     scratch: top-layer outputs, batch-major
):
    H = HID
    H3 = 3 * H

    # ---- unpack packed parameter slabs (sliced once, straight from the refs) ----
    w_h1 = wslab_ref[0:32, :]                  # (H, 4H)  [Wq | Whh1]
    wk = wslab_ref[64:96, 0:H]                 # (H, H)   key projection
    wih1 = wslab_ref[64:96, H:128]             # (H, 3H)  layer-1 input weights
    emb_w = wslab_ref[96:160, 0:H3]            # (V, 3H)  embedding @ W_emb + b_ih0
    w_l0 = wl0_ref[...]                        # (2H, 256) block-diag layer-0 weight

    bhh0 = bslab_ref[0:1, 0:H3]                # (1, 3H)
    bih1 = bslab_ref[1:2, 0:H3]
    bhh1 = bslab_ref[2:3, 0:H3]
    wv = bslab_ref[4:5, 0:H]                   # (1, H) attention score vector

    enc = enc_ref[...]                         # (B*S, H) f32  (attention values)
    enc3 = enc.reshape(B, S, H)
    maskb3 = maskb_ref[...].reshape(B, S, 1)

    # ---- step-invariant work hoisted out of the recurrence ----
    # key projection: one bf16 MXU dot over all source positions
    keys3 = jnp.dot(enc.astype(jnp.bfloat16), wk,
                    preferred_element_type=jnp.float32).reshape(B, S, H)
    # embedding lookup + layer-0 embedding-path projection (+ b_ih0) folded into
    # one pre-loop one-hot matmul (emb_w precomputed host-side).
    eq = tok_ref[...] == lax.broadcasted_iota(jnp.int32, (T * B, VOCAB), 1)
    onehot = jnp.where(eq, 1.0, 0.0).astype(jnp.bfloat16)          # (T*B, V)
    gi0_emb = jnp.dot(onehot, emb_w,
                      preferred_element_type=jnp.float32)          # (T*B, 3H)

    h0 = h0_ref[0]                             # (B, H) layer-0 hidden
    h1 = h0_ref[1]                             # (B, H) layer-1 hidden (query)

    def gru_gates(gi, gh, h_prev):
        r = jax.nn.sigmoid(gi[:, 0:H] + gh[:, 0:H])
        z = jax.nn.sigmoid(gi[:, H:2 * H] + gh[:, H:2 * H])
        n = jnp.tanh(gi[:, 2 * H:H3] + r * gh[:, 2 * H:H3])
        return (1.0 - z) * n + z * h_prev

    for t in range(T):   # fully unrolled recurrence (no grid / per-step overhead)
        # one fused dot feeds both the attention query and layer-1's recurrent gates
        d1 = jnp.dot(h1.astype(jnp.bfloat16), w_h1,
                     preferred_element_type=jnp.float32)            # (B, 4H)
        q = d1[:, 0:H]                                              # (B, H)
        gh1 = d1[:, H:4 * H] + bhh1                                 # (B, 3H)

        # ---------------- additive attention (scores stay on sublanes) ----------
        feat = jnp.tanh(q[:, None, :] + keys3)                      # (B, S, H)
        s = jnp.sum(feat * wv, axis=-1, keepdims=True) + maskb3     # (B, S, 1)
        m = jnp.max(s, axis=1, keepdims=True)
        e = jnp.exp(s - m)
        attn = e * pl.reciprocal(jnp.sum(e, axis=1, keepdims=True), approx=True)
        context = jnp.sum(attn * enc3, axis=1)                      # (B, H)

        # ---------------- layer-0 GRU: fused [context | h0] x blockdiag ---------
        ch = jnp.concatenate([context, h0], axis=1).astype(jnp.bfloat16)  # (B, 2H)
        d0 = jnp.dot(ch, w_l0, preferred_element_type=jnp.float32)        # (B, 256)
        gi0 = d0[:, 0:H3] + gi0_emb[t * B:(t + 1) * B, :]
        gh0 = d0[:, 4 * H:4 * H + H3] + bhh0
        h0 = gru_gates(gi0, gh0, h0)

        # ---------------- layer-1 GRU (gh1 already available) --------------------
        gi1 = jnp.dot(h0.astype(jnp.bfloat16), wih1,
                      preferred_element_type=jnp.float32) + bih1
        h1 = gru_gates(gi1, gh1, h1)

        # stash top-layer output in batch-major row order (row = b*T + t)
        for b in range(B):
            hbuf_ref[pl.ds(b * T + t, 1), :] = h1[b:b + 1, :]

    # ------- batched dense head + log_softmax over all B*T rows, one store -------
    wd = wslab_ref[32:64, :]                    # (H, VPAD) bf16
    bd = bslab_ref[3:4, :]                      # (1, VPAD) f32 (NEG in pad cols)
    h_all = hbuf_ref[...]                       # (B*T, H) f32, batch-major rows
    logits = jnp.dot(h_all.astype(jnp.bfloat16), wd,
                     preferred_element_type=jnp.float32) + bd       # (B*T, VPAD)
    lmax = jnp.max(logits, axis=-1, keepdims=True)
    lse = lmax + jnp.log(jnp.sum(jnp.exp(logits - lmax), axis=-1, keepdims=True))
    out_ref[...] = logits - lse                 # 128-lane dense, unmasked store

    # final hidden state written exactly once (aliased with the input buffer)
    hout_ref[0] = h0
    hout_ref[1] = h1


def pack_params(p):
    """Pack the module parameters into 3 VMEM-friendly slabs (weights in bf16)."""
    H, E, V = HID, EMBED, VOCAB
    H3 = 3 * H
    f32 = jnp.float32

    w_ctx = p['wih0_t'][0:H]          # (H, 3H)  multiplies the attention context
    w_emb = p['wih0_t'][H:H + E]      # (E, 3H)  multiplies the embedded token

    # --- bf16 weight slab, 128 lanes wide ---
    w_h1 = jnp.concatenate([p['wq_t'], p['whh1_t']], axis=1)                       # (H, 4H)
    wd_pad = jnp.concatenate([p['wd_t'], jnp.zeros((H, VPAD - V), f32)], axis=1)   # (H, VPAD)
    wk_wih1 = jnp.concatenate([p['wk_t'], p['wih1_t']], axis=1)                    # (H, 4H)
    emb_w = p['embedding'] @ w_emb + p['bih0']                                     # (V, 3H)
    emb_w_pad = jnp.concatenate([emb_w, jnp.zeros((V, VPAD - H3), f32)], axis=1)   # (V, VPAD)
    wslab = jnp.concatenate([w_h1, wd_pad, wk_wih1, emb_w_pad],
                            axis=0).astype(jnp.bfloat16)                           # (160, 128)

    # --- bf16 block-diagonal layer-0 weight, 256 lanes (gi in vreg 0, gh in vreg 1) ---
    zH3 = jnp.zeros((H, H3), f32)
    zH = jnp.zeros((H, H), f32)
    top = jnp.concatenate([w_ctx, zH, zH3, zH], axis=1)          # (H, 256) context rows
    bot = jnp.concatenate([zH3, zH, p['whh0_t'], zH], axis=1)    # (H, 256) h0 rows
    w_l0 = jnp.concatenate([top, bot], axis=0).astype(jnp.bfloat16)                # (2H, 256)

    # --- f32 bias / score-vector slab (one (8,128) vreg) ---
    def row(v):
        return jnp.concatenate([v, jnp.zeros((1, VPAD - v.shape[1]), f32)], axis=1)
    bd_pad = jnp.concatenate([p['bd'], jnp.full((1, VPAD - V), NEG, f32)], axis=1)
    bslab = jnp.concatenate(
        [row(p['bhh0']), row(p['bih1']), row(p['bhh1']), bd_pad, row(p['wv'].T),
         jnp.zeros((3, VPAD), f32)], axis=0)                                       # (8, 128)

    return {'wslab': wslab, 'w_l0': w_l0, 'bslab': bslab}


@jax.jit
def decoder_forward(X_tokens, enc_outputs, hidden_state, mask, packed):
    """Equivalent of Decoder.forward(X, (enc_outputs, hidden_state), mask)."""
    tok_col = X_tokens.T.reshape(T * B, 1).astype(jnp.int32)      # time-major rows (t, b)
    enc_flat = enc_outputs.reshape(B * S, HID)
    maskb = jnp.where(mask, NEG, 0.0).astype(jnp.float32).reshape(B * S, 1)

    vmem = pl.BlockSpec(memory_space=pltpu.MemorySpace.VMEM)
    logp_flat, h_final = pl.pallas_call(
        decoder_kernel,
        out_shape=(jax.ShapeDtypeStruct((B * T, VPAD), jnp.float32),
                   jax.ShapeDtypeStruct((LAYERS, B, HID), jnp.float32)),
        in_specs=[vmem] * 7,
        out_specs=(vmem, vmem),
        scratch_shapes=[pltpu.VMEM((B * T, HID), jnp.float32)],
        input_output_aliases={3: 1},      # hidden_state in -> hidden_state out
    )(tok_col, enc_flat, maskb, hidden_state,
      packed['wslab'], packed['w_l0'], packed['bslab'])

    # rows are already batch-major (b*T + t): only de-pad the vocab dimension.
    logp = logp_flat.reshape(B, T, VPAD)[:, :, :VOCAB]
    return logp, (enc_outputs, h_final)


def reference_forward(X_tokens, enc_outputs, hidden_state, mask, params):
    """Pure-JAX f32 reference matching the PyTorch semantics (eval mode)."""
    emb = params['embedding'][X_tokens]
    x_tbe = jnp.transpose(emb, (1, 0, 2))
    h = hidden_state
    outs = []

    def cell(x_in, h_prev, wih, whh, bih, bhh):
        gi = x_in @ wih + bih
        gh = h_prev @ whh + bhh
        r = jax.nn.sigmoid(gi[:, :HID] + gh[:, :HID])
        z = jax.nn.sigmoid(gi[:, HID:2 * HID] + gh[:, HID:2 * HID])
        n = jnp.tanh(gi[:, 2 * HID:] + r * gh[:, 2 * HID:])
        return (1.0 - z) * n + z * h_prev

    for t in range(T):
        h_top = h[-1]
        q = h_top @ params['wq_t']
        k = jnp.einsum('bsh,hj->bsj', enc_outputs, params['wk_t'])
        feat = jnp.tanh(q[:, None, :] + k)
        sc = jnp.einsum('bsh,hj->bsj', feat, params['wv'])[..., 0]
        sc = jnp.where(mask, -jnp.inf, sc)
        attn = jax.nn.softmax(sc, axis=-1)
        ctx = jnp.einsum('bs,bsh->bh', attn, enc_outputs)
        xin = jnp.concatenate([ctx, x_tbe[t]], axis=-1)
        h0n = cell(xin, h[0], params['wih0_t'], params['whh0_t'],
                   params['bih0'], params['bhh0'])
        h1n = cell(h0n, h[1], params['wih1_t'], params['whh1_t'],
                   params['bih1'], params['bhh1'])
        h = jnp.stack([h0n, h1n], axis=0)
        outs.append(h1n)
    outs = jnp.stack(outs, axis=0)
    logits = jnp.einsum('tbh,hv->tbv', outs, params['wd_t']) + params['bd']
    logp = jax.nn.log_softmax(logits, axis=-1)
    return jnp.transpose(logp, (1, 0, 2)), h


def init_params(key):
    ks = jax.random.split(key, 16)
    s = 0.1
    p = {}
    p['embedding'] = s * jax.random.normal(ks[0], (VOCAB, EMBED), jnp.float32)
    # nn.Linear weights are (out, in); store pre-transposed (in, out) for the kernel.
    p['wq_t'] = s * jax.random.normal(ks[1], (HID, HID), jnp.float32)
    p['wk_t'] = s * jax.random.normal(ks[2], (HID, HID), jnp.float32)
    p['wv'] = s * jax.random.normal(ks[3], (HID, 1), jnp.float32)
    # GRU layer 0: weight_ih (3H, H+E) transposed; rows [0:H) multiply the context,
    # rows [H:H+E) multiply the embedding; gates ordered r,z,n.
    p['wih0_t'] = s * jax.random.normal(ks[4], (HID + EMBED, 3 * HID), jnp.float32)
    p['whh0_t'] = s * jax.random.normal(ks[5], (HID, 3 * HID), jnp.float32)
    p['bih0'] = s * jax.random.normal(ks[6], (1, 3 * HID), jnp.float32)
    p['bhh0'] = s * jax.random.normal(ks[7], (1, 3 * HID), jnp.float32)
    # GRU layer 1
    p['wih1_t'] = s * jax.random.normal(ks[8], (HID, 3 * HID), jnp.float32)
    p['whh1_t'] = s * jax.random.normal(ks[9], (HID, 3 * HID), jnp.float32)
    p['bih1'] = s * jax.random.normal(ks[10], (1, 3 * HID), jnp.float32)
    p['bhh1'] = s * jax.random.normal(ks[11], (1, 3 * HID), jnp.float32)
    # dense head
    p['wd_t'] = s * jax.random.normal(ks[12], (HID, VOCAB), jnp.float32)
    p['bd'] = s * jax.random.normal(ks[13], (1, VOCAB), jnp.float32)
    return p


if __name__ == "__main__":
    key = jax.random.PRNGKey(0)
    kp, kx, ke, kh = jax.random.split(key, 4)

    params = init_params(kp)
    packed = pack_params(params)

    X_tokens = jax.random.randint(kx, (B, T), 0, VOCAB, dtype=jnp.int32)
    enc_outputs = 0.5 * jax.random.normal(ke, (B, S, HID), jnp.float32)
    hidden_state = 0.5 * jax.random.normal(kh, (LAYERS, B, HID), jnp.float32)
    # mask: True for padded source positions; valid lengths [S, 5]
    valid_len = jnp.array([S, 5], dtype=jnp.int32)
    mask = jnp.arange(S)[None, :] >= valid_len[:, None]      # (B, S) bool

    # f32 reference computed first (kernel output aliases the hidden-state buffer)
    ref_logp, ref_h = reference_forward(
        X_tokens, enc_outputs, hidden_state, mask, params)

    logp, (enc_out, h_final) = decoder_forward(
        X_tokens, enc_outputs, hidden_state, mask, packed)
    jax.block_until_ready(logp)
    jax.block_until_ready(h_final)

    # tolerance sized for bf16 MXU operands (weights + activations) with f32 accumulation
    np.testing.assert_allclose(np.asarray(logp), np.asarray(ref_logp),
                               rtol=1e-2, atol=1e-2)
    np.testing.assert_allclose(np.asarray(h_final), np.asarray(ref_h),
                               rtol=1e-2, atol=1e-2)

    print("KERNEL_OK")
</pallas_src>

<mosaic_0001>
module attributes {stable_mosaic.version = 11 : i64} {
  func.func @decoder_kernel(%arg0: memref<12x1xi32, #tpu.memory_space<vmem>>, %arg1: memref<16x32xf32, #tpu.memory_space<vmem>>, %arg2: memref<16x1xf32, #tpu.memory_space<vmem>>, %arg3: memref<2x2x32xf32, #tpu.memory_space<vmem>>, %arg4: memref<160x128xbf16, #tpu.memory_space<vmem>>, %arg5: memref<64x256xbf16, #tpu.memory_space<vmem>>, %arg6: memref<8x128xf32, #tpu.memory_space<vmem>>, %arg7: memref<12x128xf32, #tpu.memory_space<vmem>>, %arg8: memref<2x2x32xf32, #tpu.memory_space<vmem>>, %arg9: memref<12x32xf32, #tpu.memory_space<vmem>>) attributes {dimension_semantics = [], scalar_prefetch = 0 : i64, scratch_operands = 1 : i64, tpu.core_type = #tpu.core_type<tc>} {
    %c0 = arith.constant 0 : index
    %c0_0 = arith.constant 0 : index
    %0 = vector.load %arg4[%c0, %c0_0] : memref<160x128xbf16, #tpu.memory_space<vmem>>, vector<32x128xbf16>
    %c64 = arith.constant 64 : index
    %c0_1 = arith.constant 0 : index
    %1 = vector.load %arg4[%c64, %c0_1] : memref<160x128xbf16, #tpu.memory_space<vmem>>, vector<32x32xbf16>
    %c64_2 = arith.constant 64 : index
    %c32 = arith.constant 32 : index
    %2 = vector.load %arg4[%c64_2, %c32] : memref<160x128xbf16, #tpu.memory_space<vmem>>, vector<32x96xbf16>
    %c96 = arith.constant 96 : index
    %c0_3 = arith.constant 0 : index
    %3 = vector.load %arg4[%c96, %c0_3] : memref<160x128xbf16, #tpu.memory_space<vmem>>, vector<64x96xbf16>
    %c0_4 = arith.constant 0 : index
    %c0_5 = arith.constant 0 : index
    %4 = vector.load %arg5[%c0_4, %c0_5] : memref<64x256xbf16, #tpu.memory_space<vmem>>, vector<64x256xbf16>
    %c0_6 = arith.constant 0 : index
    %c0_7 = arith.constant 0 : index
    %5 = vector.load %arg6[%c0_6, %c0_7] : memref<8x128xf32, #tpu.memory_space<vmem>>, vector<1x96xf32>
    %c1 = arith.constant 1 : index
    %c0_8 = arith.constant 0 : index
    %6 = vector.load %arg6[%c1, %c0_8] : memref<8x128xf32, #tpu.memory_space<vmem>>, vector<1x96xf32>
    %c2 = arith.constant 2 : index
    %c0_9 = arith.constant 0 : index
    %7 = vector.load %arg6[%c2, %c0_9] : memref<8x128xf32, #tpu.memory_space<vmem>>, vector<1x96xf32>
    %c4 = arith.constant 4 : index
    %c0_10 = arith.constant 0 : index
    %8 = vector.load %arg6[%c4, %c0_10] : memref<8x128xf32, #tpu.memory_space<vmem>>, vector<1x32xf32>
    %c0_11 = arith.constant 0 : index
    %c0_12 = arith.constant 0 : index
    %9 = vector.load %arg1[%c0_11, %c0_12] : memref<16x32xf32, #tpu.memory_space<vmem>>, vector<16x32xf32>
    %10 = vector.shape_cast %9 : vector<16x32xf32> to vector<2x8x32xf32>
    %c0_13 = arith.constant 0 : index
    %c0_14 = arith.constant 0 : index
    %11 = vector.load %arg2[%c0_13, %c0_14] : memref<16x1xf32, #tpu.memory_space<vmem>>, vector<16x1xf32>
    %12 = vector.shape_cast %11 : vector<16x1xf32> to vector<2x8x1xf32>
    %13 = arith.truncf %9 : vector<16x32xf32> to vector<16x32xbf16>
    %cst = arith.constant dense<0.000000e+00> : vector<16x32xf32>
    %14 = tpu.matmul %13, %1, %cst {dimension_numbers = #tpu.dot_dimension_numbers<[1], [0], [0], [1], [0, 0, 1, 1], [], []>} : vector<16x32xbf16>, vector<32x32xbf16>, vector<16x32xf32> -> vector<16x32xf32>
    %15 = vector.shape_cast %14 : vector<16x32xf32> to vector<2x8x32xf32>
    %c0_15 = arith.constant 0 : index
    %c0_16 = arith.constant 0 : index
    %16 = vector.load %arg0[%c0_15, %c0_16] : memref<12x1xi32, #tpu.memory_space<vmem>>, vector<12x1xi32>
    %17 = tpu.iota {dimensions = array<i32: 1>} : vector<12x64xi32>
    %18 = vector.broadcast %16 : vector<12x1xi32> to vector<12x64xi32>
    %19 = arith.cmpi eq, %18, %17 : vector<12x64xi32>
    %cst_17 = arith.constant 1.000000e+00 : f32
    %cst_18 = arith.constant 0.000000e+00 : f32
    %20 = vector.broadcast %cst_17 : f32 to vector<12x64xf32>
    %21 = vector.broadcast %cst_18 : f32 to vector<12x64xf32>
    %22 = arith.select %19, %20, %21 : vector<12x64xi1>, vector<12x64xf32>
    %23 = arith.truncf %22 : vector<12x64xf32> to vector<12x64xbf16>
    %cst_19 = arith.constant dense<0.000000e+00> : vector<12x96xf32>
    %24 = tpu.matmul %23, %3, %cst_19 {dimension_numbers = #tpu.dot_dimension_numbers<[1], [0], [0], [1], [0, 0, 1, 1], [], []>} : vector<12x64xbf16>, vector<64x96xbf16>, vector<12x96xf32> -> vector<12x96xf32>
    %c0_20 = arith.constant 0 : index
    %c0_21 = arith.constant 0 : index
    %c0_22 = arith.constant 0 : index
    %25 = vector.load %arg3[%c0_20, %c0_21, %c0_22] : memref<2x2x32xf32, #tpu.memory_space<vmem>>, vector<1x2x32xf32>
    %26 = vector.shape_cast %25 : vector<1x2x32xf32> to vector<2x32xf32>
    %c1_23 = arith.constant 1 : index
    %c0_24 = arith.constant 0 : index
    %c0_25 = arith.constant 0 : index
    %27 = vector.load %arg3[%c1_23, %c0_24, %c0_25] : memref<2x2x32xf32, #tpu.memory_space<vmem>>, vector<1x2x32xf32>
    %28 = vector.shape_cast %27 : vector<1x2x32xf32> to vector<2x32xf32>
    %29 = arith.truncf %28 : vector<2x32xf32> to vector<2x32xbf16>
    %cst_26 = arith.constant dense<0.000000e+00> : vector<2x128xf32>
    %30 = tpu.matmul %29, %0, %cst_26 {dimension_numbers = #tpu.dot_dimension_numbers<[1], [0], [0], [1], [0, 0, 1, 1], [], []>} : vector<2x32xbf16>, vector<32x128xbf16>, vector<2x128xf32> -> vector<2x128xf32>
    %31 = vector.extract_strided_slice %30 {offsets = [0, 0], sizes = [2, 32], strides = [1, 1]} : vector<2x128xf32> to vector<2x32xf32>
    %32 = vector.extract_strided_slice %30 {offsets = [0, 32], sizes = [2, 96], strides = [1, 1]} : vector<2x128xf32> to vector<2x96xf32>
    %33 = vector.broadcast %7 : vector<1x96xf32> to vector<2x96xf32>
    %34 = arith.addf %32, %33 : vector<2x96xf32>
    %35 = vector.shape_cast %31 : vector<2x32xf32> to vector<2x1x32xf32>
    %36 = vector.broadcast %35 : vector<2x1x32xf32> to vector<2x8x32xf32>
    %37 = arith.addf %36, %15 : vector<2x8x32xf32>
    %38 = math.tanh %37 : vector<2x8x32xf32>
    %39 = vector.shape_cast %8 : vector<1x32xf32> to vector<1x1x32xf32>
    %40 = vector.broadcast %39 : vector<1x1x32xf32> to vector<2x8x32xf32>
    %41 = arith.mulf %38, %40 : vector<2x8x32xf32>
    %cst_27 = arith.constant dense<0.000000e+00> : vector<2x8xf32>
    %42 = vector.multi_reduction <add>, %41, %cst_27 [2] : vector<2x8x32xf32> to vector<2x8xf32>
    %43 = vector.shape_cast %42 : vector<2x8xf32> to vector<2x8x1xf32>
    %44 = arith.addf %43, %12 : vector<2x8x1xf32>
    %cst_28 = arith.constant dense<0xFF800000> : vector<2x1xf32>
    %45 = vector.multi_reduction <maximumf>, %44, %cst_28 [1] : vector<2x8x1xf32> to vector<2x1xf32>
    %46 = vector.shape_cast %45 : vector<2x1xf32> to vector<2x1x1xf32>
    %47 = vector.broadcast %46 : vector<2x1x1xf32> to vector<2x8x1xf32>
    %48 = arith.subf %44, %47 : vector<2x8x1xf32>
    %49 = math.exp %48 : vector<2x8x1xf32>
    %cst_29 = arith.constant dense<0.000000e+00> : vector<2x1xf32>
    %50 = vector.multi_reduction <add>, %49, %cst_29 [1] : vector<2x8x1xf32> to vector<2x1xf32>
    %51 = vector.shape_cast %50 : vector<2x1xf32> to vector<2x1x1xf32>
    %52 = tpu.reciprocal %51 {approx = true} : vector<2x1x1xf32> -> vector<2x1x1xf32>
    %53 = vector.broadcast %52 : vector<2x1x1xf32> to vector<2x8x1xf32>
    %54 = arith.mulf %49, %53 : vector<2x8x1xf32>
    %55 = vector.broadcast %54 : vector<2x8x1xf32> to vector<2x8x32xf32>
    %56 = arith.mulf %55, %10 : vector<2x8x32xf32>
    %cst_30 = arith.constant dense<0.000000e+00> : vector<2x32xf32>
    %57 = vector.multi_reduction <add>, %56, %cst_30 [1] : vector<2x8x32xf32> to vector<2x32xf32>
    %58 = tpu.concatenate %57, %26 in 1 : vector<2x32xf32>, vector<2x32xf32> -> vector<2x64xf32>
    %59 = arith.truncf %58 : vector<2x64xf32> to vector<2x64xbf16>
    %cst_31 = arith.constant dense<0.000000e+00> : vector<2x256xf32>
    %60 = tpu.matmul %59, %4, %cst_31 {dimension_numbers = #tpu.dot_dimension_numbers<[1], [0], [0], [1], [0, 0, 1, 1], [], []>} : vector<2x64xbf16>, vector<64x256xbf16>, vector<2x256xf32> -> vector<2x256xf32>
    %61 = vector.extract_strided_slice %60 {offsets = [0, 0], sizes = [2, 96], strides = [1, 1]} : vector<2x256xf32> to vector<2x96xf32>
    %62 = vector.extract_strided_slice %24 {offsets = [0, 0], sizes = [2, 96], strides = [1, 1]} : vector<12x96xf32> to vector<2x96xf32>
    %63 = arith.addf %61, %62 : vector<2x96xf32>
    %64 = vector.extract_strided_slice %60 {offsets = [0, 128], sizes = [2, 96], strides = [1, 1]} : vector<2x256xf32> to vector<2x96xf32>
    %65 = vector.broadcast %5 : vector<1x96xf32> to vector<2x96xf32>
    %66 = arith.addf %64, %65 : vector<2x96xf32>
    %67 = vector.extract_strided_slice %63 {offsets = [0, 0], sizes = [2, 32], strides = [1, 1]} : vector<2x96xf32> to vector<2x32xf32>
    %68 = vector.extract_strided_slice %66 {offsets = [0, 0], sizes = [2, 32], strides = [1, 1]} : vector<2x96xf32> to vector<2x32xf32>
    %69 = arith.addf %67, %68 : vector<2x32xf32>
    %70 = arith.negf %69 : vector<2x32xf32>
    %71 = math.exp %70 : vector<2x32xf32>
    %cst_32 = arith.constant 1.000000e+00 : f32
    %72 = vector.broadcast %cst_32 : f32 to vector<2x32xf32>
    %73 = arith.addf %72, %71 : vector<2x32xf32>
    %74 = arith.divf %72, %73 : vector<2x32xf32>
    %75 = vector.extract_strided_slice %63 {offsets = [0, 32], sizes = [2, 32], strides = [1, 1]} : vector<2x96xf32> to vector<2x32xf32>
    %76 = vector.extract_strided_slice %66 {offsets = [0, 32], sizes = [2, 32], strides = [1, 1]} : vector<2x96xf32> to vector<2x32xf32>
    %77 = arith.addf %75, %76 : vector<2x32xf32>
    %78 = arith.negf %77 : vector<2x32xf32>
    %79 = math.exp %78 : vector<2x32xf32>
    %cst_33 = arith.constant 1.000000e+00 : f32
    %80 = vector.broadcast %cst_33 : f32 to vector<2x32xf32>
    %81 = arith.addf %80, %79 : vector<2x32xf32>
    %82 = arith.divf %80, %81 : vector<2x32xf32>
    %83 = vector.extract_strided_slice %63 {offsets = [0, 64], sizes = [2, 32], strides = [1, 1]} : vector<2x96xf32> to vector<2x32xf32>
    %84 = vector.extract_strided_slice %66 {offsets = [0, 64], sizes = [2, 32], strides = [1, 1]} : vector<2x96xf32> to vector<2x32xf32>
    %85 = arith.mulf %74, %84 : vector<2x32xf32>
    %86 = arith.addf %83, %85 : vector<2x32xf32>
    %87 = math.tanh %86 : vector<2x32xf32>
    %cst_34 = arith.constant 1.000000e+00 : f32
    %88 = vector.broadcast %cst_34 : f32 to vector<2x32xf32>
    %89 = arith.subf %88, %82 : vector<2x32xf32>
    %90 = arith.mulf %89, %87 : vector<2x32xf32>
    %91 = arith.mulf %82, %26 : vector<2x32xf32>
    %92 = arith.addf %90, %91 : vector<2x32xf32>
    %93 = arith.truncf %92 : vector<2x32xf32> to vector<2x32xbf16>
    %cst_35 = arith.constant dense<0.000000e+00> : vector<2x96xf32>
    %94 = tpu.matmul %93, %2, %cst_35 {dimension_numbers = #tpu.dot_dimension_numbers<[1], [0], [0], [1], [0, 0, 1, 1], [], []>} : vector<2x32xbf16>, vector<32x96xbf16>, vector<2x96xf32> -> vector<2x96xf32>
    %95 = vector.broadcast %6 : vector<1x96xf32> to vector<2x96xf32>
    %96 = arith.addf %94, %95 : vector<2x96xf32>
    %97 = vector.extract_strided_slice %96 {offsets = [0, 0], sizes = [2, 32], strides = [1, 1]} : vector<2x96xf32> to vector<2x32xf32>
    %98 = vector.extract_strided_slice %34 {offsets = [0, 0], sizes = [2, 32], strides = [1, 1]} : vector<2x96xf32> to vector<2x32xf32>
    %99 = arith.addf %97, %98 : vector<2x32xf32>
    %100 = arith.negf %99 : vector<2x32xf32>
    %101 = math.exp %100 : vector<2x32xf32>
    %cst_36 = arith.constant 1.000000e+00 : f32
    %102 = vector.broadcast %cst_36 : f32 to vector<2x32xf32>
    %103 = arith.addf %102, %101 : vector<2x32xf32>
    %104 = arith.divf %102, %103 : vector<2x32xf32>
    %105 = vector.extract_strided_slice %96 {offsets = [0, 32], sizes = [2, 32], strides = [1, 1]} : vector<2x96xf32> to vector<2x32xf32>
    %106 = vector.extract_strided_slice %34 {offsets = [0, 32], sizes = [2, 32], strides = [1, 1]} : vector<2x96xf32> to vector<2x32xf32>
    %107 = arith.addf %105, %106 : vector<2x32xf32>
    %108 = arith.negf %107 : vector<2x32xf32>
    %109 = math.exp %108 : vector<2x32xf32>
    %cst_37 = arith.constant 1.000000e+00 : f32
    %110 = vector.broadcast %cst_37 : f32 to vector<2x32xf32>
    %111 = arith.addf %110, %109 : vector<2x32xf32>
    %112 = arith.divf %110, %111 : vector<2x32xf32>
    %113 = vector.extract_strided_slice %96 {offsets = [0, 64], sizes = [2, 32], strides = [1, 1]} : vector<2x96xf32> to vector<2x32xf32>
    %114 = vector.extract_strided_slice %34 {offsets = [0, 64], sizes = [2, 32], strides = [1, 1]} : vector<2x96xf32> to vector<2x32xf32>
    %115 = arith.mulf %104, %114 : vector<2x32xf32>
    %116 = arith.addf %113, %115 : vector<2x32xf32>
    %117 = math.tanh %116 : vector<2x32xf32>
    %cst_38 = arith.constant 1.000000e+00 : f32
    %118 = vector.broadcast %cst_38 : f32 to vector<2x32xf32>
    %119 = arith.subf %118, %112 : vector<2x32xf32>
    %120 = arith.mulf %119, %117 : vector<2x32xf32>
    %121 = arith.mulf %112, %28 : vector<2x32xf32>
    %122 = arith.addf %120, %121 : vector<2x32xf32>
    %123 = vector.extract_strided_slice %122 {offsets = [0, 0], sizes = [1, 32], strides = [1, 1]} : vector<2x32xf32> to vector<1x32xf32>
    %c0_39 = arith.constant 0 : index
    %c0_40 = arith.constant 0 : index
    %124 = vector.load %arg9[%c0_39, %c0_40] : memref<12x32xf32, #tpu.memory_space<vmem>>, vector<1x32xf32>
    tpu.vector_store %arg9[%c0_39, %c0_40], %123 {strides = array<i32>} : memref<12x32xf32, #tpu.memory_space<vmem>>, vector<1x32xf32>,
    %125 = vector.extract_strided_slice %122 {offsets = [1, 0], sizes = [1, 32], strides = [1, 1]} : vector<2x32xf32> to vector<1x32xf32>
    %c6 = arith.constant 6 : index
    %c0_41 = arith.constant 0 : index
    %126 = vector.load %arg9[%c6, %c0_41] : memref<12x32xf32, #tpu.memory_space<vmem>>, vector<1x32xf32>
    tpu.vector_store %arg9[%c6, %c0_41], %125 {strides = array<i32>} : memref<12x32xf32, #tpu.memory_space<vmem>>, vector<1x32xf32>,
    %127 = arith.truncf %122 : vector<2x32xf32> to vector<2x32xbf16>
    %cst_42 = arith.constant dense<0.000000e+00> : vector<2x128xf32>
    %128 = tpu.matmul %127, %0, %cst_42 {dimension_numbers = #tpu.dot_dimension_numbers<[1], [0], [0], [1], [0, 0, 1, 1], [], []>} : vector<2x32xbf16>, vector<32x128xbf16>, vector<2x128xf32> -> vector<2x128xf32>
    %129 = vector.extract_strided_slice %128 {offsets = [0, 0], sizes = [2, 32], strides = [1, 1]} : vector<2x128xf32> to vector<2x32xf32>
    %130 = vector.extract_strided_slice %128 {offsets = [0, 32], sizes = [2, 96], strides = [1, 1]} : vector<2x128xf32> to vector<2x96xf32>
    %131 = vector.broadcast %7 : vector<1x96xf32> to vector<2x96xf32>
    %132 = arith.addf %130, %131 : vector<2x96xf32>
    %133 = vector.shape_cast %129 : vector<2x32xf32> to vector<2x1x32xf32>
    %134 = vector.broadcast %133 : vector<2x1x32xf32> to vector<2x8x32xf32>
    %135 = arith.addf %134, %15 : vector<2x8x32xf32>
    %136 = math.tanh %135 : vector<2x8x32xf32>
    %137 = vector.shape_cast %8 : vector<1x32xf32> to vector<1x1x32xf32>
    %138 = vector.broadcast %137 : vector<1x1x32xf32> to vector<2x8x32xf32>
    %139 = arith.mulf %136, %138 : vector<2x8x32xf32>
    %cst_43 = arith.constant dense<0.000000e+00> : vector<2x8xf32>
    %140 = vector.multi_reduction <add>, %139, %cst_43 [2] : vector<2x8x32xf32> to vector<2x8xf32>
    %141 = vector.shape_cast %140 : vector<2x8xf32> to vector<2x8x1xf32>
    %142 = arith.addf %141, %12 : vector<2x8x1xf32>
    %cst_44 = arith.constant dense<0xFF800000> : vector<2x1xf32>
    %143 = vector.multi_reduction <maximumf>, %142, %cst_44 [1] : vector<2x8x1xf32> to vector<2x1xf32>
    %144 = vector.shape_cast %143 : vector<2x1xf32> to vector<2x1x1xf32>
    %145 = vector.broadcast %144 : vector<2x1x1xf32> to vector<2x8x1xf32>
    %146 = arith.subf %142, %145 : vector<2x8x1xf32>
    %147 = math.exp %146 : vector<2x8x1xf32>
    %cst_45 = arith.constant dense<0.000000e+00> : vector<2x1xf32>
    %148 = vector.multi_reduction <add>, %147, %cst_45 [1] : vector<2x8x1xf32> to vector<2x1xf32>
    %149 = vector.shape_cast %148 : vector<2x1xf32> to vector<2x1x1xf32>
    %150 = tpu.reciprocal %149 {approx = true} : vector<2x1x1xf32> -> vector<2x1x1xf32>
    %151 = vector.broadcast %150 : vector<2x1x1xf32> to vector<2x8x1xf32>
    %152 = arith.mulf %147, %151 : vector<2x8x1xf32>
    %153 = vector.broadcast %152 : vector<2x8x1xf32> to vector<2x8x32xf32>
    %154 = arith.mulf %153, %10 : vector<2x8x32xf32>
    %cst_46 = arith.constant dense<0.000000e+00> : vector<2x32xf32>
    %155 = vector.multi_reduction <add>, %154, %cst_46 [1] : vector<2x8x32xf32> to vector<2x32xf32>
    %156 = tpu.concatenate %155, %92 in 1 : vector<2x32xf32>, vector<2x32xf32> -> vector<2x64xf32>
    %157 = arith.truncf %156 : vector<2x64xf32> to vector<2x64xbf16>
    %cst_47 = arith.constant dense<0.000000e+00> : vector<2x256xf32>
    %158 = tpu.matmul %157, %4, %cst_47 {dimension_numbers = #tpu.dot_dimension_numbers<[1], [0], [0], [1], [0, 0, 1, 1], [], []>} : vector<2x64xbf16>, vector<64x256xbf16>, vector<2x256xf32> -> vector<2x256xf32>
    %159 = vector.extract_strided_slice %158 {offsets = [0, 0], sizes = [2, 96], strides = [1, 1]} : vector<2x256xf32> to vector<2x96xf32>
    %160 = vector.extract_strided_slice %24 {offsets = [2, 0], sizes = [2, 96], strides = [1, 1]} : vector<12x96xf32> to vector<2x96xf32>
    %161 = arith.addf %159, %160 : vector<2x96xf32>
    %162 = vector.extract_strided_slice %158 {offsets = [0, 128], sizes = [2, 96], strides = [1, 1]} : vector<2x256xf32> to vector<2x96xf32>
    %163 = vector.broadcast %5 : vector<1x96xf32> to vector<2x96xf32>
    %164 = arith.addf %162, %163 : vector<2x96xf32>
    %165 = vector.extract_strided_slice %161 {offsets = [0, 0], sizes = [2, 32], strides = [1, 1]} : vector<2x96xf32> to vector<2x32xf32>
    %166 = vector.extract_strided_slice %164 {offsets = [0, 0], sizes = [2, 32], strides = [1, 1]} : vector<2x96xf32> to vector<2x32xf32>
    %167 = arith.addf %165, %166 : vector<2x32xf32>
    %168 = arith.negf %167 : vector<2x32xf32>
    %169 = math.exp %168 : vector<2x32xf32>
    %cst_48 = arith.constant 1.000000e+00 : f32
    %170 = vector.broadcast %cst_48 : f32 to vector<2x32xf32>
    %171 = arith.addf %170, %169 : vector<2x32xf32>
    %172 = arith.divf %170, %171 : vector<2x32xf32>
    %173 = vector.extract_strided_slice %161 {offsets = [0, 32], sizes = [2, 32], strides = [1, 1]} : vector<2x96xf32> to vector<2x32xf32>
    %174 = vector.extract_strided_slice %164 {offsets = [0, 32], sizes = [2, 32], strides = [1, 1]} : vector<2x96xf32> to vector<2x32xf32>
    %175 = arith.addf %173, %174 : vector<2x32xf32>
    %176 = arith.negf %175 : vector<2x32xf32>
    %177 = math.exp %176 : vector<2x32xf32>
    %cst_49 = arith.constant 1.000000e+00 : f32
    %178 = vector.broadcast %cst_49 : f32 to vector<2x32xf32>
    %179 = arith.addf %178, %177 : vector<2x32xf32>
    %180 = arith.divf %178, %179 : vector<2x32xf32>
    %181 = vector.extract_strided_slice %161 {offsets = [0, 64], sizes = [2, 32], strides = [1, 1]} : vector<2x96xf32> to vector<2x32xf32>
    %182 = vector.extract_strided_slice %164 {offsets = [0, 64], sizes = [2, 32], strides = [1, 1]} : vector<2x96xf32> to vector<2x32xf32>
    %183 = arith.mulf %172, %182 : vector<2x32xf32>
    %184 = arith.addf %181, %183 : vector<2x32xf32>
    %185 = math.tanh %184 : vector<2x32xf32>
    %cst_50 = arith.constant 1.000000e+00 : f32
    %186 = vector.broadcast %cst_50 : f32 to vector<2x32xf32>
    %187 = arith.subf %186, %180 : vector<2x32xf32>
    %188 = arith.mulf %187, %185 : vector<2x32xf32>
    %189 = arith.mulf %180, %92 : vector<2x32xf32>
    %190 = arith.addf %188, %189 : vector<2x32xf32>
    %191 = arith.truncf %190 : vector<2x32xf32> to vector<2x32xbf16>
    %cst_51 = arith.constant dense<0.000000e+00> : vector<2x96xf32>
    %192 = tpu.matmul %191, %2, %cst_51 {dimension_numbers = #tpu.dot_dimension_numbers<[1], [0], [0], [1], [0, 0, 1, 1], [], []>} : vector<2x32xbf16>, vector<32x96xbf16>, vector<2x96xf32> -> vector<2x96xf32>
    %193 = vector.broadcast %6 : vector<1x96xf32> to vector<2x96xf32>
    %194 = arith.addf %192, %193 : vector<2x96xf32>
    %195 = vector.extract_strided_slice %194 {offsets = [0, 0], sizes = [2, 32], strides = [1, 1]} : vector<2x96xf32> to vector<2x32xf32>
    %196 = vector.extract_strided_slice %132 {offsets = [0, 0], sizes = [2, 32], strides = [1, 1]} : vector<2x96xf32> to vector<2x32xf32>
    %197 = arith.addf %195, %196 : vector<2x32xf32>
    %198 = arith.negf %197 : vector<2x32xf32>
    %199 = math.exp %198 : vector<2x32xf32>
    %cst_52 = arith.constant 1.000000e+00 : f32
    %200 = vector.broadcast %cst_52 : f32 to vector<2x32xf32>
    %201 = arith.addf %200, %199 : vector<2x32xf32>
    %202 = arith.divf %200, %201 : vector<2x32xf32>
    %203 = vector.extract_strided_slice %194 {offsets = [0, 32], sizes = [2, 32], strides = [1, 1]} : vector<2x96xf32> to vector<2x32xf32>
    %204 = vector.extract_strided_slice %132 {offsets = [0, 32], sizes = [2, 32], strides = [1, 1]} : vector<2x96xf32> to vector<2x32xf32>
    %205 = arith.addf %203, %204 : vector<2x32xf32>
    %206 = arith.negf %205 : vector<2x32xf32>
    %207 = math.exp %206 : vector<2x32xf32>
    %cst_53 = arith.constant 1.000000e+00 : f32
    %208 = vector.broadcast %cst_53 : f32 to vector<2x32xf32>
    %209 = arith.addf %208, %207 : vector<2x32xf32>
    %210 = arith.divf %208, %209 : vector<2x32xf32>
    %211 = vector.extract_strided_slice %194 {offsets = [0, 64], sizes = [2, 32], strides = [1, 1]} : vector<2x96xf32> to vector<2x32xf32>
    %212 = vector.extract_strided_slice %132 {offsets = [0, 64], sizes = [2, 32], strides = [1, 1]} : vector<2x96xf32> to vector<2x32xf32>
    %213 = arith.mulf %202, %212 : vector<2x32xf32>
    %214 = arith.addf %211, %213 : vector<2x32xf32>
    %215 = math.tanh %214 : vector<2x32xf32>
    %cst_54 = arith.constant 1.000000e+00 : f32
    %216 = vector.broadcast %cst_54 : f32 to vector<2x32xf32>
    %217 = arith.subf %216, %210 : vector<2x32xf32>
    %218 = arith.mulf %217, %215 : vector<2x32xf32>
    %219 = arith.mulf %210, %122 : vector<2x32xf32>
    %220 = arith.addf %218, %219 : vector<2x32xf32>
    %221 = vector.extract_strided_slice %220 {offsets = [0, 0], sizes = [1, 32], strides = [1, 1]} : vector<2x32xf32> to vector<1x32xf32>
    %c1_55 = arith.constant 1 : index
    %c0_56 = arith.constant 0 : index
    %222 = vector.load %arg9[%c1_55, %c0_56] : memref<12x32xf32, #tpu.memory_space<vmem>>, vector<1x32xf32>
    tpu.vector_store %arg9[%c1_55, %c0_56], %221 {strides = array<i32>} : memref<12x32xf32, #tpu.memory_space<vmem>>, vector<1x32xf32>,
    %223 = vector.extract_strided_slice %220 {offsets = [1, 0], sizes = [1, 32], strides = [1, 1]} : vector<2x32xf32> to vector<1x32xf32>
    %c7 = arith.constant 7 : index
    %c0_57 = arith.constant 0 : index
    %224 = vector.load %arg9[%c7, %c0_57] : memref<12x32xf32, #tpu.memory_space<vmem>>, vector<1x32xf32>
    tpu.vector_store %arg9[%c7, %c0_57], %223 {strides = array<i32>} : memref<12x32xf32, #tpu.memory_space<vmem>>, vector<1x32xf32>,
    %225 = arith.truncf %220 : vector<2x32xf32> to vector<2x32xbf16>
    %cst_58 = arith.constant dense<0.000000e+00> : vector<2x128xf32>
    %226 = tpu.matmul %225, %0, %cst_58 {dimension_numbers = #tpu.dot_dimension_numbers<[1], [0], [0], [1], [0, 0, 1, 1], [], []>} : vector<2x32xbf16>, vector<32x128xbf16>, vector<2x128xf32> -> vector<2x128xf32>
    %227 = vector.extract_strided_slice %226 {offsets = [0, 0], sizes = [2, 32], strides = [1, 1]} : vector<2x128xf32> to vector<2x32xf32>
    %228 = vector.extract_strided_slice %226 {offsets = [0, 32], sizes = [2, 96], strides = [1, 1]} : vector<2x128xf32> to vector<2x96xf32>
    %229 = vector.broadcast %7 : vector<1x96xf32> to vector<2x96xf32>
    %230 = arith.addf %228, %229 : vector<2x96xf32>
    %231 = vector.shape_cast %227 : vector<2x32xf32> to vector<2x1x32xf32>
    %232 = vector.broadcast %231 : vector<2x1x32xf32> to vector<2x8x32xf32>
    %233 = arith.addf %232, %15 : vector<2x8x32xf32>
    %234 = math.tanh %233 : vector<2x8x32xf32>
    %235 = vector.shape_cast %8 : vector<1x32xf32> to vector<1x1x32xf32>
    %236 = vector.broadcast %235 : vector<1x1x32xf32> to vector<2x8x32xf32>
    %237 = arith.mulf %234, %236 : vector<2x8x32xf32>
    %cst_59 = arith.constant dense<0.000000e+00> : vector<2x8xf32>
    %238 = vector.multi_reduction <add>, %237, %cst_59 [2] : vector<2x8x32xf32> to vector<2x8xf32>
    %239 = vector.shape_cast %238 : vector<2x8xf32> to vector<2x8x1xf32>
    %240 = arith.addf %239, %12 : vector<2x8x1xf32>
    %cst_60 = arith.constant dense<0xFF800000> : vector<2x1xf32>
    %241 = vector.multi_reduction <maximumf>, %240, %cst_60 [1] : vector<2x8x1xf32> to vector<2x1xf32>
    %242 = vector.shape_cast %241 : vector<2x1xf32> to vector<2x1x1xf32>
    %243 = vector.broadcast %242 : vector<2x1x1xf32> to vector<2x8x1xf32>
    %244 = arith.subf %240, %243 : vector<2x8x1xf32>
    %245 = math.exp %244 : vector<2x8x1xf32>
    %cst_61 = arith.constant dense<0.000000e+00> : vector<2x1xf32>
    %246 = vector.multi_reduction <add>, %245, %cst_61 [1] : vector<2x8x1xf32> to vector<2x1xf32>
    %247 = vector.shape_cast %246 : vector<2x1xf32> to vector<2x1x1xf32>
    %248 = tpu.reciprocal %247 {approx = true} : vector<2x1x1xf32> -> vector<2x1x1xf32>
    %249 = vector.broadcast %248 : vector<2x1x1xf32> to vector<2x8x1xf32>
    %250 = arith.mulf %245, %249 : vector<2x8x1xf32>
    %251 = vector.broadcast %250 : vector<2x8x1xf32> to vector<2x8x32xf32>
    %252 = arith.mulf %251, %10 : vector<2x8x32xf32>
    %cst_62 = arith.constant dense<0.000000e+00> : vector<2x32xf32>
    %253 = vector.multi_reduction <add>, %252, %cst_62 [1] : vector<2x8x32xf32> to vector<2x32xf32>
    %254 = tpu.concatenate %253, %190 in 1 : vector<2x32xf32>, vector<2x32xf32> -> vector<2x64xf32>
    %255 = arith.truncf %254 : vector<2x64xf32> to vector<2x64xbf16>
    %cst_63 = arith.constant dense<0.000000e+00> : vector<2x256xf32>
    %256 = tpu.matmul %255, %4, %cst_63 {dimension_numbers = #tpu.dot_dimension_numbers<[1], [0], [0], [1], [0, 0, 1, 1], [], []>} : vector<2x64xbf16>, vector<64x256xbf16>, vector<2x256xf32> -> vector<2x256xf32>
    %257 = vector.extract_strided_slice %256 {offsets = [0, 0], sizes = [2, 96], strides = [1, 1]} : vector<2x256xf32> to vector<2x96xf32>
    %258 = vector.extract_strided_slice %24 {offsets = [4, 0], sizes = [2, 96], strides = [1, 1]} : vector<12x96xf32> to vector<2x96xf32>
    %259 = arith.addf %257, %258 : vector<2x96xf32>
    %260 = vector.extract_strided_slice %256 {offsets = [0, 128], sizes = [2, 96], strides = [1, 1]} : vector<2x256xf32> to vector<2x96xf32>
    %261 = vector.broadcast %5 : vector<1x96xf32> to vector<2x96xf32>
    %262 = arith.addf %260, %261 : vector<2x96xf32>
    %263 = vector.extract_strided_slice %259 {offsets = [0, 0], sizes = [2, 32], strides = [1, 1]} : vector<2x96xf32> to vector<2x32xf32>
    %264 = vector.extract_strided_slice %262 {offsets = [0, 0], sizes = [2, 32], strides = [1, 1]} : vector<2x96xf32> to vector<2x32xf32>
    %265 = arith.addf %263, %264 : vector<2x32xf32>
    %266 = arith.negf %265 : vector<2x32xf32>
    %267 = math.exp %266 : vector<2x32xf32>
    %cst_64 = arith.constant 1.000000e+00 : f32
    %268 = vector.broadcast %cst_64 : f32 to vector<2x32xf32>
    %269 = arith.addf %268, %267 : vector<2x32xf32>
    %270 = arith.divf %268, %269 : vector<2x32xf32>
    %271 = vector.extract_strided_slice %259 {offsets = [0, 32], sizes = [2, 32], strides = [1, 1]} : vector<2x96xf32> to vector<2x32xf32>
    %272 = vector.extract_strided_slice %262 {offsets = [0, 32], sizes = [2, 32], strides = [1, 1]} : vector<2x96xf32> to vector<2x32xf32>
    %273 = arith.addf %271, %272 : vector<2x32xf32>
    %274 = arith.negf %273 : vector<2x32xf32>
    %275 = math.exp %274 : vector<2x32xf32>
    %cst_65 = arith.constant 1.000000e+00 : f32
    %276 = vector.broadcast %cst_65 : f32 to vector<2x32xf32>
    %277 = arith.addf %276, %275 : vector<2x32xf32>
    %278 = arith.divf %276, %277 : vector<2x32xf32>
    %279 = vector.extract_strided_slice %259 {offsets = [0, 64], sizes = [2, 32], strides = [1, 1]} : vector<2x96xf32> to vector<2x32xf32>
    %280 = vector.extract_strided_slice %262 {offsets = [0, 64], sizes = [2, 32], strides = [1, 1]} : vector<2x96xf32> to vector<2x32xf32>
    %281 = arith.mulf %270, %280 : vector<2x32xf32>
    %282 = arith.addf %279, %281 : vector<2x32xf32>
    %283 = math.tanh %282 : vector<2x32xf32>
    %cst_66 = arith.constant 1.000000e+00 : f32
    %284 = vector.broadcast %cst_66 : f32 to vector<2x32xf32>
    %285 = arith.subf %284, %278 : vector<2x32xf32>
    %286 = arith.mulf %285, %283 : vector<2x32xf32>
    %287 = arith.mulf %278, %190 : vector<2x32xf32>
    %288 = arith.addf %286, %287 : vector<2x32xf32>
    %289 = arith.truncf %288 : vector<2x32xf32> to vector<2x32xbf16>
    %cst_67 = arith.constant dense<0.000000e+00> : vector<2x96xf32>
    %290 = tpu.matmul %289, %2, %cst_67 {dimension_numbers = #tpu.dot_dimension_numbers<[1], [0], [0], [1], [0, 0, 1, 1], [], []>} : vector<2x32xbf16>, vector<32x96xbf16>, vector<2x96xf32> -> vector<2x96xf32>
    %291 = vector.broadcast %6 : vector<1x96xf32> to vector<2x96xf32>
    %292 = arith.addf %290, %291 : vector<2x96xf32>
    %293 = vector.extract_strided_slice %292 {offsets = [0, 0], sizes = [2, 32], strides = [1, 1]} : vector<2x96xf32> to vector<2x32xf32>
    %294 = vector.extract_strided_slice %230 {offsets = [0, 0], sizes = [2, 32], strides = [1, 1]} : vector<2x96xf32> to vector<2x32xf32>
    %295 = arith.addf %293, %294 : vector<2x32xf32>
    %296 = arith.negf %295 : vector<2x32xf32>
    %297 = math.exp %296 : vector<2x32xf32>
    %cst_68 = arith.constant 1.000000e+00 : f32
    %298 = vector.broadcast %cst_68 : f32 to vector<2x32xf32>
    %299 = arith.addf %298, %297 : vector<2x32xf32>
    %300 = arith.divf %298, %299 : vector<2x32xf32>
    %301 = vector.extract_strided_slice %292 {offsets = [0, 32], sizes = [2, 32], strides = [1, 1]} : vector<2x96xf32> to vector<2x32xf32>
    %302 = vector.extract_strided_slice %230 {offsets = [0, 32], sizes = [2, 32], strides = [1, 1]} : vector<2x96xf32> to vector<2x32xf32>
    %303 = arith.addf %301, %302 : vector<2x32xf32>
    %304 = arith.negf %303 : vector<2x32xf32>
    %305 = math.exp %304 : vector<2x32xf32>
    %cst_69 = arith.constant 1.000000e+00 : f32
    %306 = vector.broadcast %cst_69 : f32 to vector<2x32xf32>
    %307 = arith.addf %306, %305 : vector<2x32xf32>
    %308 = arith.divf %306, %307 : vector<2x32xf32>
    %309 = vector.extract_strided_slice %292 {offsets = [0, 64], sizes = [2, 32], strides = [1, 1]} : vector<2x96xf32> to vector<2x32xf32>
    %310 = vector.extract_strided_slice %230 {offsets = [0, 64], sizes = [2, 32], strides = [1, 1]} : vector<2x96xf32> to vector<2x32xf32>
    %311 = arith.mulf %300, %310 : vector<2x32xf32>
    %312 = arith.addf %309, %311 : vector<2x32xf32>
    %313 = math.tanh %312 : vector<2x32xf32>
    %cst_70 = arith.constant 1.000000e+00 : f32
    %314 = vector.broadcast %cst_70 : f32 to vector<2x32xf32>
    %315 = arith.subf %314, %308 : vector<2x32xf32>
    %316 = arith.mulf %315, %313 : vector<2x32xf32>
    %317 = arith.mulf %308, %220 : vector<2x32xf32>
    %318 = arith.addf %316, %317 : vector<2x32xf32>
    %319 = vector.extract_strided_slice %318 {offsets = [0, 0], sizes = [1, 32], strides = [1, 1]} : vector<2x32xf32> to vector<1x32xf32>
    %c2_71 = arith.constant 2 : index
    %c0_72 = arith.constant 0 : index
    %320 = vector.load %arg9[%c2_71, %c0_72] : memref<12x32xf32, #tpu.memory_space<vmem>>, vector<1x32xf32>
    tpu.vector_store %arg9[%c2_71, %c0_72], %319 {strides = array<i32>} : memref<12x32xf32, #tpu.memory_space<vmem>>, vector<1x32xf32>,
    %321 = vector.extract_strided_slice %318 {offsets = [1, 0], sizes = [1, 32], strides = [1, 1]} : vector<2x32xf32> to vector<1x32xf32>
    %c8 = arith.constant 8 : index
    %c0_73 = arith.constant 0 : index
    %322 = vector.load %arg9[%c8, %c0_73] : memref<12x32xf32, #tpu.memory_space<vmem>>, vector<1x32xf32>
    tpu.vector_store %arg9[%c8, %c0_73], %321 {strides = array<i32>} : memref<12x32xf32, #tpu.memory_space<vmem>>, vector<1x32xf32>,
    %323 = arith.truncf %318 : vector<2x32xf32> to vector<2x32xbf16>
    %cst_74 = arith.constant dense<0.000000e+00> : vector<2x128xf32>
    %324 = tpu.matmul %323, %0, %cst_74 {dimension_numbers = #tpu.dot_dimension_numbers<[1], [0], [0], [1], [0, 0, 1, 1], [], []>} : vector<2x32xbf16>, vector<32x128xbf16>, vector<2x128xf32> -> vector<2x128xf32>
    %325 = vector.extract_strided_slice %324 {offsets = [0, 0], sizes = [2, 32], strides = [1, 1]} : vector<2x128xf32> to vector<2x32xf32>
    %326 = vector.extract_strided_slice %324 {offsets = [0, 32], sizes = [2, 96], strides = [1, 1]} : vector<2x128xf32> to vector<2x96xf32>
    %327 = vector.broadcast %7 : vector<1x96xf32> to vector<2x96xf32>
    %328 = arith.addf %326, %327 : vector<2x96xf32>
    %329 = vector.shape_cast %325 : vector<2x32xf32> to vector<2x1x32xf32>
    %330 = vector.broadcast %329 : vector<2x1x32xf32> to vector<2x8x32xf32>
    %331 = arith.addf %330, %15 : vector<2x8x32xf32>
    %332 = math.tanh %331 : vector<2x8x32xf32>
    %333 = vector.shape_cast %8 : vector<1x32xf32> to vector<1x1x32xf32>
    %334 = vector.broadcast %333 : vector<1x1x32xf32> to vector<2x8x32xf32>
    %335 = arith.mulf %332, %334 : vector<2x8x32xf32>
    %cst_75 = arith.constant dense<0.000000e+00> : vector<2x8xf32>
    %336 = vector.multi_reduction <add>, %335, %cst_75 [2] : vector<2x8x32xf32> to vector<2x8xf32>
    %337 = vector.shape_cast %336 : vector<2x8xf32> to vector<2x8x1xf32>
    %338 = arith.addf %337, %12 : vector<2x8x1xf32>
    %cst_76 = arith.constant dense<0xFF800000> : vector<2x1xf32>
    %339 = vector.multi_reduction <maximumf>, %338, %cst_76 [1] : vector<2x8x1xf32> to vector<2x1xf32>
    %340 = vector.shape_cast %339 : vector<2x1xf32> to vector<2x1x1xf32>
    %341 = vector.broadcast %340 : vector<2x1x1xf32> to vector<2x8x1xf32>
    %342 = arith.subf %338, %341 : vector<2x8x1xf32>
    %343 = math.exp %342 : vector<2x8x1xf32>
    %cst_77 = arith.constant dense<0.000000e+00> : vector<2x1xf32>
    %344 = vector.multi_reduction <add>, %343, %cst_77 [1] : vector<2x8x1xf32> to vector<2x1xf32>
    %345 = vector.shape_cast %344 : vector<2x1xf32> to vector<2x1x1xf32>
    %346 = tpu.reciprocal %345 {approx = true} : vector<2x1x1xf32> -> vector<2x1x1xf32>
    %347 = vector.broadcast %346 : vector<2x1x1xf32> to vector<2x8x1xf32>
    %348 = arith.mulf %343, %347 : vector<2x8x1xf32>
    %349 = vector.broadcast %348 : vector<2x8x1xf32> to vector<2x8x32xf32>
    %350 = arith.mulf %349, %10 : vector<2x8x32xf32>
    %cst_78 = arith.constant dense<0.000000e+00> : vector<2x32xf32>
    %351 = vector.multi_reduction <add>, %350, %cst_78 [1] : vector<2x8x32xf32> to vector<2x32xf32>
    %352 = tpu.concatenate %351, %288 in 1 : vector<2x32xf32>, vector<2x32xf32> -> vector<2x64xf32>
    %353 = arith.truncf %352 : vector<2x64xf32> to vector<2x64xbf16>
    %cst_79 = arith.constant dense<0.000000e+00> : vector<2x256xf32>
    %354 = tpu.matmul %353, %4, %cst_79 {dimension_numbers = #tpu.dot_dimension_numbers<[1], [0], [0], [1], [0, 0, 1, 1], [], []>} : vector<2x64xbf16>, vector<64x256xbf16>, vector<2x256xf32> -> vector<2x256xf32>
    %355 = vector.extract_strided_slice %354 {offsets = [0, 0], sizes = [2, 96], strides = [1, 1]} : vector<2x256xf32> to vector<2x96xf32>
    %356 = vector.extract_strided_slice %24 {offsets = [6, 0], sizes = [2, 96], strides = [1, 1]} : vector<12x96xf32> to vector<2x96xf32>
    %357 = arith.addf %355, %356 : vector<2x96xf32>
    %358 = vector.extract_strided_slice %354 {offsets = [0, 128], sizes = [2, 96], strides = [1, 1]} : vector<2x256xf32> to vector<2x96xf32>
    %359 = vector.broadcast %5 : vector<1x96xf32> to vector<2x96xf32>
    %360 = arith.addf %358, %359 : vector<2x96xf32>
    %361 = vector.extract_strided_slice %357 {offsets = [0, 0], sizes = [2, 32], strides = [1, 1]} : vector<2x96xf32> to vector<2x32xf32>
    %362 = vector.extract_strided_slice %360 {offsets = [0, 0], sizes = [2, 32], strides = [1, 1]} : vector<2x96xf32> to vector<2x32xf32>
    %363 = arith.addf %361, %362 : vector<2x32xf32>
    %364 = arith.negf %363 : vector<2x32xf32>
    %365 = math.exp %364 : vector<2x32xf32>
    %cst_80 = arith.constant 1.000000e+00 : f32
    %366 = vector.broadcast %cst_80 : f32 to vector<2x32xf32>
    %367 = arith.addf %366, %365 : vector<2x32xf32>
    %368 = arith.divf %366, %367 : vector<2x32xf32>
    %369 = vector.extract_strided_slice %357 {offsets = [0, 32], sizes = [2, 32], strides = [1, 1]} : vector<2x96xf32> to vector<2x32xf32>
    %370 = vector.extract_strided_slice %360 {offsets = [0, 32], sizes = [2, 32], strides = [1, 1]} : vector<2x96xf32> to vector<2x32xf32>
    %371 = arith.addf %369, %370 : vector<2x32xf32>
    %372 = arith.negf %371 : vector<2x32xf32>
    %373 = math.exp %372 : vector<2x32xf32>
    %cst_81 = arith.constant 1.000000e+00 : f32
    %374 = vector.broadcast %cst_81 : f32 to vector<2x32xf32>
    %375 = arith.addf %374, %373 : vector<2x32xf32>
    %376 = arith.divf %374, %375 : vector<2x32xf32>
    %377 = vector.extract_strided_slice %357 {offsets = [0, 64], sizes = [2, 32], strides = [1, 1]} : vector<2x96xf32> to vector<2x32xf32>
    %378 = vector.extract_strided_slice %360 {offsets = [0, 64], sizes = [2, 32], strides = [1, 1]} : vector<2x96xf32> to vector<2x32xf32>
    %379 = arith.mulf %368, %378 : vector<2x32xf32>
    %380 = arith.addf %377, %379 : vector<2x32xf32>
    %381 = math.tanh %380 : vector<2x32xf32>
    %cst_82 = arith.constant 1.000000e+00 : f32
    %382 = vector.broadcast %cst_82 : f32 to vector<2x32xf32>
    %383 = arith.subf %382, %376 : vector<2x32xf32>
    %384 = arith.mulf %383, %381 : vector<2x32xf32>
    %385 = arith.mulf %376, %288 : vector<2x32xf32>
    %386 = arith.addf %384, %385 : vector<2x32xf32>
    %387 = arith.truncf %386 : vector<2x32xf32> to vector<2x32xbf16>
    %cst_83 = arith.constant dense<0.000000e+00> : vector<2x96xf32>
    %388 = tpu.matmul %387, %2, %cst_83 {dimension_numbers = #tpu.dot_dimension_numbers<[1], [0], [0], [1], [0, 0, 1, 1], [], []>} : vector<2x32xbf16>, vector<32x96xbf16>, vector<2x96xf32> -> vector<2x96xf32>
    %389 = vector.broadcast %6 : vector<1x96xf32> to vector<2x96xf32>
    %390 = arith.addf %388, %389 : vector<2x96xf32>
    %391 = vector.extract_strided_slice %390 {offsets = [0, 0], sizes = [2, 32], strides = [1, 1]} : vector<2x96xf32> to vector<2x32xf32>
    %392 = vector.extract_strided_slice %328 {offsets = [0, 0], sizes = [2, 32], strides = [1, 1]} : vector<2x96xf32> to vector<2x32xf32>
    %393 = arith.addf %391, %392 : vector<2x32xf32>
    %394 = arith.negf %393 : vector<2x32xf32>
    %395 = math.exp %394 : vector<2x32xf32>
    %cst_84 = arith.constant 1.000000e+00 : f32
    %396 = vector.broadcast %cst_84 : f32 to vector<2x32xf32>
    %397 = arith.addf %396, %395 : vector<2x32xf32>
    %398 = arith.divf %396, %397 : vector<2x32xf32>
    %399 = vector.extract_strided_slice %390 {offsets = [0, 32], sizes = [2, 32], strides = [1, 1]} : vector<2x96xf32> to vector<2x32xf32>
    %400 = vector.extract_strided_slice %328 {offsets = [0, 32], sizes = [2, 32], strides = [1, 1]} : vector<2x96xf32> to vector<2x32xf32>
    %401 = arith.addf %399, %400 : vector<2x32xf32>
    %402 = arith.negf %401 : vector<2x32xf32>
    %403 = math.exp %402 : vector<2x32xf32>
    %cst_85 = arith.constant 1.000000e+00 : f32
    %404 = vector.broadcast %cst_85 : f32 to vector<2x32xf32>
    %405 = arith.addf %404, %403 : vector<2x32xf32>
    %406 = arith.divf %404, %405 : vector<2x32xf32>
    %407 = vector.extract_strided_slice %390 {offsets = [0, 64], sizes = [2, 32], strides = [1, 1]} : vector<2x96xf32> to vector<2x32xf32>
    %408 = vector.extract_strided_slice %328 {offsets = [0, 64], sizes = [2, 32], strides = [1, 1]} : vector<2x96xf32> to vector<2x32xf32>
    %409 = arith.mulf %398, %408 : vector<2x32xf32>
    %410 = arith.addf %407, %409 : vector<2x32xf32>
    %411 = math.tanh %410 : vector<2x32xf32>
    %cst_86 = arith.constant 1.000000e+00 : f32
    %412 = vector.broadcast %cst_86 : f32 to vector<2x32xf32>
    %413 = arith.subf %412, %406 : vector<2x32xf32>
    %414 = arith.mulf %413, %411 : vector<2x32xf32>
    %415 = arith.mulf %406, %318 : vector<2x32xf32>
    %416 = arith.addf %414, %415 : vector<2x32xf32>
    %417 = vector.extract_strided_slice %416 {offsets = [0, 0], sizes = [1, 32], strides = [1, 1]} : vector<2x32xf32> to vector<1x32xf32>
    %c3 = arith.constant 3 : index
    %c0_87 = arith.constant 0 : index
    %418 = vector.load %arg9[%c3, %c0_87] : memref<12x32xf32, #tpu.memory_space<vmem>>, vector<1x32xf32>
    tpu.vector_store %arg9[%c3, %c0_87], %417 {strides = array<i32>} : memref<12x32xf32, #tpu.memory_space<vmem>>, vector<1x32xf32>,
    %419 = vector.extract_strided_slice %416 {offsets = [1, 0], sizes = [1, 32], strides = [1, 1]} : vector<2x32xf32> to vector<1x32xf32>
    %c9 = arith.constant 9 : index
    %c0_88 = arith.constant 0 : index
    %420 = vector.load %arg9[%c9, %c0_88] : memref<12x32xf32, #tpu.memory_space<vmem>>, vector<1x32xf32>
    tpu.vector_store %arg9[%c9, %c0_88], %419 {strides = array<i32>} : memref<12x32xf32, #tpu.memory_space<vmem>>, vector<1x32xf32>,
    %421 = arith.truncf %416 : vector<2x32xf32> to vector<2x32xbf16>
    %cst_89 = arith.constant dense<0.000000e+00> : vector<2x128xf32>
    %422 = tpu.matmul %421, %0, %cst_89 {dimension_numbers = #tpu.dot_dimension_numbers<[1], [0], [0], [1], [0, 0, 1, 1], [], []>} : vector<2x32xbf16>, vector<32x128xbf16>, vector<2x128xf32> -> vector<2x128xf32>
    %423 = vector.extract_strided_slice %422 {offsets = [0, 0], sizes = [2, 32], strides = [1, 1]} : vector<2x128xf32> to vector<2x32xf32>
    %424 = vector.extract_strided_slice %422 {offsets = [0, 32], sizes = [2, 96], strides = [1, 1]} : vector<2x128xf32> to vector<2x96xf32>
    %425 = vector.broadcast %7 : vector<1x96xf32> to vector<2x96xf32>
    %426 = arith.addf %424, %425 : vector<2x96xf32>
    %427 = vector.shape_cast %423 : vector<2x32xf32> to vector<2x1x32xf32>
    %428 = vector.broadcast %427 : vector<2x1x32xf32> to vector<2x8x32xf32>
    %429 = arith.addf %428, %15 : vector<2x8x32xf32>
    %430 = math.tanh %429 : vector<2x8x32xf32>
    %431 = vector.shape_cast %8 : vector<1x32xf32> to vector<1x1x32xf32>
    %432 = vector.broadcast %431 : vector<1x1x32xf32> to vector<2x8x32xf32>
    %433 = arith.mulf %430, %432 : vector<2x8x32xf32>
    %cst_90 = arith.constant dense<0.000000e+00> : vector<2x8xf32>
    %434 = vector.multi_reduction <add>, %433, %cst_90 [2] : vector<2x8x32xf32> to vector<2x8xf32>
    %435 = vector.shape_cast %434 : vector<2x8xf32> to vector<2x8x1xf32>
    %436 = arith.addf %435, %12 : vector<2x8x1xf32>
    %cst_91 = arith.constant dense<0xFF800000> : vector<2x1xf32>
    %437 = vector.multi_reduction <maximumf>, %436, %cst_91 [1] : vector<2x8x1xf32> to vector<2x1xf32>
    %438 = vector.shape_cast %437 : vector<2x1xf32> to vector<2x1x1xf32>
    %439 = vector.broadcast %438 : vector<2x1x1xf32> to vector<2x8x1xf32>
    %440 = arith.subf %436, %439 : vector<2x8x1xf32>
    %441 = math.exp %440 : vector<2x8x1xf32>
    %cst_92 = arith.constant dense<0.000000e+00> : vector<2x1xf32>
    %442 = vector.multi_reduction <add>, %441, %cst_92 [1] : vector<2x8x1xf32> to vector<2x1xf32>
    %443 = vector.shape_cast %442 : vector<2x1xf32> to vector<2x1x1xf32>
    %444 = tpu.reciprocal %443 {approx = true} : vector<2x1x1xf32> -> vector<2x1x1xf32>
    %445 = vector.broadcast %444 : vector<2x1x1xf32> to vector<2x8x1xf32>
    %446 = arith.mulf %441, %445 : vector<2x8x1xf32>
    %447 = vector.broadcast %446 : vector<2x8x1xf32> to vector<2x8x32xf32>
    %448 = arith.mulf %447, %10 : vector<2x8x32xf32>
    %cst_93 = arith.constant dense<0.000000e+00> : vector<2x32xf32>
    %449 = vector.multi_reduction <add>, %448, %cst_93 [1] : vector<2x8x32xf32> to vector<2x32xf32>
    %450 = tpu.concatenate %449, %386 in 1 : vector<2x32xf32>, vector<2x32xf32> -> vector<2x64xf32>
    %451 = arith.truncf %450 : vector<2x64xf32> to vector<2x64xbf16>
    %cst_94 = arith.constant dense<0.000000e+00> : vector<2x256xf32>
    %452 = tpu.matmul %451, %4, %cst_94 {dimension_numbers = #tpu.dot_dimension_numbers<[1], [0], [0], [1], [0, 0, 1, 1], [], []>} : vector<2x64xbf16>, vector<64x256xbf16>, vector<2x256xf32> -> vector<2x256xf32>
    %453 = vector.extract_strided_slice %452 {offsets = [0, 0], sizes = [2, 96], strides = [1, 1]} : vector<2x256xf32> to vector<2x96xf32>
    %454 = vector.extract_strided_slice %24 {offsets = [8, 0], sizes = [2, 96], strides = [1, 1]} : vector<12x96xf32> to vector<2x96xf32>
    %455 = arith.addf %453, %454 : vector<2x96xf32>
    %456 = vector.extract_strided_slice %452 {offsets = [0, 128], sizes = [2, 96], strides = [1, 1]} : vector<2x256xf32> to vector<2x96xf32>
    %457 = vector.broadcast %5 : vector<1x96xf32> to vector<2x96xf32>
    %458 = arith.addf %456, %457 : vector<2x96xf32>
    %459 = vector.extract_strided_slice %455 {offsets = [0, 0], sizes = [2, 32], strides = [1, 1]} : vector<2x96xf32> to vector<2x32xf32>
    %460 = vector.extract_strided_slice %458 {offsets = [0, 0], sizes = [2, 32], strides = [1, 1]} : vector<2x96xf32> to vector<2x32xf32>
    %461 = arith.addf %459, %460 : vector<2x32xf32>
    %462 = arith.negf %461 : vector<2x32xf32>
    %463 = math.exp %462 : vector<2x32xf32>
    %cst_95 = arith.constant 1.000000e+00 : f32
    %464 = vector.broadcast %cst_95 : f32 to vector<2x32xf32>
    %465 = arith.addf %464, %463 : vector<2x32xf32>
    %466 = arith.divf %464, %465 : vector<2x32xf32>
    %467 = vector.extract_strided_slice %455 {offsets = [0, 32], sizes = [2, 32], strides = [1, 1]} : vector<2x96xf32> to vector<2x32xf32>
    %468 = vector.extract_strided_slice %458 {offsets = [0, 32], sizes = [2, 32], strides = [1, 1]} : vector<2x96xf32> to vector<2x32xf32>
    %469 = arith.addf %467, %468 : vector<2x32xf32>
    %470 = arith.negf %469 : vector<2x32xf32>
    %471 = math.exp %470 : vector<2x32xf32>
    %cst_96 = arith.constant 1.000000e+00 : f32
    %472 = vector.broadcast %cst_96 : f32 to vector<2x32xf32>
    %473 = arith.addf %472, %471 : vector<2x32xf32>
    %474 = arith.divf %472, %473 : vector<2x32xf32>
    %475 = vector.extract_strided_slice %455 {offsets = [0, 64], sizes = [2, 32], strides = [1, 1]} : vector<2x96xf32> to vector<2x32xf32>
    %476 = vector.extract_strided_slice %458 {offsets = [0, 64], sizes = [2, 32], strides = [1, 1]} : vector<2x96xf32> to vector<2x32xf32>
    %477 = arith.mulf %466, %476 : vector<2x32xf32>
    %478 = arith.addf %475, %477 : vector<2x32xf32>
    %479 = math.tanh %478 : vector<2x32xf32>
    %cst_97 = arith.constant 1.000000e+00 : f32
    %480 = vector.broadcast %cst_97 : f32 to vector<2x32xf32>
    %481 = arith.subf %480, %474 : vector<2x32xf32>
    %482 = arith.mulf %481, %479 : vector<2x32xf32>
    %483 = arith.mulf %474, %386 : vector<2x32xf32>
    %484 = arith.addf %482, %483 : vector<2x32xf32>
    %485 = arith.truncf %484 : vector<2x32xf32> to vector<2x32xbf16>
    %cst_98 = arith.constant dense<0.000000e+00> : vector<2x96xf32>
    %486 = tpu.matmul %485, %2, %cst_98 {dimension_numbers = #tpu.dot_dimension_numbers<[1], [0], [0], [1], [0, 0, 1, 1], [], []>} : vector<2x32xbf16>, vector<32x96xbf16>, vector<2x96xf32> -> vector<2x96xf32>
    %487 = vector.broadcast %6 : vector<1x96xf32> to vector<2x96xf32>
    %488 = arith.addf %486, %487 : vector<2x96xf32>
    %489 = vector.extract_strided_slice %488 {offsets = [0, 0], sizes = [2, 32], strides = [1, 1]} : vector<2x96xf32> to vector<2x32xf32>
    %490 = vector.extract_strided_slice %426 {offsets = [0, 0], sizes = [2, 32], strides = [1, 1]} : vector<2x96xf32> to vector<2x32xf32>
    %491 = arith.addf %489, %490 : vector<2x32xf32>
    %492 = arith.negf %491 : vector<2x32xf32>
    %493 = math.exp %492 : vector<2x32xf32>
    %cst_99 = arith.constant 1.000000e+00 : f32
    %494 = vector.broadcast %cst_99 : f32 to vector<2x32xf32>
    %495 = arith.addf %494, %493 : vector<2x32xf32>
    %496 = arith.divf %494, %495 : vector<2x32xf32>
    %497 = vector.extract_strided_slice %488 {offsets = [0, 32], sizes = [2, 32], strides = [1, 1]} : vector<2x96xf32> to vector<2x32xf32>
    %498 = vector.extract_strided_slice %426 {offsets = [0, 32], sizes = [2, 32], strides = [1, 1]} : vector<2x96xf32> to vector<2x32xf32>
    %499 = arith.addf %497, %498 : vector<2x32xf32>
    %500 = arith.negf %499 : vector<2x32xf32>
    %501 = math.exp %500 : vector<2x32xf32>
    %cst_100 = arith.constant 1.000000e+00 : f32
    %502 = vector.broadcast %cst_100 : f32 to vector<2x32xf32>
    %503 = arith.addf %502, %501 : vector<2x32xf32>
    %504 = arith.divf %502, %503 : vector<2x32xf32>
    %505 = vector.extract_strided_slice %488 {offsets = [0, 64], sizes = [2, 32], strides = [1, 1]} : vector<2x96xf32> to vector<2x32xf32>
    %506 = vector.extract_strided_slice %426 {offsets = [0, 64], sizes = [2, 32], strides = [1, 1]} : vector<2x96xf32> to vector<2x32xf32>
    %507 = arith.mulf %496, %506 : vector<2x32xf32>
    %508 = arith.addf %505, %507 : vector<2x32xf32>
    %509 = math.tanh %508 : vector<2x32xf32>
    %cst_101 = arith.constant 1.000000e+00 : f32
    %510 = vector.broadcast %cst_101 : f32 to vector<2x32xf32>
    %511 = arith.subf %510, %504 : vector<2x32xf32>
    %512 = arith.mulf %511, %509 : vector<2x32xf32>
    %513 = arith.mulf %504, %416 : vector<2x32xf32>
    %514 = arith.addf %512, %513 : vector<2x32xf32>
    %515 = vector.extract_strided_slice %514 {offsets = [0, 0], sizes = [1, 32], strides = [1, 1]} : vector<2x32xf32> to vector<1x32xf32>
    %c4_102 = arith.constant 4 : index
    %c0_103 = arith.constant 0 : index
    %516 = vector.load %arg9[%c4_102, %c0_103] : memref<12x32xf32, #tpu.memory_space<vmem>>, vector<1x32xf32>
    tpu.vector_store %arg9[%c4_102, %c0_103], %515 {strides = array<i32>} : memref<12x32xf32, #tpu.memory_space<vmem>>, vector<1x32xf32>,
    %517 = vector.extract_strided_slice %514 {offsets = [1, 0], sizes = [1, 32], strides = [1, 1]} : vector<2x32xf32> to vector<1x32xf32>
    %c10 = arith.constant 10 : index
    %c0_104 = arith.constant 0 : index
    %518 = vector.load %arg9[%c10, %c0_104] : memref<12x32xf32, #tpu.memory_space<vmem>>, vector<1x32xf32>
    tpu.vector_store %arg9[%c10, %c0_104], %517 {strides = array<i32>} : memref<12x32xf32, #tpu.memory_space<vmem>>, vector<1x32xf32>,
    %519 = arith.truncf %514 : vector<2x32xf32> to vector<2x32xbf16>
    %cst_105 = arith.constant dense<0.000000e+00> : vector<2x128xf32>
    %520 = tpu.matmul %519, %0, %cst_105 {dimension_numbers = #tpu.dot_dimension_numbers<[1], [0], [0], [1], [0, 0, 1, 1], [], []>} : vector<2x32xbf16>, vector<32x128xbf16>, vector<2x128xf32> -> vector<2x128xf32>
    %521 = vector.extract_strided_slice %520 {offsets = [0, 0], sizes = [2, 32], strides = [1, 1]} : vector<2x128xf32> to vector<2x32xf32>
    %522 = vector.extract_strided_slice %520 {offsets = [0, 32], sizes = [2, 96], strides = [1, 1]} : vector<2x128xf32> to vector<2x96xf32>
    %523 = vector.broadcast %7 : vector<1x96xf32> to vector<2x96xf32>
    %524 = arith.addf %522, %523 : vector<2x96xf32>
    %525 = vector.shape_cast %521 : vector<2x32xf32> to vector<2x1x32xf32>
    %526 = vector.broadcast %525 : vector<2x1x32xf32> to vector<2x8x32xf32>
    %527 = arith.addf %526, %15 : vector<2x8x32xf32>
    %528 = math.tanh %527 : vector<2x8x32xf32>
    %529 = vector.shape_cast %8 : vector<1x32xf32> to vector<1x1x32xf32>
    %530 = vector.broadcast %529 : vector<1x1x32xf32> to vector<2x8x32xf32>
    %531 = arith.mulf %528, %530 : vector<2x8x32xf32>
    %cst_106 = arith.constant dense<0.000000e+00> : vector<2x8xf32>
    %532 = vector.multi_reduction <add>, %531, %cst_106 [2] : vector<2x8x32xf32> to vector<2x8xf32>
    %533 = vector.shape_cast %532 : vector<2x8xf32> to vector<2x8x1xf32>
    %534 = arith.addf %533, %12 : vector<2x8x1xf32>
    %cst_107 = arith.constant dense<0xFF800000> : vector<2x1xf32>
    %535 = vector.multi_reduction <maximumf>, %534, %cst_107 [1] : vector<2x8x1xf32> to vector<2x1xf32>
    %536 = vector.shape_cast %535 : vector<2x1xf32> to vector<2x1x1xf32>
    %537 = vector.broadcast %536 : vector<2x1x1xf32> to vector<2x8x1xf32>
    %538 = arith.subf %534, %537 : vector<2x8x1xf32>
    %539 = math.exp %538 : vector<2x8x1xf32>
    %cst_108 = arith.constant dense<0.000000e+00> : vector<2x1xf32>
    %540 = vector.multi_reduction <add>, %539, %cst_108 [1] : vector<2x8x1xf32> to vector<2x1xf32>
    %541 = vector.shape_cast %540 : vector<2x1xf32> to vector<2x1x1xf32>
    %542 = tpu.reciprocal %541 {approx = true} : vector<2x1x1xf32> -> vector<2x1x1xf32>
    %543 = vector.broadcast %542 : vector<2x1x1xf32> to vector<2x8x1xf32>
    %544 = arith.mulf %539, %543 : vector<2x8x1xf32>
    %545 = vector.broadcast %544 : vector<2x8x1xf32> to vector<2x8x32xf32>
    %546 = arith.mulf %545, %10 : vector<2x8x32xf32>
    %cst_109 = arith.constant dense<0.000000e+00> : vector<2x32xf32>
    %547 = vector.multi_reduction <add>, %546, %cst_109 [1] : vector<2x8x32xf32> to vector<2x32xf32>
    %548 = tpu.concatenate %547, %484 in 1 : vector<2x32xf32>, vector<2x32xf32> -> vector<2x64xf32>
    %549 = arith.truncf %548 : vector<2x64xf32> to vector<2x64xbf16>
    %cst_110 = arith.constant dense<0.000000e+00> : vector<2x256xf32>
    %550 = tpu.matmul %549, %4, %cst_110 {dimension_numbers = #tpu.dot_dimension_numbers<[1], [0], [0], [1], [0, 0, 1, 1], [], []>} : vector<2x64xbf16>, vector<64x256xbf16>, vector<2x256xf32> -> vector<2x256xf32>
    %551 = vector.extract_strided_slice %550 {offsets = [0, 0], sizes = [2, 96], strides = [1, 1]} : vector<2x256xf32> to vector<2x96xf32>
    %552 = vector.extract_strided_slice %24 {offsets = [10, 0], sizes = [2, 96], strides = [1, 1]} : vector<12x96xf32> to vector<2x96xf32>
    %553 = arith.addf %551, %552 : vector<2x96xf32>
    %554 = vector.extract_strided_slice %550 {offsets = [0, 128], sizes = [2, 96], strides = [1, 1]} : vector<2x256xf32> to vector<2x96xf32>
    %555 = vector.broadcast %5 : vector<1x96xf32> to vector<2x96xf32>
    %556 = arith.addf %554, %555 : vector<2x96xf32>
    %557 = vector.extract_strided_slice %553 {offsets = [0, 0], sizes = [2, 32], strides = [1, 1]} : vector<2x96xf32> to vector<2x32xf32>
    %558 = vector.extract_strided_slice %556 {offsets = [0, 0], sizes = [2, 32], strides = [1, 1]} : vector<2x96xf32> to vector<2x32xf32>
    %559 = arith.addf %557, %558 : vector<2x32xf32>
    %560 = arith.negf %559 : vector<2x32xf32>
    %561 = math.exp %560 : vector<2x32xf32>
    %cst_111 = arith.constant 1.000000e+00 : f32
    %562 = vector.broadcast %cst_111 : f32 to vector<2x32xf32>
    %563 = arith.addf %562, %561 : vector<2x32xf32>
    %564 = arith.divf %562, %563 : vector<2x32xf32>
    %565 = vector.extract_strided_slice %553 {offsets = [0, 32], sizes = [2, 32], strides = [1, 1]} : vector<2x96xf32> to vector<2x32xf32>
    %566 = vector.extract_strided_slice %556 {offsets = [0, 32], sizes = [2, 32], strides = [1, 1]} : vector<2x96xf32> to vector<2x32xf32>
    %567 = arith.addf %565, %566 : vector<2x32xf32>
    %568 = arith.negf %567 : vector<2x32xf32>
    %569 = math.exp %568 : vector<2x32xf32>
    %cst_112 = arith.constant 1.000000e+00 : f32
    %570 = vector.broadcast %cst_112 : f32 to vector<2x32xf32>
    %571 = arith.addf %570, %569 : vector<2x32xf32>
    %572 = arith.divf %570, %571 : vector<2x32xf32>
    %573 = vector.extract_strided_slice %553 {offsets = [0, 64], sizes = [2, 32], strides = [1, 1]} : vector<2x96xf32> to vector<2x32xf32>
    %574 = vector.extract_strided_slice %556 {offsets = [0, 64], sizes = [2, 32], strides = [1, 1]} : vector<2x96xf32> to vector<2x32xf32>
    %575 = arith.mulf %564, %574 : vector<2x32xf32>
    %576 = arith.addf %573, %575 : vector<2x32xf32>
    %577 = math.tanh %576 : vector<2x32xf32>
    %cst_113 = arith.constant 1.000000e+00 : f32
    %578 = vector.broadcast %cst_113 : f32 to vector<2x32xf32>
    %579 = arith.subf %578, %572 : vector<2x32xf32>
    %580 = arith.mulf %579, %577 : vector<2x32xf32>
    %581 = arith.mulf %572, %484 : vector<2x32xf32>
    %582 = arith.addf %580, %581 : vector<2x32xf32>
    %583 = arith.truncf %582 : vector<2x32xf32> to vector<2x32xbf16>
    %cst_114 = arith.constant dense<0.000000e+00> : vector<2x96xf32>
    %584 = tpu.matmul %583, %2, %cst_114 {dimension_numbers = #tpu.dot_dimension_numbers<[1], [0], [0], [1], [0, 0, 1, 1], [], []>} : vector<2x32xbf16>, vector<32x96xbf16>, vector<2x96xf32> -> vector<2x96xf32>
    %585 = vector.broadcast %6 : vector<1x96xf32> to vector<2x96xf32>
    %586 = arith.addf %584, %585 : vector<2x96xf32>
    %587 = vector.extract_strided_slice %586 {offsets = [0, 0], sizes = [2, 32], strides = [1, 1]} : vector<2x96xf32> to vector<2x32xf32>
    %588 = vector.extract_strided_slice %524 {offsets = [0, 0], sizes = [2, 32], strides = [1, 1]} : vector<2x96xf32> to vector<2x32xf32>
    %589 = arith.addf %587, %588 : vector<2x32xf32>
    %590 = arith.negf %589 : vector<2x32xf32>
    %591 = math.exp %590 : vector<2x32xf32>
    %cst_115 = arith.constant 1.000000e+00 : f32
    %592 = vector.broadcast %cst_115 : f32 to vector<2x32xf32>
    %593 = arith.addf %592, %591 : vector<2x32xf32>
    %594 = arith.divf %592, %593 : vector<2x32xf32>
    %595 = vector.extract_strided_slice %586 {offsets = [0, 32], sizes = [2, 32], strides = [1, 1]} : vector<2x96xf32> to vector<2x32xf32>
    %596 = vector.extract_strided_slice %524 {offsets = [0, 32], sizes = [2, 32], strides = [1, 1]} : vector<2x96xf32> to vector<2x32xf32>
    %597 = arith.addf %595, %596 : vector<2x32xf32>
    %598 = arith.negf %597 : vector<2x32xf32>
    %599 = math.exp %598 : vector<2x32xf32>
    %cst_116 = arith.constant 1.000000e+00 : f32
    %600 = vector.broadcast %cst_116 : f32 to vector<2x32xf32>
    %601 = arith.addf %600, %599 : vector<2x32xf32>
    %602 = arith.divf %600, %601 : vector<2x32xf32>
    %603 = vector.extract_strided_slice %586 {offsets = [0, 64], sizes = [2, 32], strides = [1, 1]} : vector<2x96xf32> to vector<2x32xf32>
    %604 = vector.extract_strided_slice %524 {offsets = [0, 64], sizes = [2, 32], strides = [1, 1]} : vector<2x96xf32> to vector<2x32xf32>
    %605 = arith.mulf %594, %604 : vector<2x32xf32>
    %606 = arith.addf %603, %605 : vector<2x32xf32>
    %607 = math.tanh %606 : vector<2x32xf32>
    %cst_117 = arith.constant 1.000000e+00 : f32
    %608 = vector.broadcast %cst_117 : f32 to vector<2x32xf32>
    %609 = arith.subf %608, %602 : vector<2x32xf32>
    %610 = arith.mulf %609, %607 : vector<2x32xf32>
    %611 = arith.mulf %602, %514 : vector<2x32xf32>
    %612 = arith.addf %610, %611 : vector<2x32xf32>
    %613 = vector.extract_strided_slice %612 {offsets = [0, 0], sizes = [1, 32], strides = [1, 1]} : vector<2x32xf32> to vector<1x32xf32>
    %c5 = arith.constant 5 : index
    %c0_118 = arith.constant 0 : index
    %614 = vector.load %arg9[%c5, %c0_118] : memref<12x32xf32, #tpu.memory_space<vmem>>, vector<1x32xf32>
    tpu.vector_store %arg9[%c5, %c0_118], %613 {strides = array<i32>} : memref<12x32xf32, #tpu.memory_space<vmem>>, vector<1x32xf32>,
    %615 = vector.extract_strided_slice %612 {offsets = [1, 0], sizes = [1, 32], strides = [1, 1]} : vector<2x32xf32> to vector<1x32xf32>
    %c11 = arith.constant 11 : index
    %c0_119 = arith.constant 0 : index
    %616 = vector.load %arg9[%c11, %c0_119] : memref<12x32xf32, #tpu.memory_space<vmem>>, vector<1x32xf32>
    tpu.vector_store %arg9[%c11, %c0_119], %615 {strides = array<i32>} : memref<12x32xf32, #tpu.memory_space<vmem>>, vector<1x32xf32>,
    %c32_120 = arith.constant 32 : index
    %c0_121 = arith.constant 0 : index
    %617 = vector.load %arg4[%c32_120, %c0_121] : memref<160x128xbf16, #tpu.memory_space<vmem>>, vector<32x128xbf16>
    %c3_122 = arith.constant 3 : index
    %c0_123 = arith.constant 0 : index
    %618 = vector.load %arg6[%c3_122, %c0_123] : memref<8x128xf32, #tpu.memory_space<vmem>>, vector<1x128xf32>
    %c0_124 = arith.constant 0 : index
    %c0_125 = arith.constant 0 : index
    %619 = vector.load %arg9[%c0_124, %c0_125] : memref<12x32xf32, #tpu.memory_space<vmem>>, vector<12x32xf32>
    %620 = arith.truncf %619 : vector<12x32xf32> to vector<12x32xbf16>
    %cst_126 = arith.constant dense<0.000000e+00> : vector<12x128xf32>
    %621 = tpu.matmul %620, %617, %cst_126 {dimension_numbers = #tpu.dot_dimension_numbers<[1], [0], [0], [1], [0, 0, 1, 1], [], []>} : vector<12x32xbf16>, vector<32x128xbf16>, vector<12x128xf32> -> vector<12x128xf32>
    %622 = vector.broadcast %618 : vector<1x128xf32> to vector<12x128xf32>
    %623 = arith.addf %621, %622 : vector<12x128xf32>
    %cst_127 = arith.constant dense<0xFF800000> : vector<12xf32>
    %624 = vector.multi_reduction <maximumf>, %623, %cst_127 [1] : vector<12x128xf32> to vector<12xf32>
    %625 = vector.shape_cast %624 : vector<12xf32> to vector<12x1xf32>
    %626 = vector.broadcast %625 : vector<12x1xf32> to vector<12x128xf32>
    %627 = arith.subf %623, %626 : vector<12x128xf32>
    %628 = math.exp %627 : vector<12x128xf32>
    %cst_128 = arith.constant dense<0.000000e+00> : vector<12xf32>
    %629 = vector.multi_reduction <add>, %628, %cst_128 [1] : vector<12x128xf32> to vector<12xf32>
    %630 = vector.shape_cast %629 : vector<12xf32> to vector<12x1xf32>
    %631 = math.log %630 : vector<12x1xf32>
    %632 = arith.addf %625, %631 : vector<12x1xf32>
    %633 = vector.broadcast %632 : vector<12x1xf32> to vector<12x128xf32>
    %634 = arith.subf %623, %633 : vector<12x128xf32>
    %c0_129 = arith.constant 0 : index
    %c0_130 = arith.constant 0 : index
    %635 = vector.load %arg7[%c0_129, %c0_130] : memref<12x128xf32, #tpu.memory_space<vmem>>, vector<12x128xf32>
    tpu.vector_store %arg7[%c0_129, %c0_130], %634 {strides = array<i32>} : memref<12x128xf32, #tpu.memory_space<vmem>>, vector<12x128xf32>,
    %c0_131 = arith.constant 0 : index
    %c0_132 = arith.constant 0 : index
    %c0_133 = arith.constant 0 : index
    %636 = vector.load %arg8[%c0_131, %c0_132, %c0_133] : memref<2x2x32xf32, #tpu.memory_space<vmem>>, vector<1x2x32xf32>
    %637 = vector.shape_cast %636 : vector<1x2x32xf32> to vector<2x32xf32>
    %638 = vector.shape_cast %582 : vector<2x32xf32> to vector<1x2x32xf32>
    tpu.vector_store %arg8[%c0_131, %c0_132, %c0_133], %638 {strides = array<i32>} : memref<2x2x32xf32, #tpu.memory_space<vmem>>, vector<1x2x32xf32>,
    %c1_134 = arith.constant 1 : index
    %c0_135 = arith.constant 0 : index
    %c0_136 = arith.constant 0 : index
    %639 = vector.load %arg8[%c1_134, %c0_135, %c0_136] : memref<2x2x32xf32, #tpu.memory_space<vmem>>, vector<1x2x32xf32>
    %640 = vector.shape_cast %639 : vector<1x2x32xf32> to vector<2x32xf32>
    %641 = vector.shape_cast %612 : vector<2x32xf32> to vector<1x2x32xf32>
    tpu.vector_store %arg8[%c1_134, %c0_135, %c0_136], %641 {strides = array<i32>} : memref<2x2x32xf32, #tpu.memory_space<vmem>>, vector<1x2x32xf32>,
    return
  }
}

</mosaic_0001>

<llo_original>
// kernel: decoder_forward.1
$region0: #{decoder_forward.1}
  #allocation0 [shape = 'u32[]', space=smem, size = 0x4, offset = 0x4, fixed_abs, tag = 'smem constant byte address 0x4 - core index']
  #allocation1 [shape = 'u32[144,128]{1,0:T(1,128)}', space=vmem, size = 0x12000, scoped, tag = 'internal scratch']
  #allocation2 [shape = 'f32[12,32]{1,0:T(8,128)}', space=vmem, size = 0x2000, scoped, tag = 'scratch operand']
  %s0 = inlined_call_operand.vmem [shape: s32[12,1], index: 0, kind: input, shape index: {}]
  %s1 = inlined_call_operand.vmem [shape: f32[16,32], index: 1, kind: input, shape index: {}]
  %s2 = inlined_call_operand.vmem [shape: f32[16,1], index: 2, kind: input, shape index: {}]
  %s3 = inlined_call_operand.vmem [shape: f32[2,2,32], index: 3, kind: input, shape index: {}, may-alias: {3,8}]
  %s4 = inlined_call_operand.hbm [shape: bf16[160,128], index: 4, kind: input, shape index: {}]
  %s5 = inlined_call_operand.vmem [shape: bf16[64,256], index: 5, kind: input, shape index: {}]
  %s6 = inlined_call_operand.hbm [shape: f32[8,128], index: 6, kind: input, shape index: {}]
  %s7 = inlined_call_operand.vmem [shape: f32[12,128], index: 7, kind: output, shape index: {0}]
  %s8 = inlined_call_operand.vmem [shape: f32[2,2,32], index: 8, kind: output, shape index: {1}, may-alias: {3,8}]
  %9 = xla_tuple %s7, %s8
  %s10 = sld [smem:[#allocation0]]
  $region54: #{decoder_forward.1} parent=0
    _
  %s12 = ssub.s32 1, %s10
  %s13 = scalar_select 0, %s12, %s10
  $region1: #{decoder_forward.1} parent=0
    #allocation3 [shape = 'u8[40960]{0}', space=vmem, size = 0xa000, scoped, tag = 'input window, operand 4, single buffered']
    #allocation4 [shape = 's32[1]{0}', space=sflag, size = 0x4, scoped, tag = 'scoped memory for decoder_forward.1']
    #allocation5 [shape = 'u8[4096]{0}', space=vmem, size = 0x1000, scoped, tag = 'input window, operand 6, single buffered']
    #allocation6 [shape = 's32[1]{0}', space=sflag, size = 0x4, scoped, tag = 'scoped memory for decoder_forward.1']
    %14 = vsyncpa [#allocation4], 0
    %15 = vsyncpa [#allocation6], 0
    // Predicated region
    $region2: #{decoder_forward.1} parent=1 // pred_check
      _
    $region3: #{decoder_forward.1} parent=1 // pred_check_branch
      %17 = sbr.rel (0) target = $region5
    $region4: #{decoder_forward.1} parent=1 // pred_region
      _
    $region5: #{decoder_forward.1} parent=1 // pred_fallthru
      _
    // Predicated region
    $region6: #{decoder_forward.1} parent=1 // pred_check
      _
    $region7: #{decoder_forward.1} parent=1 // pred_check_branch
      %19 = sbr.rel (0) target = $region9
    $region8: #{decoder_forward.1} parent=1 // pred_region
      _
    $region9: #{decoder_forward.1} parent=1 // pred_fallthru
      _
    // Predicated region
    $region10: #{decoder_forward.1} parent=1 // pred_check
      _
    $region11: #{decoder_forward.1} parent=1 // pred_check_branch
      %21 = sbr.rel (0) target = $region13
    $region12: #{decoder_forward.1} parent=1 // pred_region
      _
    $region13: #{decoder_forward.1} parent=1 // pred_fallthru
      _
    // Predicated region
    $region14: #{decoder_forward.1} parent=1 // pred_check
      _
    $region15: #{decoder_forward.1} parent=1 // pred_check_branch
      %23 = sbr.rel (0) target = $region17
    $region16: #{decoder_forward.1} parent=1 // pred_region
      _
    $region17: #{decoder_forward.1} parent=1 // pred_fallthru
      _
    // Predicated region
    $region18: #{decoder_forward.1} parent=1 // pred_check
      _
    $region19: #{decoder_forward.1} parent=1 // pred_check_branch
      %25 = sbr.rel (0) target = $region21
    $region20: #{decoder_forward.1} parent=1 // pred_region
      %s27 = ssub.s32 1280, 1280
      %28 = vsyncadd [#allocation4], %s27
      %s29 = sshll.u32 [#allocation3], 4
      %s30 = int_to_ptr.vmem [resolvable:$true] %s29
      %35 = dma.hbm_to_vmem [thread:$0]  %s4, 1280, %s30, [#allocation4], 64, 64, 4
    $region21: #{decoder_forward.1} parent=1 // pred_fallthru
      _
    // Predicated region
    $region22: #{decoder_forward.1} parent=1 // pred_check
      _
    $region23: #{decoder_forward.1} parent=1 // pred_check_branch
      %37 = sbr.rel (0) target = $region25
    $region24: #{decoder_forward.1} parent=1 // pred_region
      _
    $region25: #{decoder_forward.1} parent=1 // pred_fallthru
      _
    // Predicated region
    $region26: #{decoder_forward.1} parent=1 // pred_check
      _
    $region27: #{decoder_forward.1} parent=1 // pred_check_branch
      %39 = sbr.rel (0) target = $region29
    $region28: #{decoder_forward.1} parent=1 // pred_region
      %s41 = ssub.s32 128, 128
      %42 = vsyncadd [#allocation6], %s41
      %s44 = sshll.u32 [#allocation5], 4
      %s45 = int_to_ptr.vmem [resolvable:$true] %s44
      %47 = dma.hbm_to_vmem [thread:$0]  %s6, 128, %s45, [#allocation6]
    $region29: #{decoder_forward.1} parent=1 // pred_fallthru
      _
    // Predicated region
    $region30: #{decoder_forward.1} parent=1 // pred_check
      _
    $region31: #{decoder_forward.1} parent=1 // pred_check_branch
      %49 = sbr.rel (0) target = $region33
    $region32: #{decoder_forward.1} parent=1 // pred_region
      %50 = dma.done [#allocation4], 1280
    $region33: #{decoder_forward.1} parent=1 // pred_fallthru
      _
    // Predicated region
    $region34: #{decoder_forward.1} parent=1 // pred_check
      _
    $region35: #{decoder_forward.1} parent=1 // pred_check_branch
      %52 = sbr.rel (0) target = $region37
    $region36: #{decoder_forward.1} parent=1 // pred_region
      %53 = dma.done [#allocation6], 128
    $region37: #{decoder_forward.1} parent=1 // pred_fallthru
      _
    %v55 = vld [vmem:[#allocation3] sm:$0xf]
    %v56 = vld [vmem:[#allocation3 + $0x4] sm:$0xf]
    %v57 = vld [vmem:[#allocation3 + $0x8] sm:$0xf]
    %v58 = vld [vmem:[#allocation3 + $0xc] sm:$0xf]
    %v59 = vld [vmem:[#allocation3 + $0x20] sm:$0xf]
    %v60 = vld [vmem:[#allocation3 + $0x24] sm:$0xf]
    %v61 = vld [vmem:[#allocation3 + $0x28] sm:$0xf]
    %v62 = vld [vmem:[#allocation3 + $0x2c] sm:$0xf]
    %v63 = vld [vmem:[#allocation3 + $0x30] sm:$0xf]
    %v64 = vld [vmem:[#allocation3 + $0x34] sm:$0xf]
    %v65 = vld [vmem:[#allocation3 + $0x38] sm:$0xf]
    %v66 = vld [vmem:[#allocation3 + $0x3c] sm:$0xf]
    %v67 = vld [vmem:[#allocation3 + $0x40] sm:$0xf]
    %v68 = vld [vmem:[#allocation3 + $0x44] sm:$0xf]
    %v69 = vld [vmem:[#allocation3 + $0x48] sm:$0xf]
    %v70 = vld [vmem:[#allocation3 + $0x4c] sm:$0xf]
    %v71 = vld [vmem:[%s5] sm:$0xff]
    %v72 = vld [vmem:[%s5 + $0x8] sm:$0xff]
    %v73 = vld [vmem:[%s5 + $0x10] sm:$0xff]
    %v74 = vld [vmem:[%s5 + $0x18] sm:$0xff]
    %v75 = vld [vmem:[%s5 + $0x20] sm:$0xff]
    %v76 = vld [vmem:[%s5 + $0x28] sm:$0xff]
    %v77 = vld [vmem:[%s5 + $0x30] sm:$0xff]
    %v78 = vld [vmem:[%s5 + $0x38] sm:$0xff]
    %v79 = vld [vmem:[#allocation5] sm:$0x1]
    %v80 = vld [vmem:[#allocation5 + $0x1] sm:$0x1]
    %v81 = vld [vmem:[#allocation5 + $0x2] sm:$0x1]
    %v82 = vld [vmem:[#allocation5 + $0x4] sm:$0x1]
    %v83 = vld [vmem:[%s1] sm:$0xff]
    %v84 = vld [vmem:[%s1 + $0x8] sm:$0xff]
    %v85 = vld [vmem:[%s2] sm:$0xff]
    %v86 = vld [vmem:[%s2 + $0x8] sm:$0xff]
    %v87 = vpack.c.bf16 %v84, %v83
    %v92 = vunpack.c.l.b16 %v59
    %v93 = vunpack.c.l.b16 %v60
    %v94 = vunpack.c.l.b16 %v61
    %v95 = vunpack.c.l.b16 %v62
    %v96 = vpack.c.b16 %v93, %v92
    %v97 = vpack.c.b16 %v95, %v94
    %vm100 = vcmask 261120
    %v102 = vsel %vm100, %v87, 0
    %104 = vmatprep.subr.bf16.mxu0 0
    %105 = vmatpush1.bf16.msra.mxu0 %v96
    %106 = vmatprep.subr.bf16.mxu0 0
    %107 = vmatpush1.bf16.msra.mxu0 %v97
    %108 = vmatprep.subr.bf16.mxu0 0
    %109 = vmatpush1.bf16.msra.mxu0 0
    %110 = vmatprep.subr.bf16.mxu0 0
    %111 = vmatpush1.bf16.msra.mxu0 0
    %112 = vmatprep.subr.bf16.mxu0 0
    %113 = vmatpush1.bf16.msra.mxu0 0
    %114 = vmatprep.subr.bf16.mxu0 0
    %115 = vmatpush1.bf16.msra.mxu0 0
    %116 = vmatprep.subr.bf16.mxu0 0
    %117 = vmatpush1.bf16.msra.mxu0 0
    %118 = vmatprep.subr.bf16.mxu0 0
    %119 = vmatpush1.bf16.msra.mxu0 0
    %120 = vmatprep.subr.bf16.mxu0 0
    %121 = vmatpush1.bf16.msra.mxu0 0
    %122 = vmatprep.subr.bf16.mxu0 0
    %123 = vmatpush1.bf16.msra.mxu0 0
    %124 = vmatprep.subr.bf16.mxu0 0
    %125 = vmatpush1.bf16.msra.mxu0 0
    %126 = vmatprep.subr.bf16.mxu0 0
    %127 = vmatpush1.bf16.msra.mxu0 0
    %128 = vmatprep.subr.bf16.mxu0 0
    %129 = vmatpush1.bf16.msra.mxu0 0
    %130 = vmatprep.subr.bf16.mxu0 0
    %131 = vmatpush1.bf16.msra.mxu0 0
    %132 = vmatprep.subr.bf16.mxu0 0
    %133 = vmatpush1.bf16.msra.mxu0 0
    %134 = vmatprep.subr.bf16.mxu0 0
    %135 = vmatpush1.bf16.msra.mxu0 0
    %136 = vmatprep.mubr.bf16.mxu0 0
    %137 = vmatmul.mubr.bf16.gmra.mrb[0].mxu0 %v102
    %v138 = vpop.f32.mrb[0].mxu0
    %v139 = vadd.f32 0.0, %v138
    %v140 = vpop.f32.mrb[0].mxu0
    %v141 = vpop.f32.mrb[0].mxu0
    %v142 = vadd.f32 0.0, %v141
    %v143 = vpop.f32.mrb[0].mxu0
    %144 = vdwg.mxu0
    %v145 = vld [vmem:[%s0] sm:$0xff]
    %v146 = vld [vmem:[%s0 + $0x8] sm:$0xf]
    %v147 = vlaneseq
    %v148 = vand.u32 %v147, 127
    %149 = vset.pattern.permute.xlu0 0
    %150 = vperm.xlu0 %149, %v145
    %v151 = vpop.permute.xlu0 %150
    %152 = vset.pattern.permute.xlu0 0
    %153 = vperm.xlu0 %152, %v146
    %v154 = vpop.permute.xlu0 %153
    %vm155 = vcmp.eq.s32.totalorder %v151, %v148
    %vm156 = vcmp.eq.s32.totalorder %v154, %v148
    %v157 = vsel %vm155, 1.0, 0.0
    %v158 = vsel %vm156, 1.0, 0.0
    %v159 = vpack.c.bf16 %v158, %v157
    %v168 = vunpack.c.l.b16 %v63
    %v169 = vunpack.c.l.b16 %v64
    %v170 = vunpack.c.l.b16 %v65
    %v171 = vunpack.c.l.b16 %v66
    %v172 = vunpack.c.l.b16 %v67
    %v173 = vunpack.c.l.b16 %v68
    %v174 = vunpack.c.l.b16 %v69
    %v175 = vunpack.c.l.b16 %v70
    %v176 = vpack.c.b16 %v169, %v168
    %v177 = vpack.c.b16 %v171, %v170
    %v178 = vpack.c.b16 %v173, %v172
    %v179 = vpack.c.b16 %v175, %v174
    %vm184 = vcmask 523264
    %v186 = vsel %vm184, %v159, 0
    %188 = vmatprep.subr.bf16.mxu0 0
    %189 = vmatpush1.bf16.msra.mxu0 %v176
    %190 = vmatprep.subr.bf16.mxu0 0
    %191 = vmatpush1.bf16.msra.mxu0 %v177
    %192 = vmatprep.subr.bf16.mxu0 0
    %193 = vmatpush1.bf16.msra.mxu0 %v178
    %194 = vmatprep.subr.bf16.mxu0 0
    %195 = vmatpush1.bf16.msra.mxu0 %v179
    %196 = vmatprep.subr.bf16.mxu0 0
    %197 = vmatpush1.bf16.msra.mxu0 0
    %198 = vmatprep.subr.bf16.mxu0 0
    %199 = vmatpush1.bf16.msra.mxu0 0
    %200 = vmatprep.subr.bf16.mxu0 0
    %201 = vmatpush1.bf16.msra.mxu0 0
    %202 = vmatprep.subr.bf16.mxu0 0
    %203 = vmatpush1.bf16.msra.mxu0 0
    %204 = vmatprep.subr.bf16.mxu0 0
    %205 = vmatpush1.bf16.msra.mxu0 0
    %206 = vmatprep.subr.bf16.mxu0 0
    %207 = vmatpush1.bf16.msra.mxu0 0
    %208 = vmatprep.subr.bf16.mxu0 0
    %209 = vmatpush1.bf16.msra.mxu0 0
    %210 = vmatprep.subr.bf16.mxu0 0
    %211 = vmatpush1.bf16.msra.mxu0 0
    %212 = vmatprep.subr.bf16.mxu0 0
    %213 = vmatpush1.bf16.msra.mxu0 0
    %214 = vmatprep.subr.bf16.mxu0 0
    %215 = vmatpush1.bf16.msra.mxu0 0
    %216 = vmatprep.subr.bf16.mxu0 0
    %217 = vmatpush1.bf16.msra.mxu0 0
    %218 = vmatprep.subr.bf16.mxu0 0
    %219 = vmatpush1.bf16.msra.mxu0 0
    %220 = vmatprep.mubr.bf16.mxu0 0
    %221 = vmatmul.mubr.bf16.gmra.mrb[0].mxu0 %v186
    %v222 = vpop.f32.mrb[0].mxu0
    %v223 = vadd.f32 0.0, %v222
    %v224 = vpop.f32.mrb[0].mxu0
    %v225 = vpop.f32.mrb[0].mxu0
    %v226 = vadd.f32 0.0, %v225
    %v227 = vpop.f32.mrb[0].mxu0
    %228 = vdwg.mxu0
    %v229 = vld [vmem:[%s3] sm:$0x3]
    %s230 = scalar_lea.vmem %s3, 2
    %v231 = vld [vmem:[%s230] sm:$0x3]
    %v232 = vpack.c.bf16 %v231, %v231
    %v237 = vunpack.c.l.b16 %v55
    %v238 = vunpack.c.l.b16 %v56
    %v239 = vunpack.c.l.b16 %v57
    %v240 = vunpack.c.l.b16 %v58
    %v241 = vpack.c.b16 %v238, %v237
    %v242 = vpack.c.b16 %v240, %v239
    %v246 = vsel %vm100, %v232, 0
    %248 = vmatprep.subr.bf16.mxu0 0
    %249 = vmatpush1.bf16.msra.mxu0 %v241
    %250 = vmatprep.subr.bf16.mxu0 0
    %251 = vmatpush1.bf16.msra.mxu0 %v242
    %252 = vmatprep.subr.bf16.mxu0 0
    %253 = vmatpush1.bf16.msra.mxu0 0
    %254 = vmatprep.subr.bf16.mxu0 0
    %255 = vmatpush1.bf16.msra.mxu0 0
    %256 = vmatprep.subr.bf16.mxu0 0
    %257 = vmatpush1.bf16.msra.mxu0 0
    %258 = vmatprep.subr.bf16.mxu0 0
    %259 = vmatpush1.bf16.msra.mxu0 0
    %260 = vmatprep.subr.bf16.mxu0 0
    %261 = vmatpush1.bf16.msra.mxu0 0
    %262 = vmatprep.subr.bf16.mxu0 0
    %263 = vmatpush1.bf16.msra.mxu0 0
    %264 = vmatprep.subr.bf16.mxu0 0
    %265 = vmatpush1.bf16.msra.mxu0 0
    %266 = vmatprep.subr.bf16.mxu0 0
    %267 = vmatpush1.bf16.msra.mxu0 0
    %268 = vmatprep.subr.bf16.mxu0 0
    %269 = vmatpush1.bf16.msra.mxu0 0
    %270 = vmatprep.subr.bf16.mxu0 0
    %271 = vmatpush1.bf16.msra.mxu0 0
    %272 = vmatprep.subr.bf16.mxu0 0
    %273 = vmatpush1.bf16.msra.mxu0 0
    %274 = vmatprep.subr.bf16.mxu0 0
    %275 = vmatpush1.bf16.msra.mxu0 0
    %276 = vmatprep.subr.bf16.mxu0 0
    %277 = vmatpush1.bf16.msra.mxu0 0
    %278 = vmatprep.subr.bf16.mxu0 0
    %279 = vmatpush1.bf16.msra.mxu0 0
    %280 = vmatprep.mubr.bf16.mxu0 0
    %281 = vmatmul.mubr.bf16.gmra.mrb[0].mxu0 %v246
    %v282 = vpop.f32.mrb[0].mxu0
    %v283 = vadd.f32 0.0, %v282
    %v284 = vpop.f32.mrb[0].mxu0
    %v285 = vpop.f32.mrb[0].mxu0
    %v286 = vpop.f32.mrb[0].mxu0
    %287 = vdwg.mxu0
    %v288 = vlaneseq
    %v289 = vshrl.u32 %v288, 7
    %v290 = vsub.s32 0, %v289
    %v291 = vrot.slane %v81, %v290
    %293 = vrot.lane.b32.xlu0 %v291, 32
    %v294 = vpop.permute.xlu0 %293
    %v296 = vadd.f32 %v283, %v294
    %v299 = vunpack.c.l.s4 1966171168
    %v300 = vunpack.c.0.s8 %v299
    %v301 = vlaneseq
    %v302 = vshrl.u32 %v301, 7
    %v303 = vsub.s32 %v300, %v302
    %v304 = vrot.slane %v283, %v303
    %v305 = vcombine.high %v304, %v304
    %v307 = vunpack.c.l.s4 1966171168
    %v308 = vunpack.c.0.s8 %v307
    %v309 = vlaneseq
    %v310 = vshrl.u32 %v309, 7
    %v311 = vsub.s32 %v308, %v310
    %v312 = vrot.slane %v304, %v311
    %v314 = vunpack.c.l.s4 1966171168
    %v315 = vunpack.c.0.s8 %v314
    %v316 = vlaneseq
    %v317 = vshrl.u32 %v316, 7
    %v318 = vsub.s32 %v315, %v317
    %v319 = vrot.slane %v305, %v318
    %v320 = vlaneseq
    %v321 = vshrl.u32 %v320, 7
    %v322 = vsub.s32 0, %v321
    %v323 = vrot.slane %v312, %v322
    %v324 = vlaneseq
    %v325 = vshrl.u32 %v324, 7
    %v326 = vsub.s32 0, %v325
    %v327 = vrot.slane %v319, %v326
    %v330 = vadd.f32 %v323, %v139
    %v331 = vadd.f32 %v327, %v142
    %v332 = vtanh.pop %v330
    %v333 = vtanh.pop %v331
    %v334 = vlaneseq
    %v335 = vshrl.u32 %v334, 7
    %v336 = vsub.s32 0, %v335
    %v337 = vrot.slane %v82, %v336
    %v338 = vmul.f32 %v332, %v337
    %v339 = vmul.f32 %v333, %v337
    %v340 = vsel %vm100, %v338, 0.0
    %341 = vadd.xlane.f32.xlu0 %v340
    %v342 = vpop.xlane.xlu0 %341
    %v343 = vsel %vm100, %v339, 0.0
    %344 = vadd.xlane.f32.xlu0 %v343
    %v345 = vpop.xlane.xlu0 %344
    %v346 = vadd.f32 %v342, %v85
    %v347 = vadd.f32 %v345, %v86
    %vm348 = vcmask 7168
    %v349 = vsel %vm348, %v346, -inf
    %v350 = vrot.slane %v349, 4
    %v351 = vmax.f32 %v349, %v350
    %v352 = vrot.slane %v351, 2
    %v353 = vmax.f32 %v351, %v352
    %v354 = vrot.slane %v353, 1
    %v355 = vmax.f32 %v353, %v354
    %v356 = vsel %vm348, %v347, -inf
    %v357 = vrot.slane %v356, 4
    %v358 = vmax.f32 %v356, %v357
    %v359 = vrot.slane %v358, 2
    %v360 = vmax.f32 %v358, %v359
    %v361 = vrot.slane %v360, 1
    %v362 = vmax.f32 %v360, %v361
    %v363 = vsub.f32 %v346, %v355
    %v364 = vsub.f32 %v347, %v362
    %v365 = vmul.f32 %v363, 1.442695
    %v366 = vpow.pop %v365
    %v367 = vmul.f32 %v364, 1.442695
    %v368 = vpow.pop %v367
    %v369 = vsel %vm348, %v366, 0.0
    %v370 = vrot.slane %v369, 4
    %v371 = vadd.f32 %v369, %v370
    %v372 = vrot.slane %v371, 2
    %v373 = vadd.f32 %v371, %v372
    %v374 = vrot.slane %v373, 1
    %v375 = vadd.f32 %v373, %v374
    %v376 = vsel %vm348, %v368, 0.0
    %v377 = vrot.slane %v376, 4
    %v378 = vadd.f32 %v376, %v377
    %v379 = vrot.slane %v378, 2
    %v380 = vadd.f32 %v378, %v379
    %v381 = vrot.slane %v380, 1
    %v382 = vadd.f32 %v380, %v381
    %v383 = vrcp.pop %v375
    %v384 = vrcp.pop %v382
    %v385 = vmul.f32 %v366, %v383
    %v386 = vmul.f32 %v368, %v384
    %388 = vset.pattern.permute.xlu0 0
    %389 = vperm.xlu0 %388, %v385
    %v390 = vpop.permute.xlu0 %389
    %393 = vset.pattern.permute.xlu0 0
    %394 = vperm.xlu0 %393, %v386
    %v395 = vpop.permute.xlu0 %394
    %v397 = vmul.f32 %v390, %v83
    %v398 = vmul.f32 %v395, %v84
    %v399 = vsel %vm100, %v397, 0.0
    %v400 = vrot.slane %v399, 4
    %v401 = vadd.f32 %v399, %v400
    %v402 = vrot.slane %v401, 2
    %v403 = vadd.f32 %v401, %v402
    %v404 = vrot.slane %v403, 1
    %v405 = vadd.f32 %v403, %v404
    %v406 = vsel %vm100, %v398, 0.0
    %v407 = vrot.slane %v406, 4
    %v408 = vadd.f32 %v406, %v407
    %v409 = vrot.slane %v408, 2
    %v410 = vadd.f32 %v408, %v409
    %v411 = vrot.slane %v410, 1
    %v412 = vadd.f32 %v410, %v411
    %vm415 = vcmask 1041409
    %v416 = vsel %vm415, %v412, %v405
    %419 = vrot.lane.b32.xlu0 %v229, 32
    %v420 = vpop.permute.xlu0 %419
    %v422 = vsel %vm100, %v416, %v420
    %v423 = vpack.c.bf16 %v422, %v422
    %v432 = vunpack.c.l.b16 %v71
    %v433 = vunpack.c.h.b16 %v71
    %v434 = vunpack.c.l.b16 %v72
    %v435 = vunpack.c.h.b16 %v72
    %v436 = vunpack.c.l.b16 %v73
    %v437 = vunpack.c.h.b16 %v73
    %v438 = vunpack.c.l.b16 %v74
    %v439 = vunpack.c.h.b16 %v74
    %v440 = vunpack.c.l.b16 %v75
    %v441 = vunpack.c.h.b16 %v75
    %v442 = vunpack.c.l.b16 %v76
    %v443 = vunpack.c.h.b16 %v76
    %v444 = vunpack.c.l.b16 %v77
    %v445 = vunpack.c.h.b16 %v77
    %v446 = vunpack.c.l.b16 %v78
    %v447 = vunpack.c.h.b16 %v78
    %v448 = vpack.c.b16 %v434, %v432
    %v449 = vpack.c.b16 %v435, %v433
    %v450 = vpack.c.b16 %v438, %v436
    %v451 = vpack.c.b16 %v439, %v437
    %v452 = vpack.c.b16 %v442, %v440
    %v453 = vpack.c.b16 %v443, %v441
    %v454 = vpack.c.b16 %v446, %v444
    %v455 = vpack.c.b16 %v447, %v445
    %v465 = vsel %vm184, %v423, 0
    %467 = vmatprep.subr.bf16.mxu0 %v449
    %468 = vmatpush1.bf16.msra.mxu0 %v448
    %469 = vmatprep.subr.bf16.mxu0 %v451
    %470 = vmatpush1.bf16.msra.mxu0 %v450
    %471 = vmatprep.subr.bf16.mxu0 %v453
    %472 = vmatpush1.bf16.msra.mxu0 %v452
    %473 = vmatprep.subr.bf16.mxu0 %v455
    %474 = vmatpush1.bf16.msra.mxu0 %v454
    %475 = vmatprep.subr.bf16.mxu0 0
    %476 = vmatpush1.bf16.msra.mxu0 0
    %477 = vmatprep.subr.bf16.mxu0 0
    %478 = vmatpush1.bf16.msra.mxu0 0
    %479 = vmatprep.subr.bf16.mxu0 0
    %480 = vmatpush1.bf16.msra.mxu0 0
    %481 = vmatprep.subr.bf16.mxu0 0
    %482 = vmatpush1.bf16.msra.mxu0 0
    %483 = vmatprep.subr.bf16.mxu0 0
    %484 = vmatpush1.bf16.msra.mxu0 0
    %485 = vmatprep.subr.bf16.mxu0 0
    %486 = vmatpush1.bf16.msra.mxu0 0
    %487 = vmatprep.subr.bf16.mxu0 0
    %488 = vmatpush1.bf16.msra.mxu0 0
    %489 = vmatprep.subr.bf16.mxu0 0
    %490 = vmatpush1.bf16.msra.mxu0 0
    %491 = vmatprep.subr.bf16.mxu0 0
    %492 = vmatpush1.bf16.msra.mxu0 0
    %493 = vmatprep.subr.bf16.mxu0 0
    %494 = vmatpush1.bf16.msra.mxu0 0
    %495 = vmatprep.subr.bf16.mxu0 0
    %496 = vmatpush1.bf16.msra.mxu0 0
    %497 = vmatprep.subr.bf16.mxu0 0
    %498 = vmatpush1.bf16.msra.mxu0 0
    %499 = vmatprep.mubr.bf16.mxu0 0
    %500 = vmatmul.mubr.bf16.gmra.mrb[0].mxu0 %v465
    %v501 = vpop.f32.mrb[0].mxu0
    %v502 = vadd.f32 0.0, %v501
    %v503 = vpop.f32.mrb[0].mxu0
    %v504 = vadd.f32 0.0, %v503
    %v505 = vpop.f32.mrb[0].mxu0
    %v506 = vpop.f32.mrb[0].mxu0
    %507 = vdwg.mxu0
    %v508 = vadd.f32 %v502, %v223
    %v509 = vlaneseq
    %v510 = vshrl.u32 %v509, 7
    %v511 = vsub.s32 0, %v510
    %v512 = vrot.slane %v79, %v511
    %v513 = vadd.f32 %v504, %v512
    %v514 = vadd.f32 %v508, %v513
    %v515 = vxor.u32 %v514, 2147483648
    %v516 = vmul.f32 %v515, 1.442695
    %v517 = vpow.pop %v516
    %v518 = vadd.f32 %v517, 1.0
    %v519 = vrcp.pop %v518
    %v520 = vmul.f32 1.0, %v519
    %522 = vrot.lane.b32.xlu0 %v513, 64
    %v523 = vpop.permute.xlu0 %522
    %v525 = vmul.f32 %v520, %v523
    %527 = vrot.lane.b32.xlu0 %v525, 64
    %v528 = vpop.permute.xlu0 %527
    %v530 = vadd.f32 %v508, %v528
    %v531 = vtanh.pop %v530
    %v532 = vsub.f32 1.0, %v520
    %534 = vrot.lane.b32.xlu0 %v531, 96
    %v535 = vpop.permute.xlu0 %534
    %v537 = vmul.f32 %v532, %v535
    %v538 = vmul.f32 %v520, %v420
    %v539 = vadd.f32 %v537, %v538
    %v540 = vpack.c.bf16 %v539, %v539
    %v541 = vlaneseq
    %v542 = vshrl.u32 %v541, 7
    %v543 = vsub.s32 0, %v542
    %v544 = vrot.slane %v80, %v543
    %546 = vrot.lane.b32.xlu0 %v540, 96
    %v547 = vpop.permute.xlu0 %546
    %548 = vrot.lane.b32.xlu0 %v96, 96
    %v549 = vpop.permute.xlu0 %548
    %550 = vrot.lane.b32.xlu0 %v97, 96
    %v551 = vpop.permute.xlu0 %550
    %v555 = vsel %vm100, %v547, 0
    %557 = vmatprep.subr.bf16.mxu0 0
    %558 = vmatpush1.bf16.msra.mxu0 %v549
    %559 = vmatprep.subr.bf16.mxu0 0
    %560 = vmatpush1.bf16.msra.mxu0 %v551
    %561 = vmatprep.subr.bf16.mxu0 0
    %562 = vmatpush1.bf16.msra.mxu0 0
    %563 = vmatprep.subr.bf16.mxu0 0
    %564 = vmatpush1.bf16.msra.mxu0 0
    %565 = vmatprep.subr.bf16.mxu0 0
    %566 = vmatpush1.bf16.msra.mxu0 0
    %567 = vmatprep.subr.bf16.mxu0 0
    %568 = vmatpush1.bf16.msra.mxu0 0
    %569 = vmatprep.subr.bf16.mxu0 0
    %570 = vmatpush1.bf16.msra.mxu0 0
    %571 = vmatprep.subr.bf16.mxu0 0
    %572 = vmatpush1.bf16.msra.mxu0 0
    %573 = vmatprep.subr.bf16.mxu0 0
    %574 = vmatpush1.bf16.msra.mxu0 0
    %575 = vmatprep.subr.bf16.mxu0 0
    %576 = vmatpush1.bf16.msra.mxu0 0
    %577 = vmatprep.subr.bf16.mxu0 0
    %578 = vmatpush1.bf16.msra.mxu0 0
    %579 = vmatprep.subr.bf16.mxu0 0
    %580 = vmatpush1.bf16.msra.mxu0 0
    %581 = vmatprep.subr.bf16.mxu0 0
    %582 = vmatpush1.bf16.msra.mxu0 0
    %583 = vmatprep.subr.bf16.mxu0 0
    %584 = vmatpush1.bf16.msra.mxu0 0
    %585 = vmatprep.subr.bf16.mxu0 0
    %586 = vmatpush1.bf16.msra.mxu0 0
    %587 = vmatprep.subr.bf16.mxu0 0
    %588 = vmatpush1.bf16.msra.mxu0 0
    %589 = vmatprep.mubr.bf16.mxu0 0
    %590 = vmatmul.mubr.bf16.gmra.mrb[0].mxu0 %v555
    %v591 = vpop.f32.mrb[0].mxu0
    %v592 = vadd.f32 %v544, %v591
    %v593 = vpop.f32.mrb[0].mxu0
    %v594 = vpop.f32.mrb[0].mxu0
    %v595 = vpop.f32.mrb[0].mxu0
    %596 = vdwg.mxu0
    %598 = vrot.lane.b32.xlu0 %v296, 96
    %v599 = vpop.permute.xlu0 %598
    %v601 = vadd.f32 %v592, %v599
    %v602 = vxor.u32 %v601, 2147483648
    %v603 = vmul.f32 %v602, 1.442695
    %v604 = vpow.pop %v603
    %v605 = vadd.f32 %v604, 1.0
    %v606 = vrcp.pop %v605
    %v607 = vmul.f32 1.0, %v606
    %608 = vrot.lane.b32.xlu0 %v296, 32
    %v609 = vpop.permute.xlu0 %608
    %v611 = vmul.f32 %v607, %v609
    %613 = vrot.lane.b32.xlu0 %v611, 64
    %v614 = vpop.permute.xlu0 %613
    %v616 = vadd.f32 %v592, %v614
    %v617 = vtanh.pop %v616
    %v618 = vsub.f32 1.0, %v607
    %620 = vrot.lane.b32.xlu0 %v617, 96
    %v621 = vpop.permute.xlu0 %620
    %v623 = vmul.f32 %v618, %v621
    %625 = vrot.lane.b32.xlu0 %v231, 32
    %v626 = vpop.permute.xlu0 %625
    %v628 = vmul.f32 %v607, %v626
    %v629 = vadd.f32 %v623, %v628
    %631 = vrot.lane.b32.xlu0 %v629, 96
    %v632 = vpop.permute.xlu0 %631
    %vm634 = vcmask 253952
    %635 = vst.msk [vmem:[#allocation2] sm:$0x1] %vm634, %v632
    %vm636 = vcmask 254977
    %637 = vst.msk [vmem:[#allocation2 + $0x5] sm:$0x2] %vm636, %v632
    %v638 = vpack.c.bf16 %v629, %v629
    %640 = vrot.lane.b32.xlu0 %v638, 96
    %v641 = vpop.permute.xlu0 %640
    %v643 = vsel %vm100, %v641, 0
    %645 = vmatprep.subr.bf16.mxu0 0
    %646 = vmatpush1.bf16.msra.mxu0 %v241
    %647 = vmatprep.subr.bf16.mxu0 0
    %648 = vmatpush1.bf16.msra.mxu0 %v242
    %649 = vmatprep.subr.bf16.mxu0 0
    %650 = vmatpush1.bf16.msra.mxu0 0
    %651 = vmatprep.subr.bf16.mxu0 0
    %652 = vmatpush1.bf16.msra.mxu0 0
    %653 = vmatprep.subr.bf16.mxu0 0
    %654 = vmatpush1.bf16.msra.mxu0 0
    %655 = vmatprep.subr.bf16.mxu0 0
    %656 = vmatpush1.bf16.msra.mxu0 0
    %657 = vmatprep.subr.bf16.mxu0 0
    %658 = vmatpush1.bf16.msra.mxu0 0
    %659 = vmatprep.subr.bf16.mxu0 0
    %660 = vmatpush1.bf16.msra.mxu0 0
    %661 = vmatprep.subr.bf16.mxu0 0
    %662 = vmatpush1.bf16.msra.mxu0 0
    %663 = vmatprep.subr.bf16.mxu0 0
    %664 = vmatpush1.bf16.msra.mxu0 0
    %665 = vmatprep.subr.bf16.mxu0 0
    %666 = vmatpush1.bf16.msra.mxu0 0
    %667 = vmatprep.subr.bf16.mxu0 0
    %668 = vmatpush1.bf16.msra.mxu0 0
    %669 = vmatprep.subr.bf16.mxu0 0
    %670 = vmatpush1.bf16.msra.mxu0 0
    %671 = vmatprep.subr.bf16.mxu0 0
    %672 = vmatpush1.bf16.msra.mxu0 0
    %673 = vmatprep.subr.bf16.mxu0 0
    %674 = vmatpush1.bf16.msra.mxu0 0
    %675 = vmatprep.subr.bf16.mxu0 0
    %676 = vmatpush1.bf16.msra.mxu0 0
    %677 = vmatprep.mubr.bf16.mxu0 0
    %678 = vmatmul.mubr.bf16.gmra.mrb[0].mxu0 %v643
    %v679 = vpop.f32.mrb[0].mxu0
    %v680 = vadd.f32 0.0, %v679
    %v681 = vpop.f32.mrb[0].mxu0
    %v682 = vpop.f32.mrb[0].mxu0
    %v683 = vpop.f32.mrb[0].mxu0
    %684 = vdwg.mxu0
    %v685 = vadd.f32 %v680, %v294
    %v688 = vunpack.c.l.s4 1966171168
    %v689 = vunpack.c.0.s8 %v688
    %v690 = vlaneseq
    %v691 = vshrl.u32 %v690, 7
    %v692 = vsub.s32 %v689, %v691
    %v693 = vrot.slane %v680, %v692
    %v694 = vcombine.high %v693, %v693
    %v696 = vunpack.c.l.s4 1966171168
    %v697 = vunpack.c.0.s8 %v696
    %v698 = vlaneseq
    %v699 = vshrl.u32 %v698, 7
    %v700 = vsub.s32 %v697, %v699
    %v701 = vrot.slane %v693, %v700
    %v703 = vunpack.c.l.s4 1966171168
    %v704 = vunpack.c.0.s8 %v703
    %v705 = vlaneseq
    %v706 = vshrl.u32 %v705, 7
    %v707 = vsub.s32 %v704, %v706
    %v708 = vrot.slane %v694, %v707
    %v709 = vlaneseq
    %v710 = vshrl.u32 %v709, 7
    %v711 = vsub.s32 0, %v710
    %v712 = vrot.slane %v701, %v711
    %v713 = vlaneseq
    %v714 = vshrl.u32 %v713, 7
    %v715 = vsub.s32 0, %v714
    %v716 = vrot.slane %v708, %v715
    %v719 = vadd.f32 %v712, %v139
    %v720 = vadd.f32 %v716, %v142
    %v721 = vtanh.pop %v719
    %v722 = vtanh.pop %v720
    %v723 = vmul.f32 %v721, %v337
    %v724 = vmul.f32 %v722, %v337
    %v725 = vsel %vm100, %v723, 0.0
    %726 = vadd.xlane.f32.xlu0 %v725
    %v727 = vpop.xlane.xlu0 %726
    %v728 = vsel %vm100, %v724, 0.0
    %729 = vadd.xlane.f32.xlu0 %v728
    %v730 = vpop.xlane.xlu0 %729
    %v731 = vadd.f32 %v727, %v85
    %v732 = vadd.f32 %v730, %v86
    %v733 = vsel %vm348, %v731, -inf
    %v734 = vrot.slane %v733, 4
    %v735 = vmax.f32 %v733, %v734
    %v736 = vrot.slane %v735, 2
    %v737 = vmax.f32 %v735, %v736
    %v738 = vrot.slane %v737, 1
    %v739 = vmax.f32 %v737, %v738
    %v740 = vsel %vm348, %v732, -inf
    %v741 = vrot.slane %v740, 4
    %v742 = vmax.f32 %v740, %v741
    %v743 = vrot.slane %v742, 2
    %v744 = vmax.f32 %v742, %v743
    %v745 = vrot.slane %v744, 1
    %v746 = vmax.f32 %v744, %v745
    %v747 = vsub.f32 %v731, %v739
    %v748 = vsub.f32 %v732, %v746
    %v749 = vmul.f32 %v747, 1.442695
    %v750 = vpow.pop %v749
    %v751 = vmul.f32 %v748, 1.442695
    %v752 = vpow.pop %v751
    %v753 = vsel %vm348, %v750, 0.0
    %v754 = vrot.slane %v753, 4
    %v755 = vadd.f32 %v753, %v754
    %v756 = vrot.slane %v755, 2
    %v757 = vadd.f32 %v755, %v756
    %v758 = vrot.slane %v757, 1
    %v759 = vadd.f32 %v757, %v758
    %v760 = vsel %vm348, %v752, 0.0
    %v761 = vrot.slane %v760, 4
    %v762 = vadd.f32 %v760, %v761
    %v763 = vrot.slane %v762, 2
    %v764 = vadd.f32 %v762, %v763
    %v765 = vrot.slane %v764, 1
    %v766 = vadd.f32 %v764, %v765
    %v767 = vrcp.pop %v759
    %v768 = vrcp.pop %v766
    %v769 = vmul.f32 %v750, %v767
    %v770 = vmul.f32 %v752, %v768
    %772 = vset.pattern.permute.xlu0 0
    %773 = vperm.xlu0 %772, %v769
    %v774 = vpop.permute.xlu0 %773
    %777 = vset.pattern.permute.xlu0 0
    %778 = vperm.xlu0 %777, %v770
    %v779 = vpop.permute.xlu0 %778
    %v781 = vmul.f32 %v774, %v83
    %v782 = vmul.f32 %v779, %v84
    %v783 = vsel %vm100, %v781, 0.0
    %v784 = vrot.slane %v783, 4
    %v785 = vadd.f32 %v783, %v784
    %v786 = vrot.slane %v785, 2
    %v787 = vadd.f32 %v785, %v786
    %v788 = vrot.slane %v787, 1
    %v789 = vadd.f32 %v787, %v788
    %v790 = vsel %vm100, %v782, 0.0
    %v791 = vrot.slane %v790, 4
    %v792 = vadd.f32 %v790, %v791
    %v793 = vrot.slane %v792, 2
    %v794 = vadd.f32 %v792, %v793
    %v795 = vrot.slane %v794, 1
    %v796 = vadd.f32 %v794, %v795
    %v799 = vsel %vm415, %v796, %v789
    %v801 = vsel %vm100, %v799, %v539
    %v802 = vpack.c.bf16 %v801, %v801
    %v804 = vsel %vm184, %v802, 0
    %806 = vmatprep.subr.bf16.mxu0 %v449
    %807 = vmatpush1.bf16.msra.mxu0 %v448
    %808 = vmatprep.subr.bf16.mxu0 %v451
    %809 = vmatpush1.bf16.msra.mxu0 %v450
    %810 = vmatprep.subr.bf16.mxu0 %v453
    %811 = vmatpush1.bf16.msra.mxu0 %v452
    %812 = vmatprep.subr.bf16.mxu0 %v455
    %813 = vmatpush1.bf16.msra.mxu0 %v454
    %814 = vmatprep.subr.bf16.mxu0 0
    %815 = vmatpush1.bf16.msra.mxu0 0
    %816 = vmatprep.subr.bf16.mxu0 0
    %817 = vmatpush1.bf16.msra.mxu0 0
    %818 = vmatprep.subr.bf16.mxu0 0
    %819 = vmatpush1.bf16.msra.mxu0 0
    %820 = vmatprep.subr.bf16.mxu0 0
    %821 = vmatpush1.bf16.msra.mxu0 0
    %822 = vmatprep.subr.bf16.mxu0 0
    %823 = vmatpush1.bf16.msra.mxu0 0
    %824 = vmatprep.subr.bf16.mxu0 0
    %825 = vmatpush1.bf16.msra.mxu0 0
    %826 = vmatprep.subr.bf16.mxu0 0
    %827 = vmatpush1.bf16.msra.mxu0 0
    %828 = vmatprep.subr.bf16.mxu0 0
    %829 = vmatpush1.bf16.msra.mxu0 0
    %830 = vmatprep.subr.bf16.mxu0 0
    %831 = vmatpush1.bf16.msra.mxu0 0
    %832 = vmatprep.subr.bf16.mxu0 0
    %833 = vmatpush1.bf16.msra.mxu0 0
    %834 = vmatprep.subr.bf16.mxu0 0
    %835 = vmatpush1.bf16.msra.mxu0 0
    %836 = vmatprep.subr.bf16.mxu0 0
    %837 = vmatpush1.bf16.msra.mxu0 0
    %838 = vmatprep.mubr.bf16.mxu0 0
    %839 = vmatmul.mubr.bf16.gmra.mrb[0].mxu0 %v804
    %v840 = vpop.f32.mrb[0].mxu0
    %v841 = vadd.f32 0.0, %v840
    %v842 = vpop.f32.mrb[0].mxu0
    %v843 = vadd.f32 0.0, %v842
    %v844 = vpop.f32.mrb[0].mxu0
    %v845 = vpop.f32.mrb[0].mxu0
    %846 = vdwg.mxu0
    %v848 = vrot.slane %v223, 2
    %v850 = vadd.f32 %v841, %v848
    %v851 = vadd.f32 %v843, %v512
    %v852 = vadd.f32 %v850, %v851
    %v853 = vxor.u32 %v852, 2147483648
    %v854 = vmul.f32 %v853, 1.442695
    %v855 = vpow.pop %v854
    %v856 = vadd.f32 %v855, 1.0
    %v857 = vrcp.pop %v856
    %v858 = vmul.f32 1.0, %v857
    %860 = vrot.lane.b32.xlu0 %v851, 64
    %v861 = vpop.permute.xlu0 %860
    %v863 = vmul.f32 %v858, %v861
    %865 = vrot.lane.b32.xlu0 %v863, 64
    %v866 = vpop.permute.xlu0 %865
    %v868 = vadd.f32 %v850, %v866
    %v869 = vtanh.pop %v868
    %v870 = vsub.f32 1.0, %v858
    %872 = vrot.lane.b32.xlu0 %v869, 96
    %v873 = vpop.permute.xlu0 %872
    %v875 = vmul.f32 %v870, %v873
    %v876 = vmul.f32 %v858, %v539
    %v877 = vadd.f32 %v875, %v876
    %v878 = vpack.c.bf16 %v877, %v877
    %880 = vrot.lane.b32.xlu0 %v878, 96
    %v881 = vpop.permute.xlu0 %880
    %v883 = vsel %vm100, %v881, 0
    %885 = vmatprep.subr.bf16.mxu0 0
    %886 = vmatpush1.bf16.msra.mxu0 %v549
    %887 = vmatprep.subr.bf16.mxu0 0
    %888 = vmatpush1.bf16.msra.mxu0 %v551
    %889 = vmatprep.subr.bf16.mxu0 0
    %890 = vmatpush1.bf16.msra.mxu0 0
    %891 = vmatprep.subr.bf16.mxu0 0
    %892 = vmatpush1.bf16.msra.mxu0 0
    %893 = vmatprep.subr.bf16.mxu0 0
    %894 = vmatpush1.bf16.msra.mxu0 0
    %895 = vmatprep.subr.bf16.mxu0 0
    %896 = vmatpush1.bf16.msra.mxu0 0
    %897 = vmatprep.subr.bf16.mxu0 0
    %898 = vmatpush1.bf16.msra.mxu0 0
    %899 = vmatprep.subr.bf16.mxu0 0
    %900 = vmatpush1.bf16.msra.mxu0 0
    %901 = vmatprep.subr.bf16.mxu0 0
    %902 = vmatpush1.bf16.msra.mxu0 0
    %903 = vmatprep.subr.bf16.mxu0 0
    %904 = vmatpush1.bf16.msra.mxu0 0
    %905 = vmatprep.subr.bf16.mxu0 0
    %906 = vmatpush1.bf16.msra.mxu0 0
    %907 = vmatprep.subr.bf16.mxu0 0
    %908 = vmatpush1.bf16.msra.mxu0 0
    %909 = vmatprep.subr.bf16.mxu0 0
    %910 = vmatpush1.bf16.msra.mxu0 0
    %911 = vmatprep.subr.bf16.mxu0 0
    %912 = vmatpush1.bf16.msra.mxu0 0
    %913 = vmatprep.subr.bf16.mxu0 0
    %914 = vmatpush1.bf16.msra.mxu0 0
    %915 = vmatprep.subr.bf16.mxu0 0
    %916 = vmatpush1.bf16.msra.mxu0 0
    %917 = vmatprep.mubr.bf16.mxu0 0
    %918 = vmatmul.mubr.bf16.gmra.mrb[0].mxu0 %v883
    %v919 = vpop.f32.mrb[0].mxu0
    %v920 = vadd.f32 %v544, %v919
    %v921 = vpop.f32.mrb[0].mxu0
    %v922 = vpop.f32.mrb[0].mxu0
    %v923 = vpop.f32.mrb[0].mxu0
    %924 = vdwg.mxu0
    %926 = vrot.lane.b32.xlu0 %v685, 96
    %v927 = vpop.permute.xlu0 %926
    %v929 = vadd.f32 %v920, %v927
    %v930 = vxor.u32 %v929, 2147483648
    %v931 = vmul.f32 %v930, 1.442695
    %v932 = vpow.pop %v931
    %v933 = vadd.f32 %v932, 1.0
    %v934 = vrcp.pop %v933
    %v935 = vmul.f32 1.0, %v934
    %936 = vrot.lane.b32.xlu0 %v685, 32
    %v937 = vpop.permute.xlu0 %936
    %v939 = vmul.f32 %v935, %v937
    %941 = vrot.lane.b32.xlu0 %v939, 64
    %v942 = vpop.permute.xlu0 %941
    %v944 = vadd.f32 %v920, %v942
    %v945 = vtanh.pop %v944
    %v946 = vsub.f32 1.0, %v935
    %948 = vrot.lane.b32.xlu0 %v945, 96
    %v949 = vpop.permute.xlu0 %948
    %v951 = vmul.f32 %v946, %v949
    %v952 = vmul.f32 %v935, %v629
    %v953 = vadd.f32 %v951, %v952
    %955 = vrot.lane.b32.xlu0 %v953, 96
    %v956 = vpop.permute.xlu0 %955
    %958 = vst.msk [vmem:[#allocation2 + $0x1] sm:$0x1] %vm634, %v956
    %959 = vst.msk [vmem:[#allocation2 + $0x6] sm:$0x2] %vm636, %v956
    %v960 = vpack.c.bf16 %v953, %v953
    %962 = vrot.lane.b32.xlu0 %v960, 96
    %v963 = vpop.permute.xlu0 %962
    %v965 = vsel %vm100, %v963, 0
    %967 = vmatprep.subr.bf16.mxu0 0
    %968 = vmatpush1.bf16.msra.mxu0 %v241
    %969 = vmatprep.subr.bf16.mxu0 0
    %970 = vmatpush1.bf16.msra.mxu0 %v242
    %971 = vmatprep.subr.bf16.mxu0 0
    %972 = vmatpush1.bf16.msra.mxu0 0
    %973 = vmatprep.subr.bf16.mxu0 0
    %974 = vmatpush1.bf16.msra.mxu0 0
    %975 = vmatprep.subr.bf16.mxu0 0
    %976 = vmatpush1.bf16.msra.mxu0 0
    %977 = vmatprep.subr.bf16.mxu0 0
    %978 = vmatpush1.bf16.msra.mxu0 0
    %979 = vmatprep.subr.bf16.mxu0 0
    %980 = vmatpush1.bf16.msra.mxu0 0
    %981 = vmatprep.subr.bf16.mxu0 0
    %982 = vmatpush1.bf16.msra.mxu0 0
    %983 = vmatprep.subr.bf16.mxu0 0
    %984 = vmatpush1.bf16.msra.mxu0 0
    %985 = vmatprep.subr.bf16.mxu0 0
    %986 = vmatpush1.bf16.msra.mxu0 0
    %987 = vmatprep.subr.bf16.mxu0 0
    %988 = vmatpush1.bf16.msra.mxu0 0
    %989 = vmatprep.subr.bf16.mxu0 0
    %990 = vmatpush1.bf16.msra.mxu0 0
    %991 = vmatprep.subr.bf16.mxu0 0
    %992 = vmatpush1.bf16.msra.mxu0 0
    %993 = vmatprep.subr.bf16.mxu0 0
    %994 = vmatpush1.bf16.msra.mxu0 0
    %995 = vmatprep.subr.bf16.mxu0 0
    %996 = vmatpush1.bf16.msra.mxu0 0
    %997 = vmatprep.subr.bf16.mxu0 0
    %998 = vmatpush1.bf16.msra.mxu0 0
    %999 = vmatprep.mubr.bf16.mxu0 0
    %1000 = vmatmul.mubr.bf16.gmra.mrb[0].mxu0 %v965
    %v1001 = vpop.f32.mrb[0].mxu0
    %v1002 = vadd.f32 0.0, %v1001
    %v1003 = vpop.f32.mrb[0].mxu0
    %v1004 = vpop.f32.mrb[0].mxu0
    %v1005 = vpop.f32.mrb[0].mxu0
    %1006 = vdwg.mxu0
    %v1007 = vadd.f32 %v1002, %v294
    %v1010 = vunpack.c.l.s4 1966171168
    %v1011 = vunpack.c.0.s8 %v1010
    %v1012 = vlaneseq
    %v1013 = vshrl.u32 %v1012, 7
    %v1014 = vsub.s32 %v1011, %v1013
    %v1015 = vrot.slane %v1002, %v1014
    %v1016 = vcombine.high %v1015, %v1015
    %v1018 = vunpack.c.l.s4 1966171168
    %v1019 = vunpack.c.0.s8 %v1018
    %v1020 = vlaneseq
    %v1021 = vshrl.u32 %v1020, 7
    %v1022 = vsub.s32 %v1019, %v1021
    %v1023 = vrot.slane %v1015, %v1022
    %v1025 = vunpack.c.l.s4 1966171168
    %v1026 = vunpack.c.0.s8 %v1025
    %v1027 = vlaneseq
    %v1028 = vshrl.u32 %v1027, 7
    %v1029 = vsub.s32 %v1026, %v1028
    %v1030 = vrot.slane %v1016, %v1029
    %v1031 = vlaneseq
    %v1032 = vshrl.u32 %v1031, 7
    %v1033 = vsub.s32 0, %v1032
    %v1034 = vrot.slane %v1023, %v1033
    %v1035 = vlaneseq
    %v1036 = vshrl.u32 %v1035, 7
    %v1037 = vsub.s32 0, %v1036
    %v1038 = vrot.slane %v1030, %v1037
    %v1041 = vadd.f32 %v1034, %v139
    %v1042 = vadd.f32 %v1038, %v142
    %v1043 = vtanh.pop %v1041
    %v1044 = vtanh.pop %v1042
    %v1045 = vmul.f32 %v1043, %v337
    %v1046 = vmul.f32 %v1044, %v337
    %v1047 = vsel %vm100, %v1045, 0.0
    %1048 = vadd.xlane.f32.xlu0 %v1047
    %v1049 = vpop.xlane.xlu0 %1048
    %v1050 = vsel %vm100, %v1046, 0.0
    %1051 = vadd.xlane.f32.xlu0 %v1050
    %v1052 = vpop.xlane.xlu0 %1051
    %v1053 = vadd.f32 %v1049, %v85
    %v1054 = vadd.f32 %v1052, %v86
    %v1055 = vsel %vm348, %v1053, -inf
    %v1056 = vrot.slane %v1055, 4
    %v1057 = vmax.f32 %v1055, %v1056
    %v1058 = vrot.slane %v1057, 2
    %v1059 = vmax.f32 %v1057, %v1058
    %v1060 = vrot.slane %v1059, 1
    %v1061 = vmax.f32 %v1059, %v1060
    %v1062 = vsel %vm348, %v1054, -inf
    %v1063 = vrot.slane %v1062, 4
    %v1064 = vmax.f32 %v1062, %v1063
    %v1065 = vrot.slane %v1064, 2
    %v1066 = vmax.f32 %v1064, %v1065
    %v1067 = vrot.slane %v1066, 1
    %v1068 = vmax.f32 %v1066, %v1067
    %v1069 = vsub.f32 %v1053, %v1061
    %v1070 = vsub.f32 %v1054, %v1068
    %v1071 = vmul.f32 %v1069, 1.442695
    %v1072 = vpow.pop %v1071
    %v1073 = vmul.f32 %v1070, 1.442695
    %v1074 = vpow.pop %v1073
    %v1075 = vsel %vm348, %v1072, 0.0
    %v1076 = vrot.slane %v1075, 4
    %v1077 = vadd.f32 %v1075, %v1076
    %v1078 = vrot.slane %v1077, 2
    %v1079 = vadd.f32 %v1077, %v1078
    %v1080 = vrot.slane %v1079, 1
    %v1081 = vadd.f32 %v1079, %v1080
    %v1082 = vsel %vm348, %v1074, 0.0
    %v1083 = vrot.slane %v1082, 4
    %v1084 = vadd.f32 %v1082, %v1083
    %v1085 = vrot.slane %v1084, 2
    %v1086 = vadd.f32 %v1084, %v1085
    %v1087 = vrot.slane %v1086, 1
    %v1088 = vadd.f32 %v1086, %v1087
    %v1089 = vrcp.pop %v1081
    %v1090 = vrcp.pop %v1088
    %v1091 = vmul.f32 %v1072, %v1089
    %v1092 = vmul.f32 %v1074, %v1090
    %1094 = vset.pattern.permute.xlu0 0
    %1095 = vperm.xlu0 %1094, %v1091
    %v1096 = vpop.permute.xlu0 %1095
    %1099 = vset.pattern.permute.xlu0 0
    %1100 = vperm.xlu0 %1099, %v1092
    %v1101 = vpop.permute.xlu0 %1100
    %v1103 = vmul.f32 %v1096, %v83
    %v1104 = vmul.f32 %v1101, %v84
    %v1105 = vsel %vm100, %v1103, 0.0
    %v1106 = vrot.slane %v1105, 4
    %v1107 = vadd.f32 %v1105, %v1106
    %v1108 = vrot.slane %v1107, 2
    %v1109 = vadd.f32 %v1107, %v1108
    %v1110 = vrot.slane %v1109, 1
    %v1111 = vadd.f32 %v1109, %v1110
    %v1112 = vsel %vm100, %v1104, 0.0
    %v1113 = vrot.slane %v1112, 4
    %v1114 = vadd.f32 %v1112, %v1113
    %v1115 = vrot.slane %v1114, 2
    %v1116 = vadd.f32 %v1114, %v1115
    %v1117 = vrot.slane %v1116, 1
    %v1118 = vadd.f32 %v1116, %v1117
    %v1121 = vsel %vm415, %v1118, %v1111
    %v1123 = vsel %vm100, %v1121, %v877
    %v1124 = vpack.c.bf16 %v1123, %v1123
    %v1126 = vsel %vm184, %v1124, 0
    %1128 = vmatprep.subr.bf16.mxu0 %v449
    %1129 = vmatpush1.bf16.msra.mxu0 %v448
    %1130 = vmatprep.subr.bf16.mxu0 %v451
    %1131 = vmatpush1.bf16.msra.mxu0 %v450
    %1132 = vmatprep.subr.bf16.mxu0 %v453
    %1133 = vmatpush1.bf16.msra.mxu0 %v452
    %1134 = vmatprep.subr.bf16.mxu0 %v455
    %1135 = vmatpush1.bf16.msra.mxu0 %v454
    %1136 = vmatprep.subr.bf16.mxu0 0
    %1137 = vmatpush1.bf16.msra.mxu0 0
    %1138 = vmatprep.subr.bf16.mxu0 0
    %1139 = vmatpush1.bf16.msra.mxu0 0
    %1140 = vmatprep.subr.bf16.mxu0 0
    %1141 = vmatpush1.bf16.msra.mxu0 0
    %1142 = vmatprep.subr.bf16.mxu0 0
    %1143 = vmatpush1.bf16.msra.mxu0 0
    %1144 = vmatprep.subr.bf16.mxu0 0
    %1145 = vmatpush1.bf16.msra.mxu0 0
    %1146 = vmatprep.subr.bf16.mxu0 0
    %1147 = vmatpush1.bf16.msra.mxu0 0
    %1148 = vmatprep.subr.bf16.mxu0 0
    %1149 = vmatpush1.bf16.msra.mxu0 0
    %1150 = vmatprep.subr.bf16.mxu0 0
    %1151 = vmatpush1.bf16.msra.mxu0 0
    %1152 = vmatprep.subr.bf16.mxu0 0
    %1153 = vmatpush1.bf16.msra.mxu0 0
    %1154 = vmatprep.subr.bf16.mxu0 0
    %1155 = vmatpush1.bf16.msra.mxu0 0
    %1156 = vmatprep.subr.bf16.mxu0 0
    %1157 = vmatpush1.bf16.msra.mxu0 0
    %1158 = vmatprep.subr.bf16.mxu0 0
    %1159 = vmatpush1.bf16.msra.mxu0 0
    %1160 = vmatprep.mubr.bf16.mxu0 0
    %1161 = vmatmul.mubr.bf16.gmra.mrb[0].mxu0 %v1126
    %v1162 = vpop.f32.mrb[0].mxu0
    %v1163 = vadd.f32 0.0, %v1162
    %v1164 = vpop.f32.mrb[0].mxu0
    %v1165 = vadd.f32 0.0, %v1164
    %v1166 = vpop.f32.mrb[0].mxu0
    %v1167 = vpop.f32.mrb[0].mxu0
    %1168 = vdwg.mxu0
    %v1169 = vrot.slane %v223, 4
    %v1171 = vadd.f32 %v1163, %v1169
    %v1172 = vadd.f32 %v1165, %v512
    %v1173 = vadd.f32 %v1171, %v1172
    %v1174 = vxor.u32 %v1173, 2147483648
    %v1175 = vmul.f32 %v1174, 1.442695
    %v1176 = vpow.pop %v1175
    %v1177 = vadd.f32 %v1176, 1.0
    %v1178 = vrcp.pop %v1177
    %v1179 = vmul.f32 1.0, %v1178
    %1181 = vrot.lane.b32.xlu0 %v1172, 64
    %v1182 = vpop.permute.xlu0 %1181
    %v1184 = vmul.f32 %v1179, %v1182
    %1186 = vrot.lane.b32.xlu0 %v1184, 64
    %v1187 = vpop.permute.xlu0 %1186
    %v1189 = vadd.f32 %v1171, %v1187
    %v1190 = vtanh.pop %v1189
    %v1191 = vsub.f32 1.0, %v1179
    %1193 = vrot.lane.b32.xlu0 %v1190, 96
    %v1194 = vpop.permute.xlu0 %1193
    %v1196 = vmul.f32 %v1191, %v1194
    %v1197 = vmul.f32 %v1179, %v877
    %v1198 = vadd.f32 %v1196, %v1197
    %v1199 = vpack.c.bf16 %v1198, %v1198
    %1201 = vrot.lane.b32.xlu0 %v1199, 96
    %v1202 = vpop.permute.xlu0 %1201
    %v1204 = vsel %vm100, %v1202, 0
    %1206 = vmatprep.subr.bf16.mxu0 0
    %1207 = vmatpush1.bf16.msra.mxu0 %v549
    %1208 = vmatprep.subr.bf16.mxu0 0
    %1209 = vmatpush1.bf16.msra.mxu0 %v551
    %1210 = vmatprep.subr.bf16.mxu0 0
    %1211 = vmatpush1.bf16.msra.mxu0 0
    %1212 = vmatprep.subr.bf16.mxu0 0
    %1213 = vmatpush1.bf16.msra.mxu0 0
    %1214 = vmatprep.subr.bf16.mxu0 0
    %1215 = vmatpush1.bf16.msra.mxu0 0
    %1216 = vmatprep.subr.bf16.mxu0 0
    %1217 = vmatpush1.bf16.msra.mxu0 0
    %1218 = vmatprep.subr.bf16.mxu0 0
    %1219 = vmatpush1.bf16.msra.mxu0 0
    %1220 = vmatprep.subr.bf16.mxu0 0
    %1221 = vmatpush1.bf16.msra.mxu0 0
    %1222 = vmatprep.subr.bf16.mxu0 0
    %1223 = vmatpush1.bf16.msra.mxu0 0
    %1224 = vmatprep.subr.bf16.mxu0 0
    %1225 = vmatpush1.bf16.msra.mxu0 0
    %1226 = vmatprep.subr.bf16.mxu0 0
    %1227 = vmatpush1.bf16.msra.mxu0 0
    %1228 = vmatprep.subr.bf16.mxu0 0
    %1229 = vmatpush1.bf16.msra.mxu0 0
    %1230 = vmatprep.subr.bf16.mxu0 0
    %1231 = vmatpush1.bf16.msra.mxu0 0
    %1232 = vmatprep.subr.bf16.mxu0 0
    %1233 = vmatpush1.bf16.msra.mxu0 0
    %1234 = vmatprep.subr.bf16.mxu0 0
    %1235 = vmatpush1.bf16.msra.mxu0 0
    %1236 = vmatprep.subr.bf16.mxu0 0
    %1237 = vmatpush1.bf16.msra.mxu0 0
    %1238 = vmatprep.mubr.bf16.mxu0 0
    %1239 = vmatmul.mubr.bf16.gmra.mrb[0].mxu0 %v1204
    %v1240 = vpop.f32.mrb[0].mxu0
    %v1241 = vadd.f32 %v544, %v1240
    %v1242 = vpop.f32.mrb[0].mxu0
    %v1243 = vpop.f32.mrb[0].mxu0
    %v1244 = vpop.f32.mrb[0].mxu0
    %1245 = vdwg.mxu0
    %1247 = vrot.lane.b32.xlu0 %v1007, 96
    %v1248 = vpop.permute.xlu0 %1247
    %v1250 = vadd.f32 %v1241, %v1248
    %v1251 = vxor.u32 %v1250, 2147483648
    %v1252 = vmul.f32 %v1251, 1.442695
    %v1253 = vpow.pop %v1252
    %v1254 = vadd.f32 %v1253, 1.0
    %v1255 = vrcp.pop %v1254
    %v1256 = vmul.f32 1.0, %v1255
    %1257 = vrot.lane.b32.xlu0 %v1007, 32
    %v1258 = vpop.permute.xlu0 %1257
    %v1260 = vmul.f32 %v1256, %v1258
    %1262 = vrot.lane.b32.xlu0 %v1260, 64
    %v1263 = vpop.permute.xlu0 %1262
    %v1265 = vadd.f32 %v1241, %v1263
    %v1266 = vtanh.pop %v1265
    %v1267 = vsub.f32 1.0, %v1256
    %1269 = vrot.lane.b32.xlu0 %v1266, 96
    %v1270 = vpop.permute.xlu0 %1269
    %v1272 = vmul.f32 %v1267, %v1270
    %v1273 = vmul.f32 %v1256, %v953
    %v1274 = vadd.f32 %v1272, %v1273
    %1276 = vrot.lane.b32.xlu0 %v1274, 96
    %v1277 = vpop.permute.xlu0 %1276
    %1279 = vst.msk [vmem:[#allocation2 + $0x2] sm:$0x1] %vm634, %v1277
    %1280 = vst.msk [vmem:[#allocation2 + $0x7] sm:$0x2] %vm636, %v1277
    %v1281 = vpack.c.bf16 %v1274, %v1274
    %1283 = vrot.lane.b32.xlu0 %v1281, 96
    %v1284 = vpop.permute.xlu0 %1283
    %v1286 = vsel %vm100, %v1284, 0
    %1288 = vmatprep.subr.bf16.mxu0 0
    %1289 = vmatpush1.bf16.msra.mxu0 %v241
    %1290 = vmatprep.subr.bf16.mxu0 0
    %1291 = vmatpush1.bf16.msra.mxu0 %v242
    %1292 = vmatprep.subr.bf16.mxu0 0
    %1293 = vmatpush1.bf16.msra.mxu0 0
    %1294 = vmatprep.subr.bf16.mxu0 0
    %1295 = vmatpush1.bf16.msra.mxu0 0
    %1296 = vmatprep.subr.bf16.mxu0 0
    %1297 = vmatpush1.bf16.msra.mxu0 0
    %1298 = vmatprep.subr.bf16.mxu0 0
    %1299 = vmatpush1.bf16.msra.mxu0 0
    %1300 = vmatprep.subr.bf16.mxu0 0
    %1301 = vmatpush1.bf16.msra.mxu0 0
    %1302 = vmatprep.subr.bf16.mxu0 0
    %1303 = vmatpush1.bf16.msra.mxu0 0
    %1304 = vmatprep.subr.bf16.mxu0 0
    %1305 = vmatpush1.bf16.msra.mxu0 0
    %1306 = vmatprep.subr.bf16.mxu0 0
    %1307 = vmatpush1.bf16.msra.mxu0 0
    %1308 = vmatprep.subr.bf16.mxu0 0
    %1309 = vmatpush1.bf16.msra.mxu0 0
    %1310 = vmatprep.subr.bf16.mxu0 0
    %1311 = vmatpush1.bf16.msra.mxu0 0
    %1312 = vmatprep.subr.bf16.mxu0 0
    %1313 = vmatpush1.bf16.msra.mxu0 0
    %1314 = vmatprep.subr.bf16.mxu0 0
    %1315 = vmatpush1.bf16.msra.mxu0 0
    %1316 = vmatprep.subr.bf16.mxu0 0
    %1317 = vmatpush1.bf16.msra.mxu0 0
    %1318 = vmatprep.subr.bf16.mxu0 0
    %1319 = vmatpush1.bf16.msra.mxu0 0
    %1320 = vmatprep.mubr.bf16.mxu0 0
    %1321 = vmatmul.mubr.bf16.gmra.mrb[0].mxu0 %v1286
    %v1322 = vpop.f32.mrb[0].mxu0
    %v1323 = vadd.f32 0.0, %v1322
    %v1324 = vpop.f32.mrb[0].mxu0
    %v1325 = vpop.f32.mrb[0].mxu0
    %v1326 = vpop.f32.mrb[0].mxu0
    %1327 = vdwg.mxu0
    %v1328 = vadd.f32 %v1323, %v294
    %v1331 = vunpack.c.l.s4 1966171168
    %v1332 = vunpack.c.0.s8 %v1331
    %v1333 = vlaneseq
    %v1334 = vshrl.u32 %v1333, 7
    %v1335 = vsub.s32 %v1332, %v1334
    %v1336 = vrot.slane %v1323, %v1335
    %v1337 = vcombine.high %v1336, %v1336
    %v1339 = vunpack.c.l.s4 1966171168
    %v1340 = vunpack.c.0.s8 %v1339
    %v1341 = vlaneseq
    %v1342 = vshrl.u32 %v1341, 7
    %v1343 = vsub.s32 %v1340, %v1342
    %v1344 = vrot.slane %v1336, %v1343
    %v1346 = vunpack.c.l.s4 1966171168
    %v1347 = vunpack.c.0.s8 %v1346
    %v1348 = vlaneseq
    %v1349 = vshrl.u32 %v1348, 7
    %v1350 = vsub.s32 %v1347, %v1349
    %v1351 = vrot.slane %v1337, %v1350
    %v1352 = vlaneseq
    %v1353 = vshrl.u32 %v1352, 7
    %v1354 = vsub.s32 0, %v1353
    %v1355 = vrot.slane %v1344, %v1354
    %v1356 = vlaneseq
    %v1357 = vshrl.u32 %v1356, 7
    %v1358 = vsub.s32 0, %v1357
    %v1359 = vrot.slane %v1351, %v1358
    %v1362 = vadd.f32 %v1355, %v139
    %v1363 = vadd.f32 %v1359, %v142
    %v1364 = vtanh.pop %v1362
    %v1365 = vtanh.pop %v1363
    %v1366 = vmul.f32 %v1364, %v337
    %v1367 = vmul.f32 %v1365, %v337
    %v1368 = vsel %vm100, %v1366, 0.0
    %1369 = vadd.xlane.f32.xlu0 %v1368
    %v1370 = vpop.xlane.xlu0 %1369
    %v1371 = vsel %vm100, %v1367, 0.0
    %1372 = vadd.xlane.f32.xlu0 %v1371
    %v1373 = vpop.xlane.xlu0 %1372
    %v1374 = vadd.f32 %v1370, %v85
    %v1375 = vadd.f32 %v1373, %v86
    %v1376 = vsel %vm348, %v1374, -inf
    %v1377 = vrot.slane %v1376, 4
    %v1378 = vmax.f32 %v1376, %v1377
    %v1379 = vrot.slane %v1378, 2
    %v1380 = vmax.f32 %v1378, %v1379
    %v1381 = vrot.slane %v1380, 1
    %v1382 = vmax.f32 %v1380, %v1381
    %v1383 = vsel %vm348, %v1375, -inf
    %v1384 = vrot.slane %v1383, 4
    %v1385 = vmax.f32 %v1383, %v1384
    %v1386 = vrot.slane %v1385, 2
    %v1387 = vmax.f32 %v1385, %v1386
    %v1388 = vrot.slane %v1387, 1
    %v1389 = vmax.f32 %v1387, %v1388
    %v1390 = vsub.f32 %v1374, %v1382
    %v1391 = vsub.f32 %v1375, %v1389
    %v1392 = vmul.f32 %v1390, 1.442695
    %v1393 = vpow.pop %v1392
    %v1394 = vmul.f32 %v1391, 1.442695
    %v1395 = vpow.pop %v1394
    %v1396 = vsel %vm348, %v1393, 0.0
    %v1397 = vrot.slane %v1396, 4
    %v1398 = vadd.f32 %v1396, %v1397
    %v1399 = vrot.slane %v1398, 2
    %v1400 = vadd.f32 %v1398, %v1399
    %v1401 = vrot.slane %v1400, 1
    %v1402 = vadd.f32 %v1400, %v1401
    %v1403 = vsel %vm348, %v1395, 0.0
    %v1404 = vrot.slane %v1403, 4
    %v1405 = vadd.f32 %v1403, %v1404
    %v1406 = vrot.slane %v1405, 2
    %v1407 = vadd.f32 %v1405, %v1406
    %v1408 = vrot.slane %v1407, 1
    %v1409 = vadd.f32 %v1407, %v1408
    %v1410 = vrcp.pop %v1402
    %v1411 = vrcp.pop %v1409
    %v1412 = vmul.f32 %v1393, %v1410
    %v1413 = vmul.f32 %v1395, %v1411
    %1415 = vset.pattern.permute.xlu0 0
    %1416 = vperm.xlu0 %1415, %v1412
    %v1417 = vpop.permute.xlu0 %1416
    %1420 = vset.pattern.permute.xlu0 0
    %1421 = vperm.xlu0 %1420, %v1413
    %v1422 = vpop.permute.xlu0 %1421
    %v1424 = vmul.f32 %v1417, %v83
    %v1425 = vmul.f32 %v1422, %v84
    %v1426 = vsel %vm100, %v1424, 0.0
    %v1427 = vrot.slane %v1426, 4
    %v1428 = vadd.f32 %v1426, %v1427
    %v1429 = vrot.slane %v1428, 2
    %v1430 = vadd.f32 %v1428, %v1429
    %v1431 = vrot.slane %v1430, 1
    %v1432 = vadd.f32 %v1430, %v1431
    %v1433 = vsel %vm100, %v1425, 0.0
    %v1434 = vrot.slane %v1433, 4
    %v1435 = vadd.f32 %v1433, %v1434
    %v1436 = vrot.slane %v1435, 2
    %v1437 = vadd.f32 %v1435, %v1436
    %v1438 = vrot.slane %v1437, 1
    %v1439 = vadd.f32 %v1437, %v1438
    %v1442 = vsel %vm415, %v1439, %v1432
    %v1444 = vsel %vm100, %v1442, %v1198
    %v1445 = vpack.c.bf16 %v1444, %v1444
    %v1447 = vsel %vm184, %v1445, 0
    %1449 = vmatprep.subr.bf16.mxu0 %v449
    %1450 = vmatpush1.bf16.msra.mxu0 %v448
    %1451 = vmatprep.subr.bf16.mxu0 %v451
    %1452 = vmatpush1.bf16.msra.mxu0 %v450
    %1453 = vmatprep.subr.bf16.mxu0 %v453
    %1454 = vmatpush1.bf16.msra.mxu0 %v452
    %1455 = vmatprep.subr.bf16.mxu0 %v455
    %1456 = vmatpush1.bf16.msra.mxu0 %v454
    %1457 = vmatprep.subr.bf16.mxu0 0
    %1458 = vmatpush1.bf16.msra.mxu0 0
    %1459 = vmatprep.subr.bf16.mxu0 0
    %1460 = vmatpush1.bf16.msra.mxu0 0
    %1461 = vmatprep.subr.bf16.mxu0 0
    %1462 = vmatpush1.bf16.msra.mxu0 0
    %1463 = vmatprep.subr.bf16.mxu0 0
    %1464 = vmatpush1.bf16.msra.mxu0 0
    %1465 = vmatprep.subr.bf16.mxu0 0
    %1466 = vmatpush1.bf16.msra.mxu0 0
    %1467 = vmatprep.subr.bf16.mxu0 0
    %1468 = vmatpush1.bf16.msra.mxu0 0
    %1469 = vmatprep.subr.bf16.mxu0 0
    %1470 = vmatpush1.bf16.msra.mxu0 0
    %1471 = vmatprep.subr.bf16.mxu0 0
    %1472 = vmatpush1.bf16.msra.mxu0 0
    %1473 = vmatprep.subr.bf16.mxu0 0
    %1474 = vmatpush1.bf16.msra.mxu0 0
    %1475 = vmatprep.subr.bf16.mxu0 0
    %1476 = vmatpush1.bf16.msra.mxu0 0
    %1477 = vmatprep.subr.bf16.mxu0 0
    %1478 = vmatpush1.bf16.msra.mxu0 0
    %1479 = vmatprep.subr.bf16.mxu0 0
    %1480 = vmatpush1.bf16.msra.mxu0 0
    %1481 = vmatprep.mubr.bf16.mxu0 0
    %1482 = vmatmul.mubr.bf16.gmra.mrb[0].mxu0 %v1447
    %v1483 = vpop.f32.mrb[0].mxu0
    %v1484 = vadd.f32 0.0, %v1483
    %v1485 = vpop.f32.mrb[0].mxu0
    %v1486 = vadd.f32 0.0, %v1485
    %v1487 = vpop.f32.mrb[0].mxu0
    %v1488 = vpop.f32.mrb[0].mxu0
    %1489 = vdwg.mxu0
    %v1490 = vrot.slane %v223, 6
    %v1492 = vadd.f32 %v1484, %v1490
    %v1493 = vadd.f32 %v1486, %v512
    %v1494 = vadd.f32 %v1492, %v1493
    %v1495 = vxor.u32 %v1494, 2147483648
    %v1496 = vmul.f32 %v1495, 1.442695
    %v1497 = vpow.pop %v1496
    %v1498 = vadd.f32 %v1497, 1.0
    %v1499 = vrcp.pop %v1498
    %v1500 = vmul.f32 1.0, %v1499
    %1502 = vrot.lane.b32.xlu0 %v1493, 64
    %v1503 = vpop.permute.xlu0 %1502
    %v1505 = vmul.f32 %v1500, %v1503
    %1507 = vrot.lane.b32.xlu0 %v1505, 64
    %v1508 = vpop.permute.xlu0 %1507
    %v1510 = vadd.f32 %v1492, %v1508
    %v1511 = vtanh.pop %v1510
    %v1512 = vsub.f32 1.0, %v1500
    %1514 = vrot.lane.b32.xlu0 %v1511, 96
    %v1515 = vpop.permute.xlu0 %1514
    %v1517 = vmul.f32 %v1512, %v1515
    %v1518 = vmul.f32 %v1500, %v1198
    %v1519 = vadd.f32 %v1517, %v1518
    %v1520 = vpack.c.bf16 %v1519, %v1519
    %1522 = vrot.lane.b32.xlu0 %v1520, 96
    %v1523 = vpop.permute.xlu0 %1522
    %v1525 = vsel %vm100, %v1523, 0
    %1527 = vmatprep.subr.bf16.mxu0 0
    %1528 = vmatpush1.bf16.msra.mxu0 %v549
    %1529 = vmatprep.subr.bf16.mxu0 0
    %1530 = vmatpush1.bf16.msra.mxu0 %v551
    %1531 = vmatprep.subr.bf16.mxu0 0
    %1532 = vmatpush1.bf16.msra.mxu0 0
    %1533 = vmatprep.subr.bf16.mxu0 0
    %1534 = vmatpush1.bf16.msra.mxu0 0
    %1535 = vmatprep.subr.bf16.mxu0 0
    %1536 = vmatpush1.bf16.msra.mxu0 0
    %1537 = vmatprep.subr.bf16.mxu0 0
    %1538 = vmatpush1.bf16.msra.mxu0 0
    %1539 = vmatprep.subr.bf16.mxu0 0
    %1540 = vmatpush1.bf16.msra.mxu0 0
    %1541 = vmatprep.subr.bf16.mxu0 0
    %1542 = vmatpush1.bf16.msra.mxu0 0
    %1543 = vmatprep.subr.bf16.mxu0 0
    %1544 = vmatpush1.bf16.msra.mxu0 0
    %1545 = vmatprep.subr.bf16.mxu0 0
    %1546 = vmatpush1.bf16.msra.mxu0 0
    %1547 = vmatprep.subr.bf16.mxu0 0
    %1548 = vmatpush1.bf16.msra.mxu0 0
    %1549 = vmatprep.subr.bf16.mxu0 0
    %1550 = vmatpush1.bf16.msra.mxu0 0
    %1551 = vmatprep.subr.bf16.mxu0 0
    %1552 = vmatpush1.bf16.msra.mxu0 0
    %1553 = vmatprep.subr.bf16.mxu0 0
    %1554 = vmatpush1.bf16.msra.mxu0 0
    %1555 = vmatprep.subr.bf16.mxu0 0
    %1556 = vmatpush1.bf16.msra.mxu0 0
    %1557 = vmatprep.subr.bf16.mxu0 0
    %1558 = vmatpush1.bf16.msra.mxu0 0
    %1559 = vmatprep.mubr.bf16.mxu0 0
    %1560 = vmatmul.mubr.bf16.gmra.mrb[0].mxu0 %v1525
    %v1561 = vpop.f32.mrb[0].mxu0
    %v1562 = vadd.f32 %v544, %v1561
    %v1563 = vpop.f32.mrb[0].mxu0
    %v1564 = vpop.f32.mrb[0].mxu0
    %v1565 = vpop.f32.mrb[0].mxu0
    %1566 = vdwg.mxu0
    %1568 = vrot.lane.b32.xlu0 %v1328, 96
    %v1569 = vpop.permute.xlu0 %1568
    %v1571 = vadd.f32 %v1562, %v1569
    %v1572 = vxor.u32 %v1571, 2147483648
    %v1573 = vmul.f32 %v1572, 1.442695
    %v1574 = vpow.pop %v1573
    %v1575 = vadd.f32 %v1574, 1.0
    %v1576 = vrcp.pop %v1575
    %v1577 = vmul.f32 1.0, %v1576
    %1578 = vrot.lane.b32.xlu0 %v1328, 32
    %v1579 = vpop.permute.xlu0 %1578
    %v1581 = vmul.f32 %v1577, %v1579
    %1583 = vrot.lane.b32.xlu0 %v1581, 64
    %v1584 = vpop.permute.xlu0 %1583
    %v1586 = vadd.f32 %v1562, %v1584
    %v1587 = vtanh.pop %v1586
    %v1588 = vsub.f32 1.0, %v1577
    %1590 = vrot.lane.b32.xlu0 %v1587, 96
    %v1591 = vpop.permute.xlu0 %1590
    %v1593 = vmul.f32 %v1588, %v1591
    %v1594 = vmul.f32 %v1577, %v1274
    %v1595 = vadd.f32 %v1593, %v1594
    %1597 = vrot.lane.b32.xlu0 %v1595, 96
    %v1598 = vpop.permute.xlu0 %1597
    %1600 = vst.msk [vmem:[#allocation2 + $0x3] sm:$0x1] %vm634, %v1598
    %1601 = vst.msk [vmem:[#allocation2 + $0x8] sm:$0x2] %vm636, %v1598
    %v1602 = vpack.c.bf16 %v1595, %v1595
    %1604 = vrot.lane.b32.xlu0 %v1602, 96
    %v1605 = vpop.permute.xlu0 %1604
    %v1607 = vsel %vm100, %v1605, 0
    %1609 = vmatprep.subr.bf16.mxu0 0
    %1610 = vmatpush1.bf16.msra.mxu0 %v241
    %1611 = vmatprep.subr.bf16.mxu0 0
    %1612 = vmatpush1.bf16.msra.mxu0 %v242
    %1613 = vmatprep.subr.bf16.mxu0 0
    %1614 = vmatpush1.bf16.msra.mxu0 0
    %1615 = vmatprep.subr.bf16.mxu0 0
    %1616 = vmatpush1.bf16.msra.mxu0 0
    %1617 = vmatprep.subr.bf16.mxu0 0
    %1618 = vmatpush1.bf16.msra.mxu0 0
    %1619 = vmatprep.subr.bf16.mxu0 0
    %1620 = vmatpush1.bf16.msra.mxu0 0
    %1621 = vmatprep.subr.bf16.mxu0 0
    %1622 = vmatpush1.bf16.msra.mxu0 0
    %1623 = vmatprep.subr.bf16.mxu0 0
    %1624 = vmatpush1.bf16.msra.mxu0 0
    %1625 = vmatprep.subr.bf16.mxu0 0
    %1626 = vmatpush1.bf16.msra.mxu0 0
    %1627 = vmatprep.subr.bf16.mxu0 0
    %1628 = vmatpush1.bf16.msra.mxu0 0
    %1629 = vmatprep.subr.bf16.mxu0 0
    %1630 = vmatpush1.bf16.msra.mxu0 0
    %1631 = vmatprep.subr.bf16.mxu0 0
    %1632 = vmatpush1.bf16.msra.mxu0 0
    %1633 = vmatprep.subr.bf16.mxu0 0
    %1634 = vmatpush1.bf16.msra.mxu0 0
    %1635 = vmatprep.subr.bf16.mxu0 0
    %1636 = vmatpush1.bf16.msra.mxu0 0
    %1637 = vmatprep.subr.bf16.mxu0 0
    %1638 = vmatpush1.bf16.msra.mxu0 0
    %1639 = vmatprep.subr.bf16.mxu0 0
    %1640 = vmatpush1.bf16.msra.mxu0 0
    %1641 = vmatprep.mubr.bf16.mxu0 0
    %1642 = vmatmul.mubr.bf16.gmra.mrb[0].mxu0 %v1607
    %v1643 = vpop.f32.mrb[0].mxu0
    %v1644 = vadd.f32 0.0, %v1643
    %v1645 = vpop.f32.mrb[0].mxu0
    %v1646 = vpop.f32.mrb[0].mxu0
    %v1647 = vpop.f32.mrb[0].mxu0
    %1648 = vdwg.mxu0
    %v1649 = vadd.f32 %v1644, %v294
    %v1652 = vunpack.c.l.s4 1966171168
    %v1653 = vunpack.c.0.s8 %v1652
    %v1654 = vlaneseq
    %v1655 = vshrl.u32 %v1654, 7
    %v1656 = vsub.s32 %v1653, %v1655
    %v1657 = vrot.slane %v1644, %v1656
    %v1658 = vcombine.high %v1657, %v1657
    %v1660 = vunpack.c.l.s4 1966171168
    %v1661 = vunpack.c.0.s8 %v1660
    %v1662 = vlaneseq
    %v1663 = vshrl.u32 %v1662, 7
    %v1664 = vsub.s32 %v1661, %v1663
    %v1665 = vrot.slane %v1657, %v1664
    %v1667 = vunpack.c.l.s4 1966171168
    %v1668 = vunpack.c.0.s8 %v1667
    %v1669 = vlaneseq
    %v1670 = vshrl.u32 %v1669, 7
    %v1671 = vsub.s32 %v1668, %v1670
    %v1672 = vrot.slane %v1658, %v1671
    %v1673 = vlaneseq
    %v1674 = vshrl.u32 %v1673, 7
    %v1675 = vsub.s32 0, %v1674
    %v1676 = vrot.slane %v1665, %v1675
    %v1677 = vlaneseq
    %v1678 = vshrl.u32 %v1677, 7
    %v1679 = vsub.s32 0, %v1678
    %v1680 = vrot.slane %v1672, %v1679
    %v1683 = vadd.f32 %v1676, %v139
    %v1684 = vadd.f32 %v1680, %v142
    %v1685 = vtanh.pop %v1683
    %v1686 = vtanh.pop %v1684
    %v1687 = vmul.f32 %v1685, %v337
    %v1688 = vmul.f32 %v1686, %v337
    %v1689 = vsel %vm100, %v1687, 0.0
    %1690 = vadd.xlane.f32.xlu0 %v1689
    %v1691 = vpop.xlane.xlu0 %1690
    %v1692 = vsel %vm100, %v1688, 0.0
    %1693 = vadd.xlane.f32.xlu0 %v1692
    %v1694 = vpop.xlane.xlu0 %1693
    %v1695 = vadd.f32 %v1691, %v85
    %v1696 = vadd.f32 %v1694, %v86
    %v1697 = vsel %vm348, %v1695, -inf
    %v1698 = vrot.slane %v1697, 4
    %v1699 = vmax.f32 %v1697, %v1698
    %v1700 = vrot.slane %v1699, 2
    %v1701 = vmax.f32 %v1699, %v1700
    %v1702 = vrot.slane %v1701, 1
    %v1703 = vmax.f32 %v1701, %v1702
    %v1704 = vsel %vm348, %v1696, -inf
    %v1705 = vrot.slane %v1704, 4
    %v1706 = vmax.f32 %v1704, %v1705
    %v1707 = vrot.slane %v1706, 2
    %v1708 = vmax.f32 %v1706, %v1707
    %v1709 = vrot.slane %v1708, 1
    %v1710 = vmax.f32 %v1708, %v1709
    %v1711 = vsub.f32 %v1695, %v1703
    %v1712 = vsub.f32 %v1696, %v1710
    %v1713 = vmul.f32 %v1711, 1.442695
    %v1714 = vpow.pop %v1713
    %v1715 = vmul.f32 %v1712, 1.442695
    %v1716 = vpow.pop %v1715
    %v1717 = vsel %vm348, %v1714, 0.0
    %v1718 = vrot.slane %v1717, 4
    %v1719 = vadd.f32 %v1717, %v1718
    %v1720 = vrot.slane %v1719, 2
    %v1721 = vadd.f32 %v1719, %v1720
    %v1722 = vrot.slane %v1721, 1
    %v1723 = vadd.f32 %v1721, %v1722
    %v1724 = vsel %vm348, %v1716, 0.0
    %v1725 = vrot.slane %v1724, 4
    %v1726 = vadd.f32 %v1724, %v1725
    %v1727 = vrot.slane %v1726, 2
    %v1728 = vadd.f32 %v1726, %v1727
    %v1729 = vrot.slane %v1728, 1
    %v1730 = vadd.f32 %v1728, %v1729
    %v1731 = vrcp.pop %v1723
    %v1732 = vrcp.pop %v1730
    %v1733 = vmul.f32 %v1714, %v1731
    %v1734 = vmul.f32 %v1716, %v1732
    %1736 = vset.pattern.permute.xlu0 0
    %1737 = vperm.xlu0 %1736, %v1733
    %v1738 = vpop.permute.xlu0 %1737
    %1741 = vset.pattern.permute.xlu0 0
    %1742 = vperm.xlu0 %1741, %v1734
    %v1743 = vpop.permute.xlu0 %1742
    %v1745 = vmul.f32 %v1738, %v83
    %v1746 = vmul.f32 %v1743, %v84
    %v1747 = vsel %vm100, %v1745, 0.0
    %v1748 = vrot.slane %v1747, 4
    %v1749 = vadd.f32 %v1747, %v1748
    %v1750 = vrot.slane %v1749, 2
    %v1751 = vadd.f32 %v1749, %v1750
    %v1752 = vrot.slane %v1751, 1
    %v1753 = vadd.f32 %v1751, %v1752
    %v1754 = vsel %vm100, %v1746, 0.0
    %v1755 = vrot.slane %v1754, 4
    %v1756 = vadd.f32 %v1754, %v1755
    %v1757 = vrot.slane %v1756, 2
    %v1758 = vadd.f32 %v1756, %v1757
    %v1759 = vrot.slane %v1758, 1
    %v1760 = vadd.f32 %v1758, %v1759
    %v1763 = vsel %vm415, %v1760, %v1753
    %v1765 = vsel %vm100, %v1763, %v1519
    %v1766 = vpack.c.bf16 %v1765, %v1765
    %v1768 = vsel %vm184, %v1766, 0
    %1770 = vmatprep.subr.bf16.mxu0 %v449
    %1771 = vmatpush1.bf16.msra.mxu0 %v448
    %1772 = vmatprep.subr.bf16.mxu0 %v451
    %1773 = vmatpush1.bf16.msra.mxu0 %v450
    %1774 = vmatprep.subr.bf16.mxu0 %v453
    %1775 = vmatpush1.bf16.msra.mxu0 %v452
    %1776 = vmatprep.subr.bf16.mxu0 %v455
    %1777 = vmatpush1.bf16.msra.mxu0 %v454
    %1778 = vmatprep.subr.bf16.mxu0 0
    %1779 = vmatpush1.bf16.msra.mxu0 0
    %1780 = vmatprep.subr.bf16.mxu0 0
    %1781 = vmatpush1.bf16.msra.mxu0 0
    %1782 = vmatprep.subr.bf16.mxu0 0
    %1783 = vmatpush1.bf16.msra.mxu0 0
    %1784 = vmatprep.subr.bf16.mxu0 0
    %1785 = vmatpush1.bf16.msra.mxu0 0
    %1786 = vmatprep.subr.bf16.mxu0 0
    %1787 = vmatpush1.bf16.msra.mxu0 0
    %1788 = vmatprep.subr.bf16.mxu0 0
    %1789 = vmatpush1.bf16.msra.mxu0 0
    %1790 = vmatprep.subr.bf16.mxu0 0
    %1791 = vmatpush1.bf16.msra.mxu0 0
    %1792 = vmatprep.subr.bf16.mxu0 0
    %1793 = vmatpush1.bf16.msra.mxu0 0
    %1794 = vmatprep.subr.bf16.mxu0 0
    %1795 = vmatpush1.bf16.msra.mxu0 0
    %1796 = vmatprep.subr.bf16.mxu0 0
    %1797 = vmatpush1.bf16.msra.mxu0 0
    %1798 = vmatprep.subr.bf16.mxu0 0
    %1799 = vmatpush1.bf16.msra.mxu0 0
    %1800 = vmatprep.subr.bf16.mxu0 0
    %1801 = vmatpush1.bf16.msra.mxu0 0
    %1802 = vmatprep.mubr.bf16.mxu0 0
    %1803 = vmatmul.mubr.bf16.gmra.mrb[0].mxu0 %v1768
    %v1804 = vpop.f32.mrb[0].mxu0
    %v1805 = vadd.f32 0.0, %v1804
    %v1806 = vpop.f32.mrb[0].mxu0
    %v1807 = vadd.f32 0.0, %v1806
    %v1808 = vpop.f32.mrb[0].mxu0
    %v1809 = vpop.f32.mrb[0].mxu0
    %1810 = vdwg.mxu0
    %v1811 = vadd.f32 %v1805, %v226
    %v1812 = vadd.f32 %v1807, %v512
    %v1813 = vadd.f32 %v1811, %v1812
    %v1814 = vxor.u32 %v1813, 2147483648
    %v1815 = vmul.f32 %v1814, 1.442695
    %v1816 = vpow.pop %v1815
    %v1817 = vadd.f32 %v1816, 1.0
    %v1818 = vrcp.pop %v1817
    %v1819 = vmul.f32 1.0, %v1818
    %1821 = vrot.lane.b32.xlu0 %v1812, 64
    %v1822 = vpop.permute.xlu0 %1821
    %v1824 = vmul.f32 %v1819, %v1822
    %1826 = vrot.lane.b32.xlu0 %v1824, 64
    %v1827 = vpop.permute.xlu0 %1826
    %v1829 = vadd.f32 %v1811, %v1827
    %v1830 = vtanh.pop %v1829
    %v1831 = vsub.f32 1.0, %v1819
    %1833 = vrot.lane.b32.xlu0 %v1830, 96
    %v1834 = vpop.permute.xlu0 %1833
    %v1836 = vmul.f32 %v1831, %v1834
    %v1837 = vmul.f32 %v1819, %v1519
    %v1838 = vadd.f32 %v1836, %v1837
    %v1839 = vpack.c.bf16 %v1838, %v1838
    %1841 = vrot.lane.b32.xlu0 %v1839, 96
    %v1842 = vpop.permute.xlu0 %1841
    %v1844 = vsel %vm100, %v1842, 0
    %1846 = vmatprep.subr.bf16.mxu0 0
    %1847 = vmatpush1.bf16.msra.mxu0 %v549
    %1848 = vmatprep.subr.bf16.mxu0 0
    %1849 = vmatpush1.bf16.msra.mxu0 %v551
    %1850 = vmatprep.subr.bf16.mxu0 0
    %1851 = vmatpush1.bf16.msra.mxu0 0
    %1852 = vmatprep.subr.bf16.mxu0 0
    %1853 = vmatpush1.bf16.msra.mxu0 0
    %1854 = vmatprep.subr.bf16.mxu0 0
    %1855 = vmatpush1.bf16.msra.mxu0 0
    %1856 = vmatprep.subr.bf16.mxu0 0
    %1857 = vmatpush1.bf16.msra.mxu0 0
    %1858 = vmatprep.subr.bf16.mxu0 0
    %1859 = vmatpush1.bf16.msra.mxu0 0
    %1860 = vmatprep.subr.bf16.mxu0 0
    %1861 = vmatpush1.bf16.msra.mxu0 0
    %1862 = vmatprep.subr.bf16.mxu0 0
    %1863 = vmatpush1.bf16.msra.mxu0 0
    %1864 = vmatprep.subr.bf16.mxu0 0
    %1865 = vmatpush1.bf16.msra.mxu0 0
    %1866 = vmatprep.subr.bf16.mxu0 0
    %1867 = vmatpush1.bf16.msra.mxu0 0
    %1868 = vmatprep.subr.bf16.mxu0 0
    %1869 = vmatpush1.bf16.msra.mxu0 0
    %1870 = vmatprep.subr.bf16.mxu0 0
    %1871 = vmatpush1.bf16.msra.mxu0 0
    %1872 = vmatprep.subr.bf16.mxu0 0
    %1873 = vmatpush1.bf16.msra.mxu0 0
    %1874 = vmatprep.subr.bf16.mxu0 0
    %1875 = vmatpush1.bf16.msra.mxu0 0
    %1876 = vmatprep.subr.bf16.mxu0 0
    %1877 = vmatpush1.bf16.msra.mxu0 0
    %1878 = vmatprep.mubr.bf16.mxu0 0
    %1879 = vmatmul.mubr.bf16.gmra.mrb[0].mxu0 %v1844
    %v1880 = vpop.f32.mrb[0].mxu0
    %v1881 = vadd.f32 %v544, %v1880
    %v1882 = vpop.f32.mrb[0].mxu0
    %v1883 = vpop.f32.mrb[0].mxu0
    %v1884 = vpop.f32.mrb[0].mxu0
    %1885 = vdwg.mxu0
    %1887 = vrot.lane.b32.xlu0 %v1649, 96
    %v1888 = vpop.permute.xlu0 %1887
    %v1890 = vadd.f32 %v1881, %v1888
    %v1891 = vxor.u32 %v1890, 2147483648
    %v1892 = vmul.f32 %v1891, 1.442695
    %v1893 = vpow.pop %v1892
    %v1894 = vadd.f32 %v1893, 1.0
    %v1895 = vrcp.pop %v1894
    %v1896 = vmul.f32 1.0, %v1895
    %1897 = vrot.lane.b32.xlu0 %v1649, 32
    %v1898 = vpop.permute.xlu0 %1897
    %v1900 = vmul.f32 %v1896, %v1898
    %1902 = vrot.lane.b32.xlu0 %v1900, 64
    %v1903 = vpop.permute.xlu0 %1902
    %v1905 = vadd.f32 %v1881, %v1903
    %v1906 = vtanh.pop %v1905
    %v1907 = vsub.f32 1.0, %v1896
    %1909 = vrot.lane.b32.xlu0 %v1906, 96
    %v1910 = vpop.permute.xlu0 %1909
    %v1912 = vmul.f32 %v1907, %v1910
    %v1913 = vmul.f32 %v1896, %v1595
    %v1914 = vadd.f32 %v1912, %v1913
    %1916 = vrot.lane.b32.xlu0 %v1914, 96
    %v1917 = vpop.permute.xlu0 %1916
    %1919 = vst.msk [vmem:[#allocation2 + $0x4] sm:$0x1] %vm634, %v1917
    %1920 = vst.msk [vmem:[#allocation2 + $0x9] sm:$0x2] %vm636, %v1917
    %v1921 = vpack.c.bf16 %v1914, %v1914
    %1923 = vrot.lane.b32.xlu0 %v1921, 96
    %v1924 = vpop.permute.xlu0 %1923
    %v1926 = vsel %vm100, %v1924, 0
    %1928 = vmatprep.subr.bf16.mxu0 0
    %1929 = vmatpush1.bf16.msra.mxu0 %v241
    %1930 = vmatprep.subr.bf16.mxu0 0
    %1931 = vmatpush1.bf16.msra.mxu0 %v242
    %1932 = vmatprep.subr.bf16.mxu0 0
    %1933 = vmatpush1.bf16.msra.mxu0 0
    %1934 = vmatprep.subr.bf16.mxu0 0
    %1935 = vmatpush1.bf16.msra.mxu0 0
    %1936 = vmatprep.subr.bf16.mxu0 0
    %1937 = vmatpush1.bf16.msra.mxu0 0
    %1938 = vmatprep.subr.bf16.mxu0 0
    %1939 = vmatpush1.bf16.msra.mxu0 0
    %1940 = vmatprep.subr.bf16.mxu0 0
    %1941 = vmatpush1.bf16.msra.mxu0 0
    %1942 = vmatprep.subr.bf16.mxu0 0
    %1943 = vmatpush1.bf16.msra.mxu0 0
    %1944 = vmatprep.subr.bf16.mxu0 0
    %1945 = vmatpush1.bf16.msra.mxu0 0
    %1946 = vmatprep.subr.bf16.mxu0 0
    %1947 = vmatpush1.bf16.msra.mxu0 0
    %1948 = vmatprep.subr.bf16.mxu0 0
    %1949 = vmatpush1.bf16.msra.mxu0 0
    %1950 = vmatprep.subr.bf16.mxu0 0
    %1951 = vmatpush1.bf16.msra.mxu0 0
    %1952 = vmatprep.subr.bf16.mxu0 0
    %1953 = vmatpush1.bf16.msra.mxu0 0
    %1954 = vmatprep.subr.bf16.mxu0 0
    %1955 = vmatpush1.bf16.msra.mxu0 0
    %1956 = vmatprep.subr.bf16.mxu0 0
    %1957 = vmatpush1.bf16.msra.mxu0 0
    %1958 = vmatprep.subr.bf16.mxu0 0
    %1959 = vmatpush1.bf16.msra.mxu0 0
    %1960 = vmatprep.mubr.bf16.mxu0 0
    %1961 = vmatmul.mubr.bf16.gmra.mrb[0].mxu0 %v1926
    %v1962 = vpop.f32.mrb[0].mxu0
    %v1963 = vadd.f32 0.0, %v1962
    %v1964 = vpop.f32.mrb[0].mxu0
    %v1965 = vpop.f32.mrb[0].mxu0
    %v1966 = vpop.f32.mrb[0].mxu0
    %1967 = vdwg.mxu0
    %v1968 = vadd.f32 %v1963, %v294
    %v1971 = vunpack.c.l.s4 1966171168
    %v1972 = vunpack.c.0.s8 %v1971
    %v1973 = vlaneseq
    %v1974 = vshrl.u32 %v1973, 7
    %v1975 = vsub.s32 %v1972, %v1974
    %v1976 = vrot.slane %v1963, %v1975
    %v1977 = vcombine.high %v1976, %v1976
    %v1979 = vunpack.c.l.s4 1966171168
    %v1980 = vunpack.c.0.s8 %v1979
    %v1981 = vlaneseq
    %v1982 = vshrl.u32 %v1981, 7
    %v1983 = vsub.s32 %v1980, %v1982
    %v1984 = vrot.slane %v1976, %v1983
    %v1986 = vunpack.c.l.s4 1966171168
    %v1987 = vunpack.c.0.s8 %v1986
    %v1988 = vlaneseq
    %v1989 = vshrl.u32 %v1988, 7
    %v1990 = vsub.s32 %v1987, %v1989
    %v1991 = vrot.slane %v1977, %v1990
    %v1992 = vlaneseq
    %v1993 = vshrl.u32 %v1992, 7
    %v1994 = vsub.s32 0, %v1993
    %v1995 = vrot.slane %v1984, %v1994
    %v1996 = vlaneseq
    %v1997 = vshrl.u32 %v1996, 7
    %v1998 = vsub.s32 0, %v1997
    %v1999 = vrot.slane %v1991, %v1998
    %v2002 = vadd.f32 %v1995, %v139
    %v2003 = vadd.f32 %v1999, %v142
    %v2004 = vtanh.pop %v2002
    %v2005 = vtanh.pop %v2003
    %v2006 = vmul.f32 %v2004, %v337
    %v2007 = vmul.f32 %v2005, %v337
    %v2008 = vsel %vm100, %v2006, 0.0
    %2009 = vadd.xlane.f32.xlu0 %v2008
    %v2010 = vpop.xlane.xlu0 %2009
    %v2011 = vsel %vm100, %v2007, 0.0
    %2012 = vadd.xlane.f32.xlu0 %v2011
    %v2013 = vpop.xlane.xlu0 %2012
    %v2014 = vadd.f32 %v2010, %v85
    %v2015 = vadd.f32 %v2013, %v86
    %v2016 = vsel %vm348, %v2014, -inf
    %v2017 = vrot.slane %v2016, 4
    %v2018 = vmax.f32 %v2016, %v2017
    %v2019 = vrot.slane %v2018, 2
    %v2020 = vmax.f32 %v2018, %v2019
    %v2021 = vrot.slane %v2020, 1
    %v2022 = vmax.f32 %v2020, %v2021
    %v2023 = vsel %vm348, %v2015, -inf
    %v2024 = vrot.slane %v2023, 4
    %v2025 = vmax.f32 %v2023, %v2024
    %v2026 = vrot.slane %v2025, 2
    %v2027 = vmax.f32 %v2025, %v2026
    %v2028 = vrot.slane %v2027, 1
    %v2029 = vmax.f32 %v2027, %v2028
    %v2030 = vsub.f32 %v2014, %v2022
    %v2031 = vsub.f32 %v2015, %v2029
    %v2032 = vmul.f32 %v2030, 1.442695
    %v2033 = vpow.pop %v2032
    %v2034 = vmul.f32 %v2031, 1.442695
    %v2035 = vpow.pop %v2034
    %v2036 = vsel %vm348, %v2033, 0.0
    %v2037 = vrot.slane %v2036, 4
    %v2038 = vadd.f32 %v2036, %v2037
    %v2039 = vrot.slane %v2038, 2
    %v2040 = vadd.f32 %v2038, %v2039
    %v2041 = vrot.slane %v2040, 1
    %v2042 = vadd.f32 %v2040, %v2041
    %v2043 = vsel %vm348, %v2035, 0.0
    %v2044 = vrot.slane %v2043, 4
    %v2045 = vadd.f32 %v2043, %v2044
    %v2046 = vrot.slane %v2045, 2
    %v2047 = vadd.f32 %v2045, %v2046
    %v2048 = vrot.slane %v2047, 1
    %v2049 = vadd.f32 %v2047, %v2048
    %v2050 = vrcp.pop %v2042
    %v2051 = vrcp.pop %v2049
    %v2052 = vmul.f32 %v2033, %v2050
    %v2053 = vmul.f32 %v2035, %v2051
    %2055 = vset.pattern.permute.xlu0 0
    %2056 = vperm.xlu0 %2055, %v2052
    %v2057 = vpop.permute.xlu0 %2056
    %2060 = vset.pattern.permute.xlu0 0
    %2061 = vperm.xlu0 %2060, %v2053
    %v2062 = vpop.permute.xlu0 %2061
    %v2064 = vmul.f32 %v2057, %v83
    %v2065 = vmul.f32 %v2062, %v84
    %v2066 = vsel %vm100, %v2064, 0.0
    %v2067 = vrot.slane %v2066, 4
    %v2068 = vadd.f32 %v2066, %v2067
    %v2069 = vrot.slane %v2068, 2
    %v2070 = vadd.f32 %v2068, %v2069
    %v2071 = vrot.slane %v2070, 1
    %v2072 = vadd.f32 %v2070, %v2071
    %v2073 = vsel %vm100, %v2065, 0.0
    %v2074 = vrot.slane %v2073, 4
    %v2075 = vadd.f32 %v2073, %v2074
    %v2076 = vrot.slane %v2075, 2
    %v2077 = vadd.f32 %v2075, %v2076
    %v2078 = vrot.slane %v2077, 1
    %v2079 = vadd.f32 %v2077, %v2078
    %v2082 = vsel %vm415, %v2079, %v2072
    %v2084 = vsel %vm100, %v2082, %v1838
    %v2085 = vpack.c.bf16 %v2084, %v2084
    %v2087 = vsel %vm184, %v2085, 0
    %2089 = vmatprep.subr.bf16.mxu0 %v449
    %2090 = vmatpush1.bf16.msra.mxu0 %v448
    %2091 = vmatprep.subr.bf16.mxu0 %v451
    %2092 = vmatpush1.bf16.msra.mxu0 %v450
    %2093 = vmatprep.subr.bf16.mxu0 %v453
    %2094 = vmatpush1.bf16.msra.mxu0 %v452
    %2095 = vmatprep.subr.bf16.mxu0 %v455
    %2096 = vmatpush1.bf16.msra.mxu0 %v454
    %2097 = vmatprep.subr.bf16.mxu0 0
    %2098 = vmatpush1.bf16.msra.mxu0 0
    %2099 = vmatprep.subr.bf16.mxu0 0
    %2100 = vmatpush1.bf16.msra.mxu0 0
    %2101 = vmatprep.subr.bf16.mxu0 0
    %2102 = vmatpush1.bf16.msra.mxu0 0
    %2103 = vmatprep.subr.bf16.mxu0 0
    %2104 = vmatpush1.bf16.msra.mxu0 0
    %2105 = vmatprep.subr.bf16.mxu0 0
    %2106 = vmatpush1.bf16.msra.mxu0 0
    %2107 = vmatprep.subr.bf16.mxu0 0
    %2108 = vmatpush1.bf16.msra.mxu0 0
    %2109 = vmatprep.subr.bf16.mxu0 0
    %2110 = vmatpush1.bf16.msra.mxu0 0
    %2111 = vmatprep.subr.bf16.mxu0 0
    %2112 = vmatpush1.bf16.msra.mxu0 0
    %2113 = vmatprep.subr.bf16.mxu0 0
    %2114 = vmatpush1.bf16.msra.mxu0 0
    %2115 = vmatprep.subr.bf16.mxu0 0
    %2116 = vmatpush1.bf16.msra.mxu0 0
    %2117 = vmatprep.subr.bf16.mxu0 0
    %2118 = vmatpush1.bf16.msra.mxu0 0
    %2119 = vmatprep.subr.bf16.mxu0 0
    %2120 = vmatpush1.bf16.msra.mxu0 0
    %2121 = vmatprep.mubr.bf16.mxu0 0
    %2122 = vmatmul.mubr.bf16.gmra.mrb[0].mxu0 %v2087
    %v2123 = vpop.f32.mrb[0].mxu0
    %v2124 = vadd.f32 0.0, %v2123
    %v2125 = vpop.f32.mrb[0].mxu0
    %v2126 = vadd.f32 0.0, %v2125
    %v2127 = vpop.f32.mrb[0].mxu0
    %v2128 = vpop.f32.mrb[0].mxu0
    %2129 = vdwg.mxu0
    %v2131 = vrot.slane %v226, 2
    %v2133 = vadd.f32 %v2124, %v2131
    %v2134 = vadd.f32 %v2126, %v512
    %v2135 = vadd.f32 %v2133, %v2134
    %v2136 = vxor.u32 %v2135, 2147483648
    %v2137 = vmul.f32 %v2136, 1.442695
    %v2138 = vpow.pop %v2137
    %v2139 = vadd.f32 %v2138, 1.0
    %v2140 = vrcp.pop %v2139
    %v2141 = vmul.f32 1.0, %v2140
    %2143 = vrot.lane.b32.xlu0 %v2134, 64
    %v2144 = vpop.permute.xlu0 %2143
    %v2146 = vmul.f32 %v2141, %v2144
    %2148 = vrot.lane.b32.xlu0 %v2146, 64
    %v2149 = vpop.permute.xlu0 %2148
    %v2151 = vadd.f32 %v2133, %v2149
    %v2152 = vtanh.pop %v2151
    %v2153 = vsub.f32 1.0, %v2141
    %2155 = vrot.lane.b32.xlu0 %v2152, 96
    %v2156 = vpop.permute.xlu0 %2155
    %v2158 = vmul.f32 %v2153, %v2156
    %v2159 = vmul.f32 %v2141, %v1838
    %v2160 = vadd.f32 %v2158, %v2159
    %v2161 = vpack.c.bf16 %v2160, %v2160
    %2163 = vrot.lane.b32.xlu0 %v2161, 96
    %v2164 = vpop.permute.xlu0 %2163
    %v2166 = vsel %vm100, %v2164, 0
    %2168 = vmatprep.subr.bf16.mxu0 0
    %2169 = vmatpush1.bf16.msra.mxu0 %v549
    %2170 = vmatprep.subr.bf16.mxu0 0
    %2171 = vmatpush1.bf16.msra.mxu0 %v551
    %2172 = vmatprep.subr.bf16.mxu0 0
    %2173 = vmatpush1.bf16.msra.mxu0 0
    %2174 = vmatprep.subr.bf16.mxu0 0
    %2175 = vmatpush1.bf16.msra.mxu0 0
    %2176 = vmatprep.subr.bf16.mxu0 0
    %2177 = vmatpush1.bf16.msra.mxu0 0
    %2178 = vmatprep.subr.bf16.mxu0 0
    %2179 = vmatpush1.bf16.msra.mxu0 0
    %2180 = vmatprep.subr.bf16.mxu0 0
    %2181 = vmatpush1.bf16.msra.mxu0 0
    %2182 = vmatprep.subr.bf16.mxu0 0
    %2183 = vmatpush1.bf16.msra.mxu0 0
    %2184 = vmatprep.subr.bf16.mxu0 0
    %2185 = vmatpush1.bf16.msra.mxu0 0
    %2186 = vmatprep.subr.bf16.mxu0 0
    %2187 = vmatpush1.bf16.msra.mxu0 0
    %2188 = vmatprep.subr.bf16.mxu0 0
    %2189 = vmatpush1.bf16.msra.mxu0 0
    %2190 = vmatprep.subr.bf16.mxu0 0
    %2191 = vmatpush1.bf16.msra.mxu0 0
    %2192 = vmatprep.subr.bf16.mxu0 0
    %2193 = vmatpush1.bf16.msra.mxu0 0
    %2194 = vmatprep.subr.bf16.mxu0 0
    %2195 = vmatpush1.bf16.msra.mxu0 0
    %2196 = vmatprep.subr.bf16.mxu0 0
    %2197 = vmatpush1.bf16.msra.mxu0 0
    %2198 = vmatprep.subr.bf16.mxu0 0
    %2199 = vmatpush1.bf16.msra.mxu0 0
    %2200 = vmatprep.mubr.bf16.mxu0 0
    %2201 = vmatmul.mubr.bf16.gmra.mrb[0].mxu0 %v2166
    %v2202 = vpop.f32.mrb[0].mxu0
    %v2203 = vadd.f32 %v544, %v2202
    %v2204 = vpop.f32.mrb[0].mxu0
    %v2205 = vpop.f32.mrb[0].mxu0
    %v2206 = vpop.f32.mrb[0].mxu0
    %2207 = vdwg.mxu0
    %2209 = vrot.lane.b32.xlu0 %v1968, 96
    %v2210 = vpop.permute.xlu0 %2209
    %v2212 = vadd.f32 %v2203, %v2210
    %v2213 = vxor.u32 %v2212, 2147483648
    %v2214 = vmul.f32 %v2213, 1.442695
    %v2215 = vpow.pop %v2214
    %v2216 = vadd.f32 %v2215, 1.0
    %v2217 = vrcp.pop %v2216
    %v2218 = vmul.f32 1.0, %v2217
    %2219 = vrot.lane.b32.xlu0 %v1968, 32
    %v2220 = vpop.permute.xlu0 %2219
    %v2222 = vmul.f32 %v2218, %v2220
    %2224 = vrot.lane.b32.xlu0 %v2222, 64
    %v2225 = vpop.permute.xlu0 %2224
    %v2227 = vadd.f32 %v2203, %v2225
    %v2228 = vtanh.pop %v2227
    %v2229 = vsub.f32 1.0, %v2218
    %2231 = vrot.lane.b32.xlu0 %v2228, 96
    %v2232 = vpop.permute.xlu0 %2231
    %v2234 = vmul.f32 %v2229, %v2232
    %v2235 = vmul.f32 %v2218, %v1914
    %v2236 = vadd.f32 %v2234, %v2235
    %2238 = vrot.lane.b32.xlu0 %v2236, 96
    %v2239 = vpop.permute.xlu0 %2238
    %2241 = vst.msk [vmem:[#allocation2 + $0x5] sm:$0x1] %vm634, %v2239
    %2242 = vst.msk [vmem:[#allocation2 + $0xa] sm:$0x2] %vm636, %v2239
    %v2243 = vld [vmem:[#allocation3 + $0x10] sm:$0xf]
    %v2244 = vld [vmem:[#allocation3 + $0x14] sm:$0xf]
    %v2245 = vld [vmem:[#allocation3 + $0x18] sm:$0xf]
    %v2246 = vld [vmem:[#allocation3 + $0x1c] sm:$0xf]
    %v2247 = vld [vmem:[#allocation5 + $0x3] sm:$0x1]
    %v2248 = vld [vmem:[#allocation2] sm:$0xff]
    %v2249 = vld [vmem:[#allocation2 + $0x8] sm:$0xf]
    %v2250 = vpack.c.bf16 %v2249, %v2248
    %v2251 = vlaneseq
    %v2252 = vshrl.u32 %v2251, 7
    %v2253 = vsub.s32 0, %v2252
    %v2254 = vrot.slane %v2247, %v2253
    %v2259 = vunpack.c.l.b16 %v2243
    %v2260 = vunpack.c.l.b16 %v2244
    %v2261 = vunpack.c.l.b16 %v2245
    %v2262 = vunpack.c.l.b16 %v2246
    %v2263 = vpack.c.b16 %v2260, %v2259
    %v2264 = vpack.c.b16 %v2262, %v2261
    %v2268 = vsel %vm100, %v2250, 0
    %2270 = vmatprep.subr.bf16.mxu0 0
    %2271 = vmatpush1.bf16.msra.mxu0 %v2263
    %2272 = vmatprep.subr.bf16.mxu0 0
    %2273 = vmatpush1.bf16.msra.mxu0 %v2264
    %2274 = vmatprep.subr.bf16.mxu0 0
    %2275 = vmatpush1.bf16.msra.mxu0 0
    %2276 = vmatprep.subr.bf16.mxu0 0
    %2277 = vmatpush1.bf16.msra.mxu0 0
    %2278 = vmatprep.subr.bf16.mxu0 0
    %2279 = vmatpush1.bf16.msra.mxu0 0
    %2280 = vmatprep.subr.bf16.mxu0 0
    %2281 = vmatpush1.bf16.msra.mxu0 0
    %2282 = vmatprep.subr.bf16.mxu0 0
    %2283 = vmatpush1.bf16.msra.mxu0 0
    %2284 = vmatprep.subr.bf16.mxu0 0
    %2285 = vmatpush1.bf16.msra.mxu0 0
    %2286 = vmatprep.subr.bf16.mxu0 0
    %2287 = vmatpush1.bf16.msra.mxu0 0
    %2288 = vmatprep.subr.bf16.mxu0 0
    %2289 = vmatpush1.bf16.msra.mxu0 0
    %2290 = vmatprep.subr.bf16.mxu0 0
    %2291 = vmatpush1.bf16.msra.mxu0 0
    %2292 = vmatprep.subr.bf16.mxu0 0
    %2293 = vmatpush1.bf16.msra.mxu0 0
    %2294 = vmatprep.subr.bf16.mxu0 0
    %2295 = vmatpush1.bf16.msra.mxu0 0
    %2296 = vmatprep.subr.bf16.mxu0 0
    %2297 = vmatpush1.bf16.msra.mxu0 0
    %2298 = vmatprep.subr.bf16.mxu0 0
    %2299 = vmatpush1.bf16.msra.mxu0 0
    %2300 = vmatprep.subr.bf16.mxu0 0
    %2301 = vmatpush1.bf16.msra.mxu0 0
    %2302 = vmatprep.mubr.bf16.mxu0 0
    %2303 = vmatmul.mubr.bf16.gmra.mrb[0].mxu0 %v2268
    %v2304 = vpop.f32.mrb[0].mxu0
    %v2305 = vadd.f32 %v2254, %v2304
    %v2306 = vpop.f32.mrb[0].mxu0
    %v2307 = vpop.f32.mrb[0].mxu0
    %v2308 = vadd.f32 %v2254, %v2307
    %v2309 = vpop.f32.mrb[0].mxu0
    %2310 = vdwg.mxu0
    %2311 = vmax.xlane.f32.xlu0 %v2305
    %v2312 = vpop.xlane.xlu0 %2311
    %vm2313 = vcmask 1043456
    %v2314 = vsel %vm2313, %v2308, -inf
    %2315 = vmax.xlane.f32.xlu0 %v2314
    %v2316 = vpop.xlane.xlu0 %2315
    %v2317 = vsub.f32 %v2305, %v2312
    %v2318 = vsub.f32 %v2308, %v2316
    %v2319 = vmul.f32 %v2317, 1.442695
    %v2320 = vpow.pop %v2319
    %v2321 = vmul.f32 %v2318, 1.442695
    %v2322 = vpow.pop %v2321
    %2323 = vadd.xlane.f32.xlu0 %v2320
    %v2324 = vpop.xlane.xlu0 %2323
    %v2325 = vsel %vm2313, %v2322, 0.0
    %2326 = vadd.xlane.f32.xlu0 %v2325
    %v2327 = vpop.xlane.xlu0 %2326
    %v2328 = vlog2.pop %v2324
    %v2329 = vmul.f32 %v2328, 0.6931472
    %v2330 = vlog2.pop %v2327
    %v2331 = vmul.f32 %v2330, 0.6931472
    %v2332 = vadd.f32 %v2312, %v2329
    %v2333 = vadd.f32 %v2316, %v2331
    %v2334 = vsub.f32 %v2305, %v2332
    %v2335 = vsub.f32 %v2308, %v2333
    %2336 = vst [vmem:[%s7] sm:$0xff] %v2334
    %2337 = vst [vmem:[%s7 + $0x8] sm:$0xf] %v2335
    %2339 = vrot.lane.b32.xlu0 %v2160, 96
    %v2340 = vpop.permute.xlu0 %2339
    %vm2342 = vcmask 254976
    %2343 = vst.msk [vmem:[%s8] sm:$0x3] %vm2342, %v2340
    %s2344 = scalar_lea.vmem %s8, 2
    %2345 = vst.msk [vmem:[%s2344] sm:$0x3] %vm2342, %v2239
    // Predicated region
    $region38: #{decoder_forward.1} parent=1 // pred_check
      _
    $region39: #{decoder_forward.1} parent=1 // pred_check_branch
      %2347 = sbr.rel (0) target = $region41
    $region40: #{decoder_forward.1} parent=1 // pred_region
      _
    $region41: #{decoder_forward.1} parent=1 // pred_fallthru
      _
    // Predicated region
    $region42: #{decoder_forward.1} parent=1 // pred_check
      _
    $region43: #{decoder_forward.1} parent=1 // pred_check_branch
      %2349 = sbr.rel (0) target = $region45
    $region44: #{decoder_forward.1} parent=1 // pred_region
      _
    $region45: #{decoder_forward.1} parent=1 // pred_fallthru
      _
    // Predicated region
    $region46: #{decoder_forward.1} parent=1 // pred_check
      _
    $region47: #{decoder_forward.1} parent=1 // pred_check_branch
      %2351 = sbr.rel (0) target = $region49
    $region48: #{decoder_forward.1} parent=1 // pred_region
      _
    $region49: #{decoder_forward.1} parent=1 // pred_fallthru
      _
    // Predicated region
    $region50: #{decoder_forward.1} parent=1 // pred_check
      _
    $region51: #{decoder_forward.1} parent=1 // pred_check_branch
      %2353 = sbr.rel (0) target = $region53
    $region52: #{decoder_forward.1} parent=1 // pred_region
      _
    $region53: #{decoder_forward.1} parent=1 // pred_fallthru
      _
    %2354 = vsyncpa [#allocation4], 1
    %2355 = vsyncpa [#allocation6], 1

</llo_original>
